<compile_context>
chip_gen: v6e
topology: v6e:2x2x1
jax: 0.10.0
libtpu: 0.0.40
codegen_flags: <defaults>
</compile_context>

<pallas_src>
import functools

import jax
import jax.numpy as jnp
from jax.experimental import pallas as pl
from jax.experimental.pallas import tpu as pltpu

LANE = 128        # TPU lane width; output-channel tiles padded to this.
MAX_TILE_M = 512  # largest row tile (multiple of 128) — comfortably fits VMEM.


def _pad_to(n, m):
    return ((n + m - 1) // m) * m


# ----------------------------------------------------------------------------
# Pallas kernel: fused  [relu](patch tile) @ W  + bias  [+act]  [+residual]
# ----------------------------------------------------------------------------
def _fused_conv_kernel(*refs, act, in_relu, has_res):
    if has_res:
        x_ref, w_ref, b_ref, r_ref, o_ref = refs
    else:
        x_ref, w_ref, b_ref, o_ref = refs
        r_ref = None
    x = x_ref[...]
    if in_relu:                          # ResBlock leading ReLU, fused on patches
        x = jnp.maximum(x, 0.0)
    y = jnp.dot(x, w_ref[...], preferred_element_type=jnp.float32)  # MXU, f32 acc
    y = y + b_ref[...]                   # folded BN shift / conv bias
    if act == "relu":
        y = jnp.maximum(y, 0.0)
    elif act == "sigmoid":
        y = 1.0 / (1.0 + jnp.exp(-y))
    if has_res:
        y = y + r_ref[...]               # ResBlock skip connection
    o_ref[...] = y


def fused_conv_matmul(patches, w_mat, bias, *, act=None, in_relu=False,
                      residual=None):
    """patches: (M, K) f32; w_mat: (K, Cout) f32; bias: (Cout,) f32.

    Returns (M, Cout) f32 of act([relu](patches) @ w + bias) [+ residual].
    """
    M, K = patches.shape
    Cout = w_mat.shape[1]

    tile_m = min(MAX_TILE_M, _pad_to(M, LANE))
    Mp = _pad_to(M, tile_m)
    Np = _pad_to(Cout, LANE)             # lane-dense output stores

    x_p = jnp.pad(patches, ((0, Mp - M), (0, 0))).astype(jnp.bfloat16)
    w_p = jnp.pad(w_mat, ((0, 0), (0, Np - Cout))).astype(jnp.bfloat16)
    b_p = jnp.pad(bias, (0, Np - Cout)).reshape(1, Np).astype(jnp.float32)

    in_specs = [
        pl.BlockSpec((tile_m, K), lambda i, j: (i, 0)),   # row tile, K resident
        pl.BlockSpec((K, LANE), lambda i, j: (0, j)),     # weight column tile
        pl.BlockSpec((1, LANE), lambda i, j: (0, j)),     # folded bias
    ]
    inputs = [x_p, w_p, b_p]
    has_res = residual is not None
    if has_res:
        r_p = jnp.pad(residual.astype(jnp.float32),
                      ((0, Mp - M), (0, Np - residual.shape[1])))
        in_specs.append(pl.BlockSpec((tile_m, LANE), lambda i, j: (i, j)))
        inputs.append(r_p)

    grid = (Mp // tile_m, Np // LANE)
    bytes_accessed = (x_p.size * 2 + w_p.size * 2 + b_p.size * 4
                      + Mp * Np * 4 + (Mp * Np * 4 if has_res else 0))
    out = pl.pallas_call(
        functools.partial(_fused_conv_kernel, act=act, in_relu=in_relu,
                          has_res=has_res),
        out_shape=jax.ShapeDtypeStruct((Mp, Np), jnp.float32),
        grid_spec=pltpu.PrefetchScalarGridSpec(
            num_scalar_prefetch=0,
            grid=grid,
            in_specs=in_specs,
            out_specs=pl.BlockSpec((tile_m, LANE), lambda i, j: (i, j)),
        ),
        compiler_params=pltpu.CompilerParams(
            dimension_semantics=("parallel", "parallel")),
        cost_estimate=pl.CostEstimate(
            flops=2 * Mp * K * Np,
            transcendentals=(Mp * Np if act == "sigmoid" else 0),
            bytes_accessed=bytes_accessed),
    )(*inputs)
    return out[:M, :Cout]


# ----------------------------------------------------------------------------
# JAX glue: channels-last patch extraction, zero-dilation, weight preparation
# ----------------------------------------------------------------------------
def _im2col_nhwc(x, kh, kw, pad):
    """x: (B, H, W, C) -> patches (B*Ho*Wo, kh*kw*C), Ho, Wo.  Stride 1."""
    B, H, W, C = x.shape
    if kh == 1 and kw == 1 and pad == 0:
        return x.reshape(B * H * W, C), H, W
    if pad > 0:
        x = jnp.pad(x, ((0, 0), (pad, pad), (pad, pad), (0, 0)))
    Ho = H + 2 * pad - kh + 1
    Wo = W + 2 * pad - kw + 1
    taps = []
    for di in range(kh):
        for dj in range(kw):
            taps.append(x[:, di:di + Ho, dj:dj + Wo, :])
    patches = jnp.stack(taps, axis=3)                 # (B, Ho, Wo, kh*kw, C)
    return patches.reshape(B * Ho * Wo, kh * kw * C), Ho, Wo


def _dilate_nhwc(x, s):
    """Insert (s-1) zeros between spatial elements (ConvTranspose stride)."""
    if s == 1:
        return x
    B, H, W, C = x.shape
    y = jnp.zeros((B, (H - 1) * s + 1, (W - 1) * s + 1, C), x.dtype)
    return y.at[:, ::s, ::s, :].set(x)


def _conv_w_to_mat(w):
    """(Cout, Cin, kh, kw) -> (kh*kw*Cin, Cout), matching im2col tap ordering."""
    cout = w.shape[0]
    return jnp.transpose(w, (2, 3, 1, 0)).reshape(-1, cout)


def _convT_to_conv_w(wt):
    """ConvTranspose2d weight (Cin, Cout, kh, kw) -> equivalent Conv2d weight."""
    return jnp.transpose(jnp.flip(wt, (2, 3)), (1, 0, 2, 3))


def _fold_bn(w, b, gamma, beta, mean, var, eps=1e-5):
    """Fold eval-mode BatchNorm into conv weight (Cout, Cin, kh, kw) and bias."""
    scale = gamma / jnp.sqrt(var + eps)
    shift = beta - mean * scale
    return w * scale[:, None, None, None], scale * b + shift


# ----------------------------------------------------------------------------
# DecoderVqResnet32 parameters and forward
# ----------------------------------------------------------------------------
def init_params(key, dim_z, num_rb):
    keys = iter(jax.random.split(key, 64))

    def nrm(shape, scale=0.1):
        return scale * jax.random.normal(next(keys), shape, jnp.float32)

    def bn(c):
        gamma = 1.0 + 0.1 * jax.random.normal(next(keys), (c,), jnp.float32)
        beta = 0.1 * jax.random.normal(next(keys), (c,), jnp.float32)
        mean = 0.1 * jax.random.normal(next(keys), (c,), jnp.float32)
        var = 1.0 + 0.1 * jax.random.uniform(next(keys), (c,), jnp.float32)
        return (gamma, beta, mean, var)

    params = {"res": []}
    for _ in range(num_rb):
        params["res"].append(dict(
            w1=nrm((dim_z, dim_z, 3, 3)), b1=nrm((dim_z,)), bn1=bn(dim_z),
            w2=nrm((dim_z, dim_z, 1, 1)), b2=nrm((dim_z,)), bn2=bn(dim_z)))
    params["ct1_w"] = nrm((dim_z, dim_z, 3, 3)); params["ct1_b"] = nrm((dim_z,))
    params["bn_ct1"] = bn(dim_z)
    params["ct2_w"] = nrm((dim_z, dim_z // 2, 4, 4)); params["ct2_b"] = nrm((dim_z // 2,))
    params["bn_ct2"] = bn(dim_z // 2)
    params["ct3_w"] = nrm((dim_z // 2, 3, 4, 4)); params["ct3_b"] = nrm((3,))
    return params


def prepare_plan(params):
    """Host-side: fold BN into weights and convert everything to matmul form."""
    plan = {"res": [], "convt": []}
    for rb in params["res"]:
        w1, b1 = _fold_bn(rb["w1"], rb["b1"], *rb["bn1"])
        w2, b2 = _fold_bn(rb["w2"], rb["b2"], *rb["bn2"])
        plan["res"].append(dict(w1=_conv_w_to_mat(w1), b1=b1,
                                w2=_conv_w_to_mat(w2), b2=b2))
    w, b = _fold_bn(_convT_to_conv_w(params["ct1_w"]), params["ct1_b"], *params["bn_ct1"])
    plan["convt"].append(dict(w=_conv_w_to_mat(w), b=b, k=3, pad=1, dil=1, act="relu"))
    w, b = _fold_bn(_convT_to_conv_w(params["ct2_w"]), params["ct2_b"], *params["bn_ct2"])
    plan["convt"].append(dict(w=_conv_w_to_mat(w), b=b, k=4, pad=2, dil=2, act="relu"))
    w = _convT_to_conv_w(params["ct3_w"])
    plan["convt"].append(dict(w=_conv_w_to_mat(w), b=params["ct3_b"],
                              k=4, pad=2, dil=2, act="sigmoid"))
    return plan


def decoder_forward(plan, z_nchw):
    """z: (B, dim_z, H, W) -> (B, 3, 4H, 4W), matching DecoderVqResnet32.forward."""
    x = jnp.transpose(z_nchw, (0, 2, 3, 1)).astype(jnp.float32)   # NHWC

    # ---- ResBlocks: x + BN2(Conv1x1(relu(BN1(Conv3x3(relu(x)))))) ----
    for rb in plan["res"]:
        B, H, W, C = x.shape
        p1, _, _ = _im2col_nhwc(x, 3, 3, 1)
        h = fused_conv_matmul(p1, rb["w1"], rb["b1"], act="relu", in_relu=True)
        out = fused_conv_matmul(h, rb["w2"], rb["b2"], act=None,
                                residual=x.reshape(B * H * W, C))
        x = out.reshape(B, H, W, C)

    # ---- ConvTranspose stack: (3,s1,p1)+BN+ReLU, (4,s2,p1)+BN+ReLU, (4,s2,p1)+Sigmoid
    for layer in plan["convt"]:
        B = x.shape[0]
        xd = _dilate_nhwc(x, layer["dil"])
        p, Ho, Wo = _im2col_nhwc(xd, layer["k"], layer["k"], layer["pad"])
        cout = layer["b"].shape[0]
        out = fused_conv_matmul(p, layer["w"], layer["b"], act=layer["act"])
        x = out.reshape(B, Ho, Wo, cout)

    return jnp.transpose(x, (0, 3, 1, 2))                        # NCHW


if __name__ == "__main__":
    key = jax.random.PRNGKey(0)
    k_param, k_in = jax.random.split(key)

    # small shapes: B=2, dim_z=16, 8x8 latent grid, 2 residual blocks
    B, dim_z, H, W = 2, 16, 8, 8
    num_rb = 2

    params = init_params(k_param, dim_z, num_rb)
    plan = prepare_plan(params)
    z = jax.random.normal(k_in, (B, dim_z, H, W), jnp.float32)

    fwd = jax.jit(lambda z_: decoder_forward(plan, z_))
    out = fwd(z)
    jax.block_until_ready(out)

    # shape sanity: 8x8 latents -> two stride-2 transposed convs -> 32x32 RGB
    assert out.shape == (B, 3, 4 * H, 4 * W)
    assert bool(jnp.all(jnp.isfinite(out)))
    assert bool(jnp.all((out >= 0.0) & (out <= 1.0)))   # sigmoid output range
    print("KERNEL_OK")
</pallas_src>

<mosaic_0001>
module attributes {stable_mosaic.version = 11 : i64} {
  func.func @_fused_conv_kernel(%arg0: i32, %arg1: i32, %arg2: memref<128x144xbf16, #tpu.memory_space<vmem>>, %arg3: memref<144x128xbf16, #tpu.memory_space<vmem>>, %arg4: memref<1x128xf32, #tpu.memory_space<vmem>>, %arg5: memref<128x128xf32, #tpu.memory_space<vmem>>) attributes {dimension_semantics = [#tpu.dimension_semantics<parallel>, #tpu.dimension_semantics<parallel>], iteration_bounds = array<i64: 1, 1>, scalar_prefetch = 0 : i64, scratch_operands = 0 : i64, tpu.core_type = #tpu.core_type<tc>, window_params = [{transform_indices = @transform_0, window_bounds = array<i64: 128, 144>}, {transform_indices = @transform_1, window_bounds = array<i64: 144, 128>}, {transform_indices = @transform_2, window_bounds = array<i64: 1, 128>}, {transform_indices = @transform_3, window_bounds = array<i64: 128, 128>}]} {
    %c0 = arith.constant 0 : index
    %c0_0 = arith.constant 0 : index
    %0 = vector.load %arg2[%c0, %c0_0] : memref<128x144xbf16, #tpu.memory_space<vmem>>, vector<128x144xbf16>
    %cst = arith.constant 0.000000e+00 : bf16
    %1 = vector.broadcast %cst : bf16 to vector<128x144xbf16>
    %2 = arith.maximumf %0, %1 : vector<128x144xbf16>
    %c0_1 = arith.constant 0 : index
    %c0_2 = arith.constant 0 : index
    %3 = vector.load %arg3[%c0_1, %c0_2] : memref<144x128xbf16, #tpu.memory_space<vmem>>, vector<144x128xbf16>
    %cst_3 = arith.constant dense<0.000000e+00> : vector<128x128xf32>
    %4 = tpu.matmul %2, %3, %cst_3 {dimension_numbers = #tpu.dot_dimension_numbers<[1], [0], [0], [1], [0, 0, 1, 1], [], []>} : vector<128x144xbf16>, vector<144x128xbf16>, vector<128x128xf32> -> vector<128x128xf32>
    %c0_4 = arith.constant 0 : index
    %c0_5 = arith.constant 0 : index
    %5 = vector.load %arg4[%c0_4, %c0_5] : memref<1x128xf32, #tpu.memory_space<vmem>>, vector<1x128xf32>
    %6 = vector.broadcast %5 : vector<1x128xf32> to vector<128x128xf32>
    %7 = arith.addf %4, %6 : vector<128x128xf32>
    %cst_6 = arith.constant 0.000000e+00 : f32
    %8 = vector.broadcast %cst_6 : f32 to vector<128x128xf32>
    %9 = arith.maximumf %7, %8 : vector<128x128xf32>
    %c0_7 = arith.constant 0 : index
    %c0_8 = arith.constant 0 : index
    %10 = vector.load %arg5[%c0_7, %c0_8] : memref<128x128xf32, #tpu.memory_space<vmem>>, vector<128x128xf32>
    tpu.vector_store %arg5[%c0_7, %c0_8], %9 {strides = array<i32>} : memref<128x128xf32, #tpu.memory_space<vmem>>, vector<128x128xf32>,
    return
  }
  func.func @transform_0(%arg0: i32, %arg1: i32) -> (i32, i32) {
    %c0_i32 = arith.constant 0 : i32
    %c0_i32_0 = arith.constant 0 : i32
    return %arg0, %c0_i32 : i32, i32
  }
  func.func @transform_1(%arg0: i32, %arg1: i32) -> (i32, i32) {
    %c0_i32 = arith.constant 0 : i32
    %c0_i32_0 = arith.constant 0 : i32
    return %c0_i32, %arg1 : i32, i32
  }
  func.func @transform_2(%arg0: i32, %arg1: i32) -> (i32, i32) {
    %c0_i32 = arith.constant 0 : i32
    %c0_i32_0 = arith.constant 0 : i32
    return %c0_i32, %arg1 : i32, i32
  }
  func.func @transform_3(%arg0: i32, %arg1: i32) -> (i32, i32) {
    %c0_i32 = arith.constant 0 : i32
    return %arg0, %arg1 : i32, i32
  }
}

module attributes {stable_mosaic.version = 11 : i64} {
  func.func @_fused_conv_kernel(%arg0: i32, %arg1: i32, %arg2: memref<128x16xbf16, #tpu.memory_space<vmem>>, %arg3: memref<16x128xbf16, #tpu.memory_space<vmem>>, %arg4: memref<1x128xf32, #tpu.memory_space<vmem>>, %arg5: memref<128x128xf32, #tpu.memory_space<vmem>>, %arg6: memref<128x128xf32, #tpu.memory_space<vmem>>) attributes {dimension_semantics = [#tpu.dimension_semantics<parallel>, #tpu.dimension_semantics<parallel>], iteration_bounds = array<i64: 1, 1>, scalar_prefetch = 0 : i64, scratch_operands = 0 : i64, tpu.core_type = #tpu.core_type<tc>, window_params = [{transform_indices = @transform_0, window_bounds = array<i64: 128, 16>}, {transform_indices = @transform_1, window_bounds = array<i64: 16, 128>}, {transform_indices = @transform_2, window_bounds = array<i64: 1, 128>}, {transform_indices = @transform_3, window_bounds = array<i64: 128, 128>}, {transform_indices = @transform_4, window_bounds = array<i64: 128, 128>}]} {
    %c0 = arith.constant 0 : index
    %c0_0 = arith.constant 0 : index
    %0 = vector.load %arg2[%c0, %c0_0] : memref<128x16xbf16, #tpu.memory_space<vmem>>, vector<128x16xbf16>
    %c0_1 = arith.constant 0 : index
    %c0_2 = arith.constant 0 : index
    %1 = vector.load %arg3[%c0_1, %c0_2] : memref<16x128xbf16, #tpu.memory_space<vmem>>, vector<16x128xbf16>
    %cst = arith.constant dense<0.000000e+00> : vector<128x128xf32>
    %2 = tpu.matmul %0, %1, %cst {dimension_numbers = #tpu.dot_dimension_numbers<[1], [0], [0], [1], [0, 0, 1, 1], [], []>} : vector<128x16xbf16>, vector<16x128xbf16>, vector<128x128xf32> -> vector<128x128xf32>
    %c0_3 = arith.constant 0 : index
    %c0_4 = arith.constant 0 : index
    %3 = vector.load %arg4[%c0_3, %c0_4] : memref<1x128xf32, #tpu.memory_space<vmem>>, vector<1x128xf32>
    %4 = vector.broadcast %3 : vector<1x128xf32> to vector<128x128xf32>
    %5 = arith.addf %2, %4 : vector<128x128xf32>
    %c0_5 = arith.constant 0 : index
    %c0_6 = arith.constant 0 : index
    %6 = vector.load %arg5[%c0_5, %c0_6] : memref<128x128xf32, #tpu.memory_space<vmem>>, vector<128x128xf32>
    %7 = arith.addf %5, %6 : vector<128x128xf32>
    %c0_7 = arith.constant 0 : index
    %c0_8 = arith.constant 0 : index
    %8 = vector.load %arg6[%c0_7, %c0_8] : memref<128x128xf32, #tpu.memory_space<vmem>>, vector<128x128xf32>
    tpu.vector_store %arg6[%c0_7, %c0_8], %7 {strides = array<i32>} : memref<128x128xf32, #tpu.memory_space<vmem>>, vector<128x128xf32>,
    return
  }
  func.func @transform_0(%arg0: i32, %arg1: i32) -> (i32, i32) {
    %c0_i32 = arith.constant 0 : i32
    %c0_i32_0 = arith.constant 0 : i32
    return %arg0, %c0_i32 : i32, i32
  }
  func.func @transform_1(%arg0: i32, %arg1: i32) -> (i32, i32) {
    %c0_i32 = arith.constant 0 : i32
    %c0_i32_0 = arith.constant 0 : i32
    return %c0_i32, %arg1 : i32, i32
  }
  func.func @transform_2(%arg0: i32, %arg1: i32) -> (i32, i32) {
    %c0_i32 = arith.constant 0 : i32
    %c0_i32_0 = arith.constant 0 : i32
    return %c0_i32, %arg1 : i32, i32
  }
  func.func @transform_3(%arg0: i32, %arg1: i32) -> (i32, i32) {
    %c0_i32 = arith.constant 0 : i32
    return %arg0, %arg1 : i32, i32
  }
  func.func @transform_4(%arg0: i32, %arg1: i32) -> (i32, i32) {
    %c0_i32 = arith.constant 0 : i32
    return %arg0, %arg1 : i32, i32
  }
}

module attributes {stable_mosaic.version = 11 : i64} {
  func.func @_fused_conv_kernel(%arg0: i32, %arg1: i32, %arg2: memref<128x144xbf16, #tpu.memory_space<vmem>>, %arg3: memref<144x128xbf16, #tpu.memory_space<vmem>>, %arg4: memref<1x128xf32, #tpu.memory_space<vmem>>, %arg5: memref<128x128xf32, #tpu.memory_space<vmem>>) attributes {dimension_semantics = [#tpu.dimension_semantics<parallel>, #tpu.dimension_semantics<parallel>], iteration_bounds = array<i64: 1, 1>, scalar_prefetch = 0 : i64, scratch_operands = 0 : i64, tpu.core_type = #tpu.core_type<tc>, window_params = [{transform_indices = @transform_0, window_bounds = array<i64: 128, 144>}, {transform_indices = @transform_1, window_bounds = array<i64: 144, 128>}, {transform_indices = @transform_2, window_bounds = array<i64: 1, 128>}, {transform_indices = @transform_3, window_bounds = array<i64: 128, 128>}]} {
    %c0 = arith.constant 0 : index
    %c0_0 = arith.constant 0 : index
    %0 = vector.load %arg2[%c0, %c0_0] : memref<128x144xbf16, #tpu.memory_space<vmem>>, vector<128x144xbf16>
    %c0_1 = arith.constant 0 : index
    %c0_2 = arith.constant 0 : index
    %1 = vector.load %arg3[%c0_1, %c0_2] : memref<144x128xbf16, #tpu.memory_space<vmem>>, vector<144x128xbf16>
    %cst = arith.constant dense<0.000000e+00> : vector<128x128xf32>
    %2 = tpu.matmul %0, %1, %cst {dimension_numbers = #tpu.dot_dimension_numbers<[1], [0], [0], [1], [0, 0, 1, 1], [], []>} : vector<128x144xbf16>, vector<144x128xbf16>, vector<128x128xf32> -> vector<128x128xf32>
    %c0_3 = arith.constant 0 : index
    %c0_4 = arith.constant 0 : index
    %3 = vector.load %arg4[%c0_3, %c0_4] : memref<1x128xf32, #tpu.memory_space<vmem>>, vector<1x128xf32>
    %4 = vector.broadcast %3 : vector<1x128xf32> to vector<128x128xf32>
    %5 = arith.addf %2, %4 : vector<128x128xf32>
    %cst_5 = arith.constant 0.000000e+00 : f32
    %6 = vector.broadcast %cst_5 : f32 to vector<128x128xf32>
    %7 = arith.maximumf %5, %6 : vector<128x128xf32>
    %c0_6 = arith.constant 0 : index
    %c0_7 = arith.constant 0 : index
    %8 = vector.load %arg5[%c0_6, %c0_7] : memref<128x128xf32, #tpu.memory_space<vmem>>, vector<128x128xf32>
    tpu.vector_store %arg5[%c0_6, %c0_7], %7 {strides = array<i32>} : memref<128x128xf32, #tpu.memory_space<vmem>>, vector<128x128xf32>,
    return
  }
  func.func @transform_0(%arg0: i32, %arg1: i32) -> (i32, i32) {
    %c0_i32 = arith.constant 0 : i32
    %c0_i32_0 = arith.constant 0 : i32
    return %arg0, %c0_i32 : i32, i32
  }
  func.func @transform_1(%arg0: i32, %arg1: i32) -> (i32, i32) {
    %c0_i32 = arith.constant 0 : i32
    %c0_i32_0 = arith.constant 0 : i32
    return %c0_i32, %arg1 : i32, i32
  }
  func.func @transform_2(%arg0: i32, %arg1: i32) -> (i32, i32) {
    %c0_i32 = arith.constant 0 : i32
    %c0_i32_0 = arith.constant 0 : i32
    return %c0_i32, %arg1 : i32, i32
  }
  func.func @transform_3(%arg0: i32, %arg1: i32) -> (i32, i32) {
    %c0_i32 = arith.constant 0 : i32
    return %arg0, %arg1 : i32, i32
  }
}

module attributes {stable_mosaic.version = 11 : i64} {
  func.func @_fused_conv_kernel(%arg0: i32, %arg1: i32, %arg2: memref<512x256xbf16, #tpu.memory_space<vmem>>, %arg3: memref<256x128xbf16, #tpu.memory_space<vmem>>, %arg4: memref<1x128xf32, #tpu.memory_space<vmem>>, %arg5: memref<512x128xf32, #tpu.memory_space<vmem>>) attributes {dimension_semantics = [#tpu.dimension_semantics<parallel>, #tpu.dimension_semantics<parallel>], iteration_bounds = array<i64: 1, 1>, scalar_prefetch = 0 : i64, scratch_operands = 0 : i64, tpu.core_type = #tpu.core_type<tc>, window_params = [{transform_indices = @transform_0, window_bounds = array<i64: 512, 256>}, {transform_indices = @transform_1, window_bounds = array<i64: 256, 128>}, {transform_indices = @transform_2, window_bounds = array<i64: 1, 128>}, {transform_indices = @transform_3, window_bounds = array<i64: 512, 128>}]} {
    %c0 = arith.constant 0 : index
    %c0_0 = arith.constant 0 : index
    %0 = vector.load %arg2[%c0, %c0_0] : memref<512x256xbf16, #tpu.memory_space<vmem>>, vector<512x256xbf16>
    %c0_1 = arith.constant 0 : index
    %c0_2 = arith.constant 0 : index
    %1 = vector.load %arg3[%c0_1, %c0_2] : memref<256x128xbf16, #tpu.memory_space<vmem>>, vector<256x128xbf16>
    %cst = arith.constant dense<0.000000e+00> : vector<512x128xf32>
    %2 = tpu.matmul %0, %1, %cst {dimension_numbers = #tpu.dot_dimension_numbers<[1], [0], [0], [1], [0, 0, 1, 1], [], []>} : vector<512x256xbf16>, vector<256x128xbf16>, vector<512x128xf32> -> vector<512x128xf32>
    %c0_3 = arith.constant 0 : index
    %c0_4 = arith.constant 0 : index
    %3 = vector.load %arg4[%c0_3, %c0_4] : memref<1x128xf32, #tpu.memory_space<vmem>>, vector<1x128xf32>
    %4 = vector.broadcast %3 : vector<1x128xf32> to vector<512x128xf32>
    %5 = arith.addf %2, %4 : vector<512x128xf32>
    %cst_5 = arith.constant 0.000000e+00 : f32
    %6 = vector.broadcast %cst_5 : f32 to vector<512x128xf32>
    %7 = arith.maximumf %5, %6 : vector<512x128xf32>
    %c0_6 = arith.constant 0 : index
    %c0_7 = arith.constant 0 : index
    %8 = vector.load %arg5[%c0_6, %c0_7] : memref<512x128xf32, #tpu.memory_space<vmem>>, vector<512x128xf32>
    tpu.vector_store %arg5[%c0_6, %c0_7], %7 {strides = array<i32>} : memref<512x128xf32, #tpu.memory_space<vmem>>, vector<512x128xf32>,
    return
  }
  func.func @transform_0(%arg0: i32, %arg1: i32) -> (i32, i32) {
    %c0_i32 = arith.constant 0 : i32
    %c0_i32_0 = arith.constant 0 : i32
    return %arg0, %c0_i32 : i32, i32
  }
  func.func @transform_1(%arg0: i32, %arg1: i32) -> (i32, i32) {
    %c0_i32 = arith.constant 0 : i32
    %c0_i32_0 = arith.constant 0 : i32
    return %c0_i32, %arg1 : i32, i32
  }
  func.func @transform_2(%arg0: i32, %arg1: i32) -> (i32, i32) {
    %c0_i32 = arith.constant 0 : i32
    %c0_i32_0 = arith.constant 0 : i32
    return %c0_i32, %arg1 : i32, i32
  }
  func.func @transform_3(%arg0: i32, %arg1: i32) -> (i32, i32) {
    %c0_i32 = arith.constant 0 : i32
    return %arg0, %arg1 : i32, i32
  }
}

module attributes {stable_mosaic.version = 11 : i64} {
  func.func @_fused_conv_kernel(%arg0: i32, %arg1: i32, %arg2: memref<512x128xbf16, #tpu.memory_space<vmem>>, %arg3: memref<128x128xbf16, #tpu.memory_space<vmem>>, %arg4: memref<1x128xf32, #tpu.memory_space<vmem>>, %arg5: memref<512x128xf32, #tpu.memory_space<vmem>>) attributes {dimension_semantics = [#tpu.dimension_semantics<parallel>, #tpu.dimension_semantics<parallel>], iteration_bounds = array<i64: 4, 1>, scalar_prefetch = 0 : i64, scratch_operands = 0 : i64, tpu.core_type = #tpu.core_type<tc>, window_params = [{transform_indices = @transform_0, window_bounds = array<i64: 512, 128>}, {transform_indices = @transform_1, window_bounds = array<i64: 128, 128>}, {transform_indices = @transform_2, window_bounds = array<i64: 1, 128>}, {transform_indices = @transform_3, window_bounds = array<i64: 512, 128>}]} {
    %c0 = arith.constant 0 : index
    %c0_0 = arith.constant 0 : index
    %0 = vector.load %arg2[%c0, %c0_0] : memref<512x128xbf16, #tpu.memory_space<vmem>>, vector<512x128xbf16>
    %c0_1 = arith.constant 0 : index
    %c0_2 = arith.constant 0 : index
    %1 = vector.load %arg3[%c0_1, %c0_2] : memref<128x128xbf16, #tpu.memory_space<vmem>>, vector<128x128xbf16>
    %cst = arith.constant dense<0.000000e+00> : vector<512x128xf32>
    %2 = tpu.matmul %0, %1, %cst {dimension_numbers = #tpu.dot_dimension_numbers<[1], [0], [0], [1], [0, 0, 1, 1], [], []>} : vector<512x128xbf16>, vector<128x128xbf16>, vector<512x128xf32> -> vector<512x128xf32>
    %c0_3 = arith.constant 0 : index
    %c0_4 = arith.constant 0 : index
    %3 = vector.load %arg4[%c0_3, %c0_4] : memref<1x128xf32, #tpu.memory_space<vmem>>, vector<1x128xf32>
    %4 = vector.broadcast %3 : vector<1x128xf32> to vector<512x128xf32>
    %5 = arith.addf %2, %4 : vector<512x128xf32>
    %cst_5 = arith.constant 0.000000e+00 : f32
    %6 = vector.broadcast %cst_5 : f32 to vector<512x128xf32>
    %7 = arith.subf %6, %5 : vector<512x128xf32>
    %8 = math.exp %7 : vector<512x128xf32>
    %cst_6 = arith.constant 1.000000e+00 : f32
    %9 = vector.broadcast %cst_6 : f32 to vector<512x128xf32>
    %10 = arith.addf %9, %8 : vector<512x128xf32>
    %cst_7 = arith.constant 1.000000e+00 : f32
    %11 = vector.broadcast %cst_7 : f32 to vector<512x128xf32>
    %12 = arith.divf %11, %10 : vector<512x128xf32>
    %c0_8 = arith.constant 0 : index
    %c0_9 = arith.constant 0 : index
    %13 = vector.load %arg5[%c0_8, %c0_9] : memref<512x128xf32, #tpu.memory_space<vmem>>, vector<512x128xf32>
    tpu.vector_store %arg5[%c0_8, %c0_9], %12 {strides = array<i32>} : memref<512x128xf32, #tpu.memory_space<vmem>>, vector<512x128xf32>,
    return
  }
  func.func @transform_0(%arg0: i32, %arg1: i32) -> (i32, i32) {
    %c0_i32 = arith.constant 0 : i32
    %c0_i32_0 = arith.constant 0 : i32
    return %arg0, %c0_i32 : i32, i32
  }
  func.func @transform_1(%arg0: i32, %arg1: i32) -> (i32, i32) {
    %c0_i32 = arith.constant 0 : i32
    %c0_i32_0 = arith.constant 0 : i32
    return %c0_i32, %arg1 : i32, i32
  }
  func.func @transform_2(%arg0: i32, %arg1: i32) -> (i32, i32) {
    %c0_i32 = arith.constant 0 : i32
    %c0_i32_0 = arith.constant 0 : i32
    return %c0_i32, %arg1 : i32, i32
  }
  func.func @transform_3(%arg0: i32, %arg1: i32) -> (i32, i32) {
    %c0_i32 = arith.constant 0 : i32
    return %arg0, %arg1 : i32, i32
  }
}

</mosaic_0001>

<llo_original>
// kernel: _lambda_.8
$region0: #{_lambda_.8}
  #allocation0 [shape = 'u32[]', space=smem, size = 0x4, offset = 0x4, fixed_abs, tag = 'smem constant byte address 0x4 - core index']
  #allocation1 [shape = 'u32[144,128]{1,0:T(1,128)}', space=vmem, size = 0x12000, scoped, tag = 'internal scratch']
  %s0 = inlined_call_operand.vmem [shape: bf16[128,16], index: 0, kind: input, shape index: {}]
  %s1 = inlined_call_operand.vmem [shape: bf16[16,128], index: 1, kind: input, shape index: {}]
  %s2 = inlined_call_operand.vmem [shape: f32[1,128], index: 2, kind: input, shape index: {}]
  %s3 = inlined_call_operand.vmem [shape: f32[128,128], index: 3, kind: input, shape index: {}]
  %s4 = inlined_call_operand.vmem [shape: f32[128,128], index: 4, kind: output, shape index: {}]
  %s5 = sld [smem:[#allocation0]]
  $region26: #{_lambda_.8} parent=0
    _
  %s7 = ssub.s32 1, %s5
  %s8 = scalar_select 0, %s7, %s5
  // Predicated region
  $region2: #{_lambda_.8} parent=0 // pred_check
    _
  $region3: #{_lambda_.8} parent=0 // pred_check_branch
    %10 = sbr.rel (0) target = $region5
  $region4: #{_lambda_.8} parent=0 // pred_region
    _
  $region5: #{_lambda_.8} parent=0 // pred_fallthru
    _
  // Predicated region
  $region6: #{_lambda_.8} parent=0 // pred_check
    _
  $region7: #{_lambda_.8} parent=0 // pred_check_branch
    %12 = sbr.rel (0) target = $region9
  $region8: #{_lambda_.8} parent=0 // pred_region
    _
  $region9: #{_lambda_.8} parent=0 // pred_fallthru
    _
  // Predicated region
  $region10: #{_lambda_.8} parent=0 // pred_check
    _
  $region11: #{_lambda_.8} parent=0 // pred_check_branch
    %14 = sbr.rel (0) target = $region13
  $region12: #{_lambda_.8} parent=0 // pred_region
    _
  $region13: #{_lambda_.8} parent=0 // pred_fallthru
    _
  // Predicated region
  $region14: #{_lambda_.8} parent=0 // pred_check
    _
  $region15: #{_lambda_.8} parent=0 // pred_check_branch
    %16 = sbr.rel (0) target = $region17
  $region16: #{_lambda_.8} parent=0 // pred_region
    _
  $region17: #{_lambda_.8} parent=0 // pred_fallthru
    _
  %v18 = vld [vmem:[%s0] sm:$0xf]
  %v19 = vld [vmem:[%s0 + $0x4] sm:$0xf]
  %v20 = vld [vmem:[%s0 + $0x8] sm:$0xf]
  %v21 = vld [vmem:[%s0 + $0xc] sm:$0xf]
  %v22 = vld [vmem:[%s0 + $0x10] sm:$0xf]
  %v23 = vld [vmem:[%s0 + $0x14] sm:$0xf]
  %v24 = vld [vmem:[%s0 + $0x18] sm:$0xf]
  %v25 = vld [vmem:[%s0 + $0x1c] sm:$0xf]
  %v26 = vld [vmem:[%s0 + $0x20] sm:$0xf]
  %v27 = vld [vmem:[%s0 + $0x24] sm:$0xf]
  %v28 = vld [vmem:[%s0 + $0x28] sm:$0xf]
  %v29 = vld [vmem:[%s0 + $0x2c] sm:$0xf]
  %v30 = vld [vmem:[%s0 + $0x30] sm:$0xf]
  %v31 = vld [vmem:[%s0 + $0x34] sm:$0xf]
  %v32 = vld [vmem:[%s0 + $0x38] sm:$0xf]
  %v33 = vld [vmem:[%s0 + $0x3c] sm:$0xf]
  %v34 = vld [vmem:[%s1] sm:$0xf]
  %v35 = vld [vmem:[%s1 + $0x4] sm:$0xf]
  %v36 = vld [vmem:[%s2] sm:$0x1]
  %v38 = vlaneseq
  %v39 = vshrl.u32 %v38, 7
  %v40 = vsub.s32 0, %v39
  %v41 = vrot.slane %v36, %v40
  %v59 = vunpack.c.l.b16 %v18
  %v60 = vunpack.c.l.b16 %v19
  %v61 = vunpack.c.l.b16 %v20
  %v62 = vunpack.c.l.b16 %v21
  %v63 = vunpack.c.l.b16 %v22
  %v64 = vunpack.c.l.b16 %v23
  %v65 = vunpack.c.l.b16 %v24
  %v66 = vunpack.c.l.b16 %v25
  %v67 = vunpack.c.l.b16 %v26
  %v68 = vunpack.c.l.b16 %v27
  %v69 = vunpack.c.l.b16 %v28
  %v70 = vunpack.c.l.b16 %v29
  %v71 = vunpack.c.l.b16 %v30
  %v72 = vunpack.c.l.b16 %v31
  %v73 = vunpack.c.l.b16 %v32
  %v74 = vunpack.c.l.b16 %v33
  %v75 = vpack.c.b16 %v60, %v59
  %v76 = vpack.c.b16 %v62, %v61
  %v77 = vpack.c.b16 %v64, %v63
  %v78 = vpack.c.b16 %v66, %v65
  %v79 = vpack.c.b16 %v68, %v67
  %v80 = vpack.c.b16 %v70, %v69
  %v81 = vpack.c.b16 %v72, %v71
  %v82 = vpack.c.b16 %v74, %v73
  %v85 = vunpack.c.l.b16 %v34
  %v86 = vunpack.c.l.b16 %v35
  %v87 = vpack.c.b16 %v86, %v85
  %vm89 = vcmask 130048
  %v91 = vsel %vm89, %v75, 0
  %v94 = vsel %vm89, %v76, 0
  %v97 = vsel %vm89, %v77, 0
  %v100 = vsel %vm89, %v78, 0
  %v103 = vsel %vm89, %v79, 0
  %v106 = vsel %vm89, %v80, 0
  %v109 = vsel %vm89, %v81, 0
  %v112 = vsel %vm89, %v82, 0
  %114 = vmatprep.subr.bf16.mxu0 0
  %115 = vmatpush1.bf16.msra.mxu0 0
  %116 = vmatprep.subr.bf16.mxu0 0
  %117 = vmatpush1.bf16.msra.mxu0 0
  %118 = vmatprep.subr.bf16.mxu0 0
  %119 = vmatpush1.bf16.msra.mxu0 0
  %120 = vmatprep.subr.bf16.mxu0 0
  %121 = vmatpush1.bf16.msra.mxu0 0
  %122 = vmatprep.subr.bf16.mxu0 0
  %123 = vmatpush1.bf16.msra.mxu0 0
  %124 = vmatprep.subr.bf16.mxu0 0
  %125 = vmatpush1.bf16.msra.mxu0 0
  %126 = vmatprep.subr.bf16.mxu0 0
  %127 = vmatpush1.bf16.msra.mxu0 0
  %128 = vmatprep.subr.bf16.mxu0 0
  %129 = vmatpush1.bf16.msra.mxu0 %v87
  %130 = vmatprep.subr.bf16.mxu0 0
  %131 = vmatpush2.bf16.msra.mxu0 0
  %132 = vmatprep.subr.bf16.mxu0 0
  %133 = vmatpush2.bf16.msra.mxu0 0
  %134 = vmatprep.subr.bf16.mxu0 0
  %135 = vmatpush2.bf16.msra.mxu0 0
  %136 = vmatprep.subr.bf16.mxu0 0
  %137 = vmatpush2.bf16.msra.mxu0 0
  %138 = vmatprep.subr.bf16.mxu0 0
  %139 = vmatpush2.bf16.msra.mxu0 0
  %140 = vmatprep.subr.bf16.mxu0 0
  %141 = vmatpush2.bf16.msra.mxu0 0
  %142 = vmatprep.subr.bf16.mxu0 0
  %143 = vmatpush2.bf16.msra.mxu0 0
  %144 = vmatprep.subr.bf16.mxu0 0
  %145 = vmatpush2.bf16.msra.mxu0 0
  %146 = vmatprep.mubr.bf16.mxu0 0
  %147 = vmatmul.mubr.bf16.gmra.mxu0 %v91
  %v148 = vpop.f32.mrf.mxu0
  %v149 = vadd.f32 %v41, %v148
  %v150 = vpop.f32.mrf.mxu0
  %v151 = vpop.f32.mrf.mxu0
  %v152 = vadd.f32 %v41, %v151
  %v153 = vpop.f32.mrf.mxu0
  %154 = vmatprep.mubr.bf16.mxu0 0
  %155 = vmatmul.mubr.bf16.gmra.mxu0 %v94
  %v156 = vpop.f32.mrf.mxu0
  %v157 = vadd.f32 %v41, %v156
  %v158 = vpop.f32.mrf.mxu0
  %v159 = vpop.f32.mrf.mxu0
  %v160 = vadd.f32 %v41, %v159
  %v161 = vpop.f32.mrf.mxu0
  %162 = vmatprep.mubr.bf16.mxu0 0
  %163 = vmatmul.mubr.bf16.gmra.mxu0 %v97
  %v164 = vpop.f32.mrf.mxu0
  %v165 = vadd.f32 %v41, %v164
  %v166 = vpop.f32.mrf.mxu0
  %v167 = vpop.f32.mrf.mxu0
  %v168 = vadd.f32 %v41, %v167
  %v169 = vpop.f32.mrf.mxu0
  %170 = vmatprep.mubr.bf16.mxu0 0
  %171 = vmatmul.mubr.bf16.gmra.mxu0 %v100
  %v172 = vpop.f32.mrf.mxu0
  %v173 = vadd.f32 %v41, %v172
  %v174 = vpop.f32.mrf.mxu0
  %v175 = vpop.f32.mrf.mxu0
  %v176 = vadd.f32 %v41, %v175
  %v177 = vpop.f32.mrf.mxu0
  %178 = vmatprep.mubr.bf16.mxu0 0
  %179 = vmatmul.mubr.bf16.gmra.mxu0 %v103
  %v180 = vpop.f32.mrf.mxu0
  %v181 = vadd.f32 %v41, %v180
  %v182 = vpop.f32.mrf.mxu0
  %v183 = vpop.f32.mrf.mxu0
  %v184 = vadd.f32 %v41, %v183
  %v185 = vpop.f32.mrf.mxu0
  %186 = vmatprep.mubr.bf16.mxu0 0
  %187 = vmatmul.mubr.bf16.gmra.mxu0 %v106
  %v188 = vpop.f32.mrf.mxu0
  %v189 = vadd.f32 %v41, %v188
  %v190 = vpop.f32.mrf.mxu0
  %v191 = vpop.f32.mrf.mxu0
  %v192 = vadd.f32 %v41, %v191
  %v193 = vpop.f32.mrf.mxu0
  %194 = vmatprep.mubr.bf16.mxu0 0
  %195 = vmatmul.mubr.bf16.gmra.mxu0 %v109
  %v196 = vpop.f32.mrf.mxu0
  %v197 = vadd.f32 %v41, %v196
  %v198 = vpop.f32.mrf.mxu0
  %v199 = vpop.f32.mrf.mxu0
  %v200 = vadd.f32 %v41, %v199
  %v201 = vpop.f32.mrf.mxu0
  %202 = vmatprep.mubr.bf16.mxu0 0
  %203 = vmatmul.mubr.bf16.gmra.mxu0 %v112
  %v204 = vpop.f32.mrf.mxu0
  %v205 = vadd.f32 %v41, %v204
  %v206 = vpop.f32.mrf.mxu0
  %v207 = vpop.f32.mrf.mxu0
  %v208 = vadd.f32 %v41, %v207
  %v209 = vpop.f32.mrf.mxu0
  %210 = vdwg.mxu0
  %v211 = vld [vmem:[%s3] sm:$0xff]
  %v212 = vld [vmem:[%s3 + $0x8] sm:$0xff]
  %v213 = vld [vmem:[%s3 + $0x10] sm:$0xff]
  %v214 = vld [vmem:[%s3 + $0x18] sm:$0xff]
  %v215 = vld [vmem:[%s3 + $0x20] sm:$0xff]
  %v216 = vld [vmem:[%s3 + $0x28] sm:$0xff]
  %v217 = vld [vmem:[%s3 + $0x30] sm:$0xff]
  %v218 = vld [vmem:[%s3 + $0x38] sm:$0xff]
  %v219 = vld [vmem:[%s3 + $0x40] sm:$0xff]
  %v220 = vld [vmem:[%s3 + $0x48] sm:$0xff]
  %v221 = vld [vmem:[%s3 + $0x50] sm:$0xff]
  %v222 = vld [vmem:[%s3 + $0x58] sm:$0xff]
  %v223 = vld [vmem:[%s3 + $0x60] sm:$0xff]
  %v224 = vld [vmem:[%s3 + $0x68] sm:$0xff]
  %v225 = vld [vmem:[%s3 + $0x70] sm:$0xff]
  %v226 = vld [vmem:[%s3 + $0x78] sm:$0xff]
  %v227 = vadd.f32 %v149, %v211
  %v228 = vadd.f32 %v152, %v212
  %v229 = vadd.f32 %v157, %v213
  %v230 = vadd.f32 %v160, %v214
  %v231 = vadd.f32 %v165, %v215
  %v232 = vadd.f32 %v168, %v216
  %v233 = vadd.f32 %v173, %v217
  %v234 = vadd.f32 %v176, %v218
  %v235 = vadd.f32 %v181, %v219
  %v236 = vadd.f32 %v184, %v220
  %v237 = vadd.f32 %v189, %v221
  %v238 = vadd.f32 %v192, %v222
  %v239 = vadd.f32 %v197, %v223
  %v240 = vadd.f32 %v200, %v224
  %v241 = vadd.f32 %v205, %v225
  %v242 = vadd.f32 %v208, %v226
  %243 = vst [vmem:[%s4] sm:$0xff] %v227
  %244 = vst [vmem:[%s4 + $0x8] sm:$0xff] %v228
  %245 = vst [vmem:[%s4 + $0x10] sm:$0xff] %v229
  %246 = vst [vmem:[%s4 + $0x18] sm:$0xff] %v230
  %247 = vst [vmem:[%s4 + $0x20] sm:$0xff] %v231
  %248 = vst [vmem:[%s4 + $0x28] sm:$0xff] %v232
  %249 = vst [vmem:[%s4 + $0x30] sm:$0xff] %v233
  %250 = vst [vmem:[%s4 + $0x38] sm:$0xff] %v234
  %251 = vst [vmem:[%s4 + $0x40] sm:$0xff] %v235
  %252 = vst [vmem:[%s4 + $0x48] sm:$0xff] %v236
  %253 = vst [vmem:[%s4 + $0x50] sm:$0xff] %v237
  %254 = vst [vmem:[%s4 + $0x58] sm:$0xff] %v238
  %255 = vst [vmem:[%s4 + $0x60] sm:$0xff] %v239
  %256 = vst [vmem:[%s4 + $0x68] sm:$0xff] %v240
  %257 = vst [vmem:[%s4 + $0x70] sm:$0xff] %v241
  %258 = vst [vmem:[%s4 + $0x78] sm:$0xff] %v242
  // Predicated region
  $region18: #{_lambda_.8} parent=0 // pred_check
    _
  $region19: #{_lambda_.8} parent=0 // pred_check_branch
    %260 = sbr.rel (0) target = $region21
  $region20: #{_lambda_.8} parent=0 // pred_region
    _
  $region21: #{_lambda_.8} parent=0 // pred_fallthru
    _
  // Predicated region
  $region22: #{_lambda_.8} parent=0 // pred_check
    _
  $region23: #{_lambda_.8} parent=0 // pred_check_branch
    %262 = sbr.rel (0) target = $region25
  $region24: #{_lambda_.8} parent=0 // pred_region
    _
  $region25: #{_lambda_.8} parent=0 // pred_fallthru
    _

// kernel: _lambda_.7
$region0: #{_lambda_.7}
  #allocation0 [shape = 'u32[]', space=smem, size = 0x4, offset = 0x4, fixed_abs, tag = 'smem constant byte address 0x4 - core index']
  #allocation1 [shape = 'u32[144,128]{1,0:T(1,128)}', space=vmem, size = 0x12000, scoped, tag = 'internal scratch']
  %s0 = inlined_call_operand.vmem [shape: bf16[128,144], index: 0, kind: input, shape index: {}]
  %s1 = inlined_call_operand.vmem [shape: bf16[144,128], index: 1, kind: input, shape index: {}]
  %s2 = inlined_call_operand.vmem [shape: f32[1,128], index: 2, kind: input, shape index: {}]
  %s3 = inlined_call_operand.vmem [shape: f32[128,128], index: 3, kind: output, shape index: {}]
  %s4 = sld [smem:[#allocation0]]
  $region22: #{_lambda_.7} parent=0
    _
  %s6 = ssub.s32 1, %s4
  %s7 = scalar_select 0, %s6, %s4
  // Predicated region
  $region2: #{_lambda_.7} parent=0 // pred_check
    _
  $region3: #{_lambda_.7} parent=0 // pred_check_branch
    %9 = sbr.rel (0) target = $region5
  $region4: #{_lambda_.7} parent=0 // pred_region
    _
  $region5: #{_lambda_.7} parent=0 // pred_fallthru
    _
  // Predicated region
  $region6: #{_lambda_.7} parent=0 // pred_check
    _
  $region7: #{_lambda_.7} parent=0 // pred_check_branch
    %11 = sbr.rel (0) target = $region9
  $region8: #{_lambda_.7} parent=0 // pred_region
    _
  $region9: #{_lambda_.7} parent=0 // pred_fallthru
    _
  // Predicated region
  $region10: #{_lambda_.7} parent=0 // pred_check
    _
  $region11: #{_lambda_.7} parent=0 // pred_check_branch
    %13 = sbr.rel (0) target = $region13
  $region12: #{_lambda_.7} parent=0 // pred_region
    _
  $region13: #{_lambda_.7} parent=0 // pred_fallthru
    _
  %v15 = vld [vmem:[%s0] sm:$0xff]
  %v16 = vld [vmem:[%s0 + $0x8] sm:$0xff]
  %v17 = vld [vmem:[%s0 + $0x10] sm:$0xff]
  %v18 = vld [vmem:[%s0 + $0x18] sm:$0xff]
  %v19 = vld [vmem:[%s0 + $0x20] sm:$0xff]
  %v20 = vld [vmem:[%s0 + $0x28] sm:$0xff]
  %v21 = vld [vmem:[%s0 + $0x30] sm:$0xff]
  %v22 = vld [vmem:[%s0 + $0x38] sm:$0xff]
  %v23 = vld [vmem:[%s0 + $0x40] sm:$0xff]
  %v24 = vld [vmem:[%s0 + $0x48] sm:$0xff]
  %v25 = vld [vmem:[%s0 + $0x50] sm:$0xff]
  %v26 = vld [vmem:[%s0 + $0x58] sm:$0xff]
  %v27 = vld [vmem:[%s0 + $0x60] sm:$0xff]
  %v28 = vld [vmem:[%s0 + $0x68] sm:$0xff]
  %v29 = vld [vmem:[%s0 + $0x70] sm:$0xff]
  %v30 = vld [vmem:[%s0 + $0x78] sm:$0xff]
  %v31 = vmax.bf16 %v15, 0
  %v32 = vmax.bf16 %v16, 0
  %v33 = vmax.bf16 %v17, 0
  %v34 = vmax.bf16 %v18, 0
  %v35 = vmax.bf16 %v19, 0
  %v36 = vmax.bf16 %v20, 0
  %v37 = vmax.bf16 %v21, 0
  %v38 = vmax.bf16 %v22, 0
  %v39 = vmax.bf16 %v23, 0
  %v40 = vmax.bf16 %v24, 0
  %v41 = vmax.bf16 %v25, 0
  %v42 = vmax.bf16 %v26, 0
  %v43 = vmax.bf16 %v27, 0
  %v44 = vmax.bf16 %v28, 0
  %v45 = vmax.bf16 %v29, 0
  %v46 = vmax.bf16 %v30, 0
  %v47 = vld [vmem:[%s1] sm:$0xf]
  %v48 = vld [vmem:[%s1 + $0x4] sm:$0xf]
  %v49 = vld [vmem:[%s1 + $0x8] sm:$0xf]
  %v50 = vld [vmem:[%s1 + $0xc] sm:$0xf]
  %v51 = vld [vmem:[%s1 + $0x10] sm:$0xf]
  %v52 = vld [vmem:[%s1 + $0x14] sm:$0xf]
  %v53 = vld [vmem:[%s1 + $0x18] sm:$0xf]
  %v54 = vld [vmem:[%s1 + $0x1c] sm:$0xf]
  %v55 = vld [vmem:[%s1 + $0x20] sm:$0xf]
  %v56 = vld [vmem:[%s1 + $0x24] sm:$0xf]
  %v57 = vld [vmem:[%s1 + $0x28] sm:$0xf]
  %v58 = vld [vmem:[%s1 + $0x2c] sm:$0xf]
  %v59 = vld [vmem:[%s1 + $0x30] sm:$0xf]
  %v60 = vld [vmem:[%s1 + $0x34] sm:$0xf]
  %v61 = vld [vmem:[%s1 + $0x38] sm:$0xf]
  %v62 = vld [vmem:[%s1 + $0x3c] sm:$0xf]
  %v63 = vld [vmem:[%s1 + $0x40] sm:$0xf]
  %v64 = vld [vmem:[%s1 + $0x44] sm:$0xf]
  %v65 = vld [vmem:[%s2] sm:$0x1]
  %v67 = vlaneseq
  %v68 = vshrl.u32 %v67, 7
  %v69 = vsub.s32 0, %v68
  %v70 = vrot.slane %v65, %v69
  %v88 = vunpack.c.l.b16 %v31
  %v89 = vunpack.c.h.b16 %v31
  %v90 = vunpack.c.l.b16 %v32
  %v91 = vunpack.c.h.b16 %v32
  %v92 = vunpack.c.l.b16 %v33
  %v93 = vunpack.c.h.b16 %v33
  %v94 = vunpack.c.l.b16 %v34
  %v95 = vunpack.c.h.b16 %v34
  %v96 = vunpack.c.l.b16 %v35
  %v97 = vunpack.c.h.b16 %v35
  %v98 = vunpack.c.l.b16 %v36
  %v99 = vunpack.c.h.b16 %v36
  %v100 = vunpack.c.l.b16 %v37
  %v101 = vunpack.c.h.b16 %v37
  %v102 = vunpack.c.l.b16 %v38
  %v103 = vunpack.c.h.b16 %v38
  %v104 = vunpack.c.l.b16 %v39
  %v105 = vunpack.c.h.b16 %v39
  %v106 = vunpack.c.l.b16 %v40
  %v107 = vunpack.c.h.b16 %v40
  %v108 = vunpack.c.l.b16 %v41
  %v109 = vunpack.c.h.b16 %v41
  %v110 = vunpack.c.l.b16 %v42
  %v111 = vunpack.c.h.b16 %v42
  %v112 = vunpack.c.l.b16 %v43
  %v113 = vunpack.c.h.b16 %v43
  %v114 = vunpack.c.l.b16 %v44
  %v115 = vunpack.c.h.b16 %v44
  %v116 = vunpack.c.l.b16 %v45
  %v117 = vunpack.c.h.b16 %v45
  %v118 = vunpack.c.l.b16 %v46
  %v119 = vunpack.c.h.b16 %v46
  %v120 = vpack.c.b16 %v90, %v88
  %v121 = vpack.c.b16 %v91, %v89
  %v122 = vpack.c.b16 %v94, %v92
  %v123 = vpack.c.b16 %v95, %v93
  %v124 = vpack.c.b16 %v98, %v96
  %v125 = vpack.c.b16 %v99, %v97
  %v126 = vpack.c.b16 %v102, %v100
  %v127 = vpack.c.b16 %v103, %v101
  %v128 = vpack.c.b16 %v106, %v104
  %v129 = vpack.c.b16 %v107, %v105
  %v130 = vpack.c.b16 %v110, %v108
  %v131 = vpack.c.b16 %v111, %v109
  %v132 = vpack.c.b16 %v114, %v112
  %v133 = vpack.c.b16 %v115, %v113
  %v134 = vpack.c.b16 %v118, %v116
  %v135 = vpack.c.b16 %v119, %v117
  %v162 = vunpack.c.l.b16 %v47
  %v163 = vunpack.c.l.b16 %v48
  %v164 = vunpack.c.l.b16 %v49
  %v165 = vunpack.c.l.b16 %v50
  %v166 = vunpack.c.l.b16 %v51
  %v167 = vunpack.c.l.b16 %v52
  %v168 = vunpack.c.l.b16 %v53
  %v169 = vunpack.c.l.b16 %v54
  %v170 = vunpack.c.l.b16 %v55
  %v171 = vunpack.c.l.b16 %v56
  %v172 = vunpack.c.l.b16 %v57
  %v173 = vunpack.c.l.b16 %v58
  %v174 = vunpack.c.l.b16 %v59
  %v175 = vunpack.c.l.b16 %v60
  %v176 = vunpack.c.l.b16 %v61
  %v177 = vunpack.c.l.b16 %v62
  %v178 = vunpack.c.l.b16 %v63
  %v179 = vunpack.c.l.b16 %v64
  %v180 = vpack.c.b16 %v163, %v162
  %v181 = vpack.c.b16 %v165, %v164
  %v182 = vpack.c.b16 %v167, %v166
  %v183 = vpack.c.b16 %v169, %v168
  %v184 = vpack.c.b16 %v171, %v170
  %v185 = vpack.c.b16 %v173, %v172
  %v186 = vpack.c.b16 %v175, %v174
  %v187 = vpack.c.b16 %v177, %v176
  %v188 = vpack.c.b16 %v179, %v178
  %vm198 = vcmask 130048
  %v200 = vsel %vm198, %v121, 0
  %v203 = vsel %vm198, %v123, 0
  %v206 = vsel %vm198, %v125, 0
  %v209 = vsel %vm198, %v127, 0
  %v212 = vsel %vm198, %v129, 0
  %v215 = vsel %vm198, %v131, 0
  %v218 = vsel %vm198, %v133, 0
  %v221 = vsel %vm198, %v135, 0
  %223 = vmatprep.subr.bf16.mxu0 0
  %224 = vmatpush1.bf16.msra.mxu0 %v187
  %225 = vmatprep.subr.bf16.mxu0 0
  %226 = vmatpush1.bf16.msra.mxu0 %v186
  %227 = vmatprep.subr.bf16.mxu0 0
  %228 = vmatpush1.bf16.msra.mxu0 %v185
  %229 = vmatprep.subr.bf16.mxu0 0
  %230 = vmatpush1.bf16.msra.mxu0 %v184
  %231 = vmatprep.subr.bf16.mxu0 0
  %232 = vmatpush1.bf16.msra.mxu0 %v183
  %233 = vmatprep.subr.bf16.mxu0 0
  %234 = vmatpush1.bf16.msra.mxu0 %v182
  %235 = vmatprep.subr.bf16.mxu0 0
  %236 = vmatpush1.bf16.msra.mxu0 %v181
  %237 = vmatprep.subr.bf16.mxu0 0
  %238 = vmatpush1.bf16.msra.mxu0 %v180
  %239 = vmatprep.subr.bf16.mxu0 0
  %240 = vmatpush2.bf16.msra.mxu0 0
  %241 = vmatprep.subr.bf16.mxu0 0
  %242 = vmatpush2.bf16.msra.mxu0 0
  %243 = vmatprep.subr.bf16.mxu0 0
  %244 = vmatpush2.bf16.msra.mxu0 0
  %245 = vmatprep.subr.bf16.mxu0 0
  %246 = vmatpush2.bf16.msra.mxu0 0
  %247 = vmatprep.subr.bf16.mxu0 0
  %248 = vmatpush2.bf16.msra.mxu0 0
  %249 = vmatprep.subr.bf16.mxu0 0
  %250 = vmatpush2.bf16.msra.mxu0 0
  %251 = vmatprep.subr.bf16.mxu0 0
  %252 = vmatpush2.bf16.msra.mxu0 0
  %253 = vmatprep.subr.bf16.mxu0 0
  %254 = vmatpush2.bf16.msra.mxu0 %v188
  %255 = vmatprep.mubr.bf16.mxu0 %v200
  %256 = vmatmul.mubr.bf16.gmra.mxu0 %v120
  %v257 = vpop.f32.mrf.mxu0
  %v258 = vadd.f32 %v70, %v257
  %v259 = vpop.f32.mrf.mxu0
  %v260 = vpop.f32.mrf.mxu0
  %v261 = vadd.f32 %v70, %v260
  %v262 = vpop.f32.mrf.mxu0
  %263 = vmatprep.mubr.bf16.mxu0 %v203
  %264 = vmatmul.mubr.bf16.gmra.mxu0 %v122
  %v265 = vpop.f32.mrf.mxu0
  %v266 = vadd.f32 %v70, %v265
  %v267 = vpop.f32.mrf.mxu0
  %v268 = vpop.f32.mrf.mxu0
  %v269 = vadd.f32 %v70, %v268
  %v270 = vpop.f32.mrf.mxu0
  %271 = vmatprep.mubr.bf16.mxu0 %v206
  %272 = vmatmul.mubr.bf16.gmra.mxu0 %v124
  %v273 = vpop.f32.mrf.mxu0
  %v274 = vadd.f32 %v70, %v273
  %v275 = vpop.f32.mrf.mxu0
  %v276 = vpop.f32.mrf.mxu0
  %v277 = vadd.f32 %v70, %v276
  %v278 = vpop.f32.mrf.mxu0
  %279 = vmatprep.mubr.bf16.mxu0 %v209
  %280 = vmatmul.mubr.bf16.gmra.mxu0 %v126
  %v281 = vpop.f32.mrf.mxu0
  %v282 = vadd.f32 %v70, %v281
  %v283 = vpop.f32.mrf.mxu0
  %v284 = vpop.f32.mrf.mxu0
  %v285 = vadd.f32 %v70, %v284
  %v286 = vpop.f32.mrf.mxu0
  %287 = vmatprep.mubr.bf16.mxu0 %v212
  %288 = vmatmul.mubr.bf16.gmra.mxu0 %v128
  %v289 = vpop.f32.mrf.mxu0
  %v290 = vadd.f32 %v70, %v289
  %v291 = vpop.f32.mrf.mxu0
  %v292 = vpop.f32.mrf.mxu0
  %v293 = vadd.f32 %v70, %v292
  %v294 = vpop.f32.mrf.mxu0
  %295 = vmatprep.mubr.bf16.mxu0 %v215
  %296 = vmatmul.mubr.bf16.gmra.mxu0 %v130
  %v297 = vpop.f32.mrf.mxu0
  %v298 = vadd.f32 %v70, %v297
  %v299 = vpop.f32.mrf.mxu0
  %v300 = vpop.f32.mrf.mxu0
  %v301 = vadd.f32 %v70, %v300
  %v302 = vpop.f32.mrf.mxu0
  %303 = vmatprep.mubr.bf16.mxu0 %v218
  %304 = vmatmul.mubr.bf16.gmra.mxu0 %v132
  %v305 = vpop.f32.mrf.mxu0
  %v306 = vadd.f32 %v70, %v305
  %v307 = vpop.f32.mrf.mxu0
  %v308 = vpop.f32.mrf.mxu0
  %v309 = vadd.f32 %v70, %v308
  %v310 = vpop.f32.mrf.mxu0
  %311 = vmatprep.mubr.bf16.mxu0 %v221
  %312 = vmatmul.mubr.bf16.gmra.mxu0 %v134
  %v313 = vpop.f32.mrf.mxu0
  %v314 = vadd.f32 %v70, %v313
  %v315 = vpop.f32.mrf.mxu0
  %v316 = vpop.f32.mrf.mxu0
  %v317 = vadd.f32 %v70, %v316
  %v318 = vpop.f32.mrf.mxu0
  %319 = vdwg.mxu0
  %v320 = vmax.f32 %v258, 0.0
  %v321 = vmax.f32 %v261, 0.0
  %v322 = vmax.f32 %v266, 0.0
  %v323 = vmax.f32 %v269, 0.0
  %v324 = vmax.f32 %v274, 0.0
  %v325 = vmax.f32 %v277, 0.0
  %v326 = vmax.f32 %v282, 0.0
  %v327 = vmax.f32 %v285, 0.0
  %v328 = vmax.f32 %v290, 0.0
  %v329 = vmax.f32 %v293, 0.0
  %v330 = vmax.f32 %v298, 0.0
  %v331 = vmax.f32 %v301, 0.0
  %v332 = vmax.f32 %v306, 0.0
  %v333 = vmax.f32 %v309, 0.0
  %v334 = vmax.f32 %v314, 0.0
  %v335 = vmax.f32 %v317, 0.0
  %336 = vst [vmem:[%s3] sm:$0xff] %v320
  %337 = vst [vmem:[%s3 + $0x8] sm:$0xff] %v321
  %338 = vst [vmem:[%s3 + $0x10] sm:$0xff] %v322
  %339 = vst [vmem:[%s3 + $0x18] sm:$0xff] %v323
  %340 = vst [vmem:[%s3 + $0x20] sm:$0xff] %v324
  %341 = vst [vmem:[%s3 + $0x28] sm:$0xff] %v325
  %342 = vst [vmem:[%s3 + $0x30] sm:$0xff] %v326
  %343 = vst [vmem:[%s3 + $0x38] sm:$0xff] %v327
  %344 = vst [vmem:[%s3 + $0x40] sm:$0xff] %v328
  %345 = vst [vmem:[%s3 + $0x48] sm:$0xff] %v329
  %346 = vst [vmem:[%s3 + $0x50] sm:$0xff] %v330
  %347 = vst [vmem:[%s3 + $0x58] sm:$0xff] %v331
  %348 = vst [vmem:[%s3 + $0x60] sm:$0xff] %v332
  %349 = vst [vmem:[%s3 + $0x68] sm:$0xff] %v333
  %350 = vst [vmem:[%s3 + $0x70] sm:$0xff] %v334
  %351 = vst [vmem:[%s3 + $0x78] sm:$0xff] %v335
  // Predicated region
  $region14: #{_lambda_.7} parent=0 // pred_check
    _
  $region15: #{_lambda_.7} parent=0 // pred_check_branch
    %353 = sbr.rel (0) target = $region17
  $region16: #{_lambda_.7} parent=0 // pred_region
    _
  $region17: #{_lambda_.7} parent=0 // pred_fallthru
    _
  // Predicated region
  $region18: #{_lambda_.7} parent=0 // pred_check
    _
  $region19: #{_lambda_.7} parent=0 // pred_check_branch
    %355 = sbr.rel (0) target = $region21
  $region20: #{_lambda_.7} parent=0 // pred_region
    _
  $region21: #{_lambda_.7} parent=0 // pred_fallthru
    _

// kernel: _lambda_.11
$region0: #{_lambda_.11}
  #allocation0 [shape = 'u32[]', space=smem, size = 0x4, offset = 0x4, fixed_abs, tag = 'smem constant byte address 0x4 - core index']
  #allocation1 [shape = 'u32[144,128]{1,0:T(1,128)}', space=vmem, size = 0x12000, scoped, tag = 'internal scratch']
  %s0 = inlined_call_operand.vmem [shape: bf16[128,144], index: 0, kind: input, shape index: {}]
  %s1 = inlined_call_operand.vmem [shape: bf16[144,128], index: 1, kind: input, shape index: {}]
  %s2 = inlined_call_operand.vmem [shape: f32[1,128], index: 2, kind: input, shape index: {}]
  %s3 = inlined_call_operand.vmem [shape: f32[128,128], index: 3, kind: output, shape index: {}]
  %s4 = sld [smem:[#allocation0]]
  $region22: #{_lambda_.11} parent=0
    _
  %s6 = ssub.s32 1, %s4
  %s7 = scalar_select 0, %s6, %s4
  // Predicated region
  $region2: #{_lambda_.11} parent=0 // pred_check
    _
  $region3: #{_lambda_.11} parent=0 // pred_check_branch
    %9 = sbr.rel (0) target = $region5
  $region4: #{_lambda_.11} parent=0 // pred_region
    _
  $region5: #{_lambda_.11} parent=0 // pred_fallthru
    _
  // Predicated region
  $region6: #{_lambda_.11} parent=0 // pred_check
    _
  $region7: #{_lambda_.11} parent=0 // pred_check_branch
    %11 = sbr.rel (0) target = $region9
  $region8: #{_lambda_.11} parent=0 // pred_region
    _
  $region9: #{_lambda_.11} parent=0 // pred_fallthru
    _
  // Predicated region
  $region10: #{_lambda_.11} parent=0 // pred_check
    _
  $region11: #{_lambda_.11} parent=0 // pred_check_branch
    %13 = sbr.rel (0) target = $region13
  $region12: #{_lambda_.11} parent=0 // pred_region
    _
  $region13: #{_lambda_.11} parent=0 // pred_fallthru
    _
  %v15 = vld [vmem:[%s0] sm:$0xff]
  %v16 = vld [vmem:[%s0 + $0x8] sm:$0xff]
  %v17 = vld [vmem:[%s0 + $0x10] sm:$0xff]
  %v18 = vld [vmem:[%s0 + $0x18] sm:$0xff]
  %v19 = vld [vmem:[%s0 + $0x20] sm:$0xff]
  %v20 = vld [vmem:[%s0 + $0x28] sm:$0xff]
  %v21 = vld [vmem:[%s0 + $0x30] sm:$0xff]
  %v22 = vld [vmem:[%s0 + $0x38] sm:$0xff]
  %v23 = vld [vmem:[%s0 + $0x40] sm:$0xff]
  %v24 = vld [vmem:[%s0 + $0x48] sm:$0xff]
  %v25 = vld [vmem:[%s0 + $0x50] sm:$0xff]
  %v26 = vld [vmem:[%s0 + $0x58] sm:$0xff]
  %v27 = vld [vmem:[%s0 + $0x60] sm:$0xff]
  %v28 = vld [vmem:[%s0 + $0x68] sm:$0xff]
  %v29 = vld [vmem:[%s0 + $0x70] sm:$0xff]
  %v30 = vld [vmem:[%s0 + $0x78] sm:$0xff]
  %v31 = vld [vmem:[%s1] sm:$0xf]
  %v32 = vld [vmem:[%s1 + $0x4] sm:$0xf]
  %v33 = vld [vmem:[%s1 + $0x8] sm:$0xf]
  %v34 = vld [vmem:[%s1 + $0xc] sm:$0xf]
  %v35 = vld [vmem:[%s1 + $0x10] sm:$0xf]
  %v36 = vld [vmem:[%s1 + $0x14] sm:$0xf]
  %v37 = vld [vmem:[%s1 + $0x18] sm:$0xf]
  %v38 = vld [vmem:[%s1 + $0x1c] sm:$0xf]
  %v39 = vld [vmem:[%s1 + $0x20] sm:$0xf]
  %v40 = vld [vmem:[%s1 + $0x24] sm:$0xf]
  %v41 = vld [vmem:[%s1 + $0x28] sm:$0xf]
  %v42 = vld [vmem:[%s1 + $0x2c] sm:$0xf]
  %v43 = vld [vmem:[%s1 + $0x30] sm:$0xf]
  %v44 = vld [vmem:[%s1 + $0x34] sm:$0xf]
  %v45 = vld [vmem:[%s1 + $0x38] sm:$0xf]
  %v46 = vld [vmem:[%s1 + $0x3c] sm:$0xf]
  %v47 = vld [vmem:[%s1 + $0x40] sm:$0xf]
  %v48 = vld [vmem:[%s1 + $0x44] sm:$0xf]
  %v49 = vld [vmem:[%s2] sm:$0x1]
  %v51 = vlaneseq
  %v52 = vshrl.u32 %v51, 7
  %v53 = vsub.s32 0, %v52
  %v54 = vrot.slane %v49, %v53
  %v72 = vunpack.c.l.b16 %v15
  %v73 = vunpack.c.h.b16 %v15
  %v74 = vunpack.c.l.b16 %v16
  %v75 = vunpack.c.h.b16 %v16
  %v76 = vunpack.c.l.b16 %v17
  %v77 = vunpack.c.h.b16 %v17
  %v78 = vunpack.c.l.b16 %v18
  %v79 = vunpack.c.h.b16 %v18
  %v80 = vunpack.c.l.b16 %v19
  %v81 = vunpack.c.h.b16 %v19
  %v82 = vunpack.c.l.b16 %v20
  %v83 = vunpack.c.h.b16 %v20
  %v84 = vunpack.c.l.b16 %v21
  %v85 = vunpack.c.h.b16 %v21
  %v86 = vunpack.c.l.b16 %v22
  %v87 = vunpack.c.h.b16 %v22
  %v88 = vunpack.c.l.b16 %v23
  %v89 = vunpack.c.h.b16 %v23
  %v90 = vunpack.c.l.b16 %v24
  %v91 = vunpack.c.h.b16 %v24
  %v92 = vunpack.c.l.b16 %v25
  %v93 = vunpack.c.h.b16 %v25
  %v94 = vunpack.c.l.b16 %v26
  %v95 = vunpack.c.h.b16 %v26
  %v96 = vunpack.c.l.b16 %v27
  %v97 = vunpack.c.h.b16 %v27
  %v98 = vunpack.c.l.b16 %v28
  %v99 = vunpack.c.h.b16 %v28
  %v100 = vunpack.c.l.b16 %v29
  %v101 = vunpack.c.h.b16 %v29
  %v102 = vunpack.c.l.b16 %v30
  %v103 = vunpack.c.h.b16 %v30
  %v104 = vpack.c.b16 %v74, %v72
  %v105 = vpack.c.b16 %v75, %v73
  %v106 = vpack.c.b16 %v78, %v76
  %v107 = vpack.c.b16 %v79, %v77
  %v108 = vpack.c.b16 %v82, %v80
  %v109 = vpack.c.b16 %v83, %v81
  %v110 = vpack.c.b16 %v86, %v84
  %v111 = vpack.c.b16 %v87, %v85
  %v112 = vpack.c.b16 %v90, %v88
  %v113 = vpack.c.b16 %v91, %v89
  %v114 = vpack.c.b16 %v94, %v92
  %v115 = vpack.c.b16 %v95, %v93
  %v116 = vpack.c.b16 %v98, %v96
  %v117 = vpack.c.b16 %v99, %v97
  %v118 = vpack.c.b16 %v102, %v100
  %v119 = vpack.c.b16 %v103, %v101
  %v146 = vunpack.c.l.b16 %v31
  %v147 = vunpack.c.l.b16 %v32
  %v148 = vunpack.c.l.b16 %v33
  %v149 = vunpack.c.l.b16 %v34
  %v150 = vunpack.c.l.b16 %v35
  %v151 = vunpack.c.l.b16 %v36
  %v152 = vunpack.c.l.b16 %v37
  %v153 = vunpack.c.l.b16 %v38
  %v154 = vunpack.c.l.b16 %v39
  %v155 = vunpack.c.l.b16 %v40
  %v156 = vunpack.c.l.b16 %v41
  %v157 = vunpack.c.l.b16 %v42
  %v158 = vunpack.c.l.b16 %v43
  %v159 = vunpack.c.l.b16 %v44
  %v160 = vunpack.c.l.b16 %v45
  %v161 = vunpack.c.l.b16 %v46
  %v162 = vunpack.c.l.b16 %v47
  %v163 = vunpack.c.l.b16 %v48
  %v164 = vpack.c.b16 %v147, %v146
  %v165 = vpack.c.b16 %v149, %v148
  %v166 = vpack.c.b16 %v151, %v150
  %v167 = vpack.c.b16 %v153, %v152
  %v168 = vpack.c.b16 %v155, %v154
  %v169 = vpack.c.b16 %v157, %v156
  %v170 = vpack.c.b16 %v159, %v158
  %v171 = vpack.c.b16 %v161, %v160
  %v172 = vpack.c.b16 %v163, %v162
  %vm182 = vcmask 130048
  %v184 = vsel %vm182, %v105, 0
  %v187 = vsel %vm182, %v107, 0
  %v190 = vsel %vm182, %v109, 0
  %v193 = vsel %vm182, %v111, 0
  %v196 = vsel %vm182, %v113, 0
  %v199 = vsel %vm182, %v115, 0
  %v202 = vsel %vm182, %v117, 0
  %v205 = vsel %vm182, %v119, 0
  %207 = vmatprep.subr.bf16.mxu0 0
  %208 = vmatpush1.bf16.msra.mxu0 %v171
  %209 = vmatprep.subr.bf16.mxu0 0
  %210 = vmatpush1.bf16.msra.mxu0 %v170
  %211 = vmatprep.subr.bf16.mxu0 0
  %212 = vmatpush1.bf16.msra.mxu0 %v169
  %213 = vmatprep.subr.bf16.mxu0 0
  %214 = vmatpush1.bf16.msra.mxu0 %v168
  %215 = vmatprep.subr.bf16.mxu0 0
  %216 = vmatpush1.bf16.msra.mxu0 %v167
  %217 = vmatprep.subr.bf16.mxu0 0
  %218 = vmatpush1.bf16.msra.mxu0 %v166
  %219 = vmatprep.subr.bf16.mxu0 0
  %220 = vmatpush1.bf16.msra.mxu0 %v165
  %221 = vmatprep.subr.bf16.mxu0 0
  %222 = vmatpush1.bf16.msra.mxu0 %v164
  %223 = vmatprep.subr.bf16.mxu0 0
  %224 = vmatpush2.bf16.msra.mxu0 0
  %225 = vmatprep.subr.bf16.mxu0 0
  %226 = vmatpush2.bf16.msra.mxu0 0
  %227 = vmatprep.subr.bf16.mxu0 0
  %228 = vmatpush2.bf16.msra.mxu0 0
  %229 = vmatprep.subr.bf16.mxu0 0
  %230 = vmatpush2.bf16.msra.mxu0 0
  %231 = vmatprep.subr.bf16.mxu0 0
  %232 = vmatpush2.bf16.msra.mxu0 0
  %233 = vmatprep.subr.bf16.mxu0 0
  %234 = vmatpush2.bf16.msra.mxu0 0
  %235 = vmatprep.subr.bf16.mxu0 0
  %236 = vmatpush2.bf16.msra.mxu0 0
  %237 = vmatprep.subr.bf16.mxu0 0
  %238 = vmatpush2.bf16.msra.mxu0 %v172
  %239 = vmatprep.mubr.bf16.mxu0 %v184
  %240 = vmatmul.mubr.bf16.gmra.mxu0 %v104
  %v241 = vpop.f32.mrf.mxu0
  %v242 = vadd.f32 %v54, %v241
  %v243 = vpop.f32.mrf.mxu0
  %v244 = vpop.f32.mrf.mxu0
  %v245 = vadd.f32 %v54, %v244
  %v246 = vpop.f32.mrf.mxu0
  %247 = vmatprep.mubr.bf16.mxu0 %v187
  %248 = vmatmul.mubr.bf16.gmra.mxu0 %v106
  %v249 = vpop.f32.mrf.mxu0
  %v250 = vadd.f32 %v54, %v249
  %v251 = vpop.f32.mrf.mxu0
  %v252 = vpop.f32.mrf.mxu0
  %v253 = vadd.f32 %v54, %v252
  %v254 = vpop.f32.mrf.mxu0
  %255 = vmatprep.mubr.bf16.mxu0 %v190
  %256 = vmatmul.mubr.bf16.gmra.mxu0 %v108
  %v257 = vpop.f32.mrf.mxu0
  %v258 = vadd.f32 %v54, %v257
  %v259 = vpop.f32.mrf.mxu0
  %v260 = vpop.f32.mrf.mxu0
  %v261 = vadd.f32 %v54, %v260
  %v262 = vpop.f32.mrf.mxu0
  %263 = vmatprep.mubr.bf16.mxu0 %v193
  %264 = vmatmul.mubr.bf16.gmra.mxu0 %v110
  %v265 = vpop.f32.mrf.mxu0
  %v266 = vadd.f32 %v54, %v265
  %v267 = vpop.f32.mrf.mxu0
  %v268 = vpop.f32.mrf.mxu0
  %v269 = vadd.f32 %v54, %v268
  %v270 = vpop.f32.mrf.mxu0
  %271 = vmatprep.mubr.bf16.mxu0 %v196
  %272 = vmatmul.mubr.bf16.gmra.mxu0 %v112
  %v273 = vpop.f32.mrf.mxu0
  %v274 = vadd.f32 %v54, %v273
  %v275 = vpop.f32.mrf.mxu0
  %v276 = vpop.f32.mrf.mxu0
  %v277 = vadd.f32 %v54, %v276
  %v278 = vpop.f32.mrf.mxu0
  %279 = vmatprep.mubr.bf16.mxu0 %v199
  %280 = vmatmul.mubr.bf16.gmra.mxu0 %v114
  %v281 = vpop.f32.mrf.mxu0
  %v282 = vadd.f32 %v54, %v281
  %v283 = vpop.f32.mrf.mxu0
  %v284 = vpop.f32.mrf.mxu0
  %v285 = vadd.f32 %v54, %v284
  %v286 = vpop.f32.mrf.mxu0
  %287 = vmatprep.mubr.bf16.mxu0 %v202
  %288 = vmatmul.mubr.bf16.gmra.mxu0 %v116
  %v289 = vpop.f32.mrf.mxu0
  %v290 = vadd.f32 %v54, %v289
  %v291 = vpop.f32.mrf.mxu0
  %v292 = vpop.f32.mrf.mxu0
  %v293 = vadd.f32 %v54, %v292
  %v294 = vpop.f32.mrf.mxu0
  %295 = vmatprep.mubr.bf16.mxu0 %v205
  %296 = vmatmul.mubr.bf16.gmra.mxu0 %v118
  %v297 = vpop.f32.mrf.mxu0
  %v298 = vadd.f32 %v54, %v297
  %v299 = vpop.f32.mrf.mxu0
  %v300 = vpop.f32.mrf.mxu0
  %v301 = vadd.f32 %v54, %v300
  %v302 = vpop.f32.mrf.mxu0
  %303 = vdwg.mxu0
  %v304 = vmax.f32 %v242, 0.0
  %v305 = vmax.f32 %v245, 0.0
  %v306 = vmax.f32 %v250, 0.0
  %v307 = vmax.f32 %v253, 0.0
  %v308 = vmax.f32 %v258, 0.0
  %v309 = vmax.f32 %v261, 0.0
  %v310 = vmax.f32 %v266, 0.0
  %v311 = vmax.f32 %v269, 0.0
  %v312 = vmax.f32 %v274, 0.0
  %v313 = vmax.f32 %v277, 0.0
  %v314 = vmax.f32 %v282, 0.0
  %v315 = vmax.f32 %v285, 0.0
  %v316 = vmax.f32 %v290, 0.0
  %v317 = vmax.f32 %v293, 0.0
  %v318 = vmax.f32 %v298, 0.0
  %v319 = vmax.f32 %v301, 0.0
  %320 = vst [vmem:[%s3] sm:$0xff] %v304
  %321 = vst [vmem:[%s3 + $0x8] sm:$0xff] %v305
  %322 = vst [vmem:[%s3 + $0x10] sm:$0xff] %v306
  %323 = vst [vmem:[%s3 + $0x18] sm:$0xff] %v307
  %324 = vst [vmem:[%s3 + $0x20] sm:$0xff] %v308
  %325 = vst [vmem:[%s3 + $0x28] sm:$0xff] %v309
  %326 = vst [vmem:[%s3 + $0x30] sm:$0xff] %v310
  %327 = vst [vmem:[%s3 + $0x38] sm:$0xff] %v311
  %328 = vst [vmem:[%s3 + $0x40] sm:$0xff] %v312
  %329 = vst [vmem:[%s3 + $0x48] sm:$0xff] %v313
  %330 = vst [vmem:[%s3 + $0x50] sm:$0xff] %v314
  %331 = vst [vmem:[%s3 + $0x58] sm:$0xff] %v315
  %332 = vst [vmem:[%s3 + $0x60] sm:$0xff] %v316
  %333 = vst [vmem:[%s3 + $0x68] sm:$0xff] %v317
  %334 = vst [vmem:[%s3 + $0x70] sm:$0xff] %v318
  %335 = vst [vmem:[%s3 + $0x78] sm:$0xff] %v319
  // Predicated region
  $region14: #{_lambda_.11} parent=0 // pred_check
    _
  $region15: #{_lambda_.11} parent=0 // pred_check_branch
    %337 = sbr.rel (0) target = $region17
  $region16: #{_lambda_.11} parent=0 // pred_region
    _
  $region17: #{_lambda_.11} parent=0 // pred_fallthru
    _
  // Predicated region
  $region18: #{_lambda_.11} parent=0 // pred_check
    _
  $region19: #{_lambda_.11} parent=0 // pred_check_branch
    %339 = sbr.rel (0) target = $region21
  $region20: #{_lambda_.11} parent=0 // pred_region
    _
  $region21: #{_lambda_.11} parent=0 // pred_fallthru
    _

// kernel: _lambda_.12
$region0: #{_lambda_.12}
  #allocation0 [shape = 'u32[]', space=smem, size = 0x4, offset = 0x4, fixed_abs, tag = 'smem constant byte address 0x4 - core index']
  #allocation1 [shape = 'u32[144,128]{1,0:T(1,128)}', space=vmem, size = 0x12000, scoped, tag = 'internal scratch']
  %s0 = inlined_call_operand.vmem [shape: bf16[512,256], index: 0, kind: input, shape index: {}]
  %s1 = inlined_call_operand.vmem [shape: bf16[256,128], index: 1, kind: input, shape index: {}]
  %s2 = inlined_call_operand.vmem [shape: f32[1,128], index: 2, kind: input, shape index: {}]
  %s3 = inlined_call_operand.vmem [shape: f32[512,128], index: 3, kind: output, shape index: {}]
  %s4 = sld [smem:[#allocation0]]
  $region22: #{_lambda_.12} parent=0
    _
  %s6 = ssub.s32 1, %s4
  %s7 = scalar_select 0, %s6, %s4
  // Predicated region
  $region2: #{_lambda_.12} parent=0 // pred_check
    _
  $region3: #{_lambda_.12} parent=0 // pred_check_branch
    %9 = sbr.rel (0) target = $region5
  $region4: #{_lambda_.12} parent=0 // pred_region
    _
  $region5: #{_lambda_.12} parent=0 // pred_fallthru
    _
  // Predicated region
  $region6: #{_lambda_.12} parent=0 // pred_check
    _
  $region7: #{_lambda_.12} parent=0 // pred_check_branch
    %11 = sbr.rel (0) target = $region9
  $region8: #{_lambda_.12} parent=0 // pred_region
    _
  $region9: #{_lambda_.12} parent=0 // pred_fallthru
    _
  // Predicated region
  $region10: #{_lambda_.12} parent=0 // pred_check
    _
  $region11: #{_lambda_.12} parent=0 // pred_check_branch
    %13 = sbr.rel (0) target = $region13
  $region12: #{_lambda_.12} parent=0 // pred_region
    _
  $region13: #{_lambda_.12} parent=0 // pred_fallthru
    _
  %v15 = vld [vmem:[%s0] sm:$0xff]
  %v16 = vld [vmem:[%s0 + $0x8] sm:$0xff]
  %v17 = vld [vmem:[%s0 + $0x10] sm:$0xff]
  %v18 = vld [vmem:[%s0 + $0x18] sm:$0xff]
  %v19 = vld [vmem:[%s0 + $0x20] sm:$0xff]
  %v20 = vld [vmem:[%s0 + $0x28] sm:$0xff]
  %v21 = vld [vmem:[%s0 + $0x30] sm:$0xff]
  %v22 = vld [vmem:[%s0 + $0x38] sm:$0xff]
  %v23 = vld [vmem:[%s0 + $0x40] sm:$0xff]
  %v24 = vld [vmem:[%s0 + $0x48] sm:$0xff]
  %v25 = vld [vmem:[%s0 + $0x50] sm:$0xff]
  %v26 = vld [vmem:[%s0 + $0x58] sm:$0xff]
  %v27 = vld [vmem:[%s0 + $0x60] sm:$0xff]
  %v28 = vld [vmem:[%s0 + $0x68] sm:$0xff]
  %v29 = vld [vmem:[%s0 + $0x70] sm:$0xff]
  %v30 = vld [vmem:[%s0 + $0x78] sm:$0xff]
  %v31 = vld [vmem:[%s0 + $0x80] sm:$0xff]
  %v32 = vld [vmem:[%s0 + $0x88] sm:$0xff]
  %v33 = vld [vmem:[%s0 + $0x90] sm:$0xff]
  %v34 = vld [vmem:[%s0 + $0x98] sm:$0xff]
  %v35 = vld [vmem:[%s0 + $0xa0] sm:$0xff]
  %v36 = vld [vmem:[%s0 + $0xa8] sm:$0xff]
  %v37 = vld [vmem:[%s0 + $0xb0] sm:$0xff]
  %v38 = vld [vmem:[%s0 + $0xb8] sm:$0xff]
  %v39 = vld [vmem:[%s0 + $0xc0] sm:$0xff]
  %v40 = vld [vmem:[%s0 + $0xc8] sm:$0xff]
  %v41 = vld [vmem:[%s0 + $0xd0] sm:$0xff]
  %v42 = vld [vmem:[%s0 + $0xd8] sm:$0xff]
  %v43 = vld [vmem:[%s0 + $0xe0] sm:$0xff]
  %v44 = vld [vmem:[%s0 + $0xe8] sm:$0xff]
  %v45 = vld [vmem:[%s0 + $0xf0] sm:$0xff]
  %v46 = vld [vmem:[%s0 + $0xf8] sm:$0xff]
  %v47 = vld [vmem:[%s0 + $0x100] sm:$0xff]
  %v48 = vld [vmem:[%s0 + $0x108] sm:$0xff]
  %v49 = vld [vmem:[%s0 + $0x110] sm:$0xff]
  %v50 = vld [vmem:[%s0 + $0x118] sm:$0xff]
  %v51 = vld [vmem:[%s0 + $0x120] sm:$0xff]
  %v52 = vld [vmem:[%s0 + $0x128] sm:$0xff]
  %v53 = vld [vmem:[%s0 + $0x130] sm:$0xff]
  %v54 = vld [vmem:[%s0 + $0x138] sm:$0xff]
  %v55 = vld [vmem:[%s0 + $0x140] sm:$0xff]
  %v56 = vld [vmem:[%s0 + $0x148] sm:$0xff]
  %v57 = vld [vmem:[%s0 + $0x150] sm:$0xff]
  %v58 = vld [vmem:[%s0 + $0x158] sm:$0xff]
  %v59 = vld [vmem:[%s0 + $0x160] sm:$0xff]
  %v60 = vld [vmem:[%s0 + $0x168] sm:$0xff]
  %v61 = vld [vmem:[%s0 + $0x170] sm:$0xff]
  %v62 = vld [vmem:[%s0 + $0x178] sm:$0xff]
  %v63 = vld [vmem:[%s0 + $0x180] sm:$0xff]
  %v64 = vld [vmem:[%s0 + $0x188] sm:$0xff]
  %v65 = vld [vmem:[%s0 + $0x190] sm:$0xff]
  %v66 = vld [vmem:[%s0 + $0x198] sm:$0xff]
  %v67 = vld [vmem:[%s0 + $0x1a0] sm:$0xff]
  %v68 = vld [vmem:[%s0 + $0x1a8] sm:$0xff]
  %v69 = vld [vmem:[%s0 + $0x1b0] sm:$0xff]
  %v70 = vld [vmem:[%s0 + $0x1b8] sm:$0xff]
  %v71 = vld [vmem:[%s0 + $0x1c0] sm:$0xff]
  %v72 = vld [vmem:[%s0 + $0x1c8] sm:$0xff]
  %v73 = vld [vmem:[%s0 + $0x1d0] sm:$0xff]
  %v74 = vld [vmem:[%s0 + $0x1d8] sm:$0xff]
  %v75 = vld [vmem:[%s0 + $0x1e0] sm:$0xff]
  %v76 = vld [vmem:[%s0 + $0x1e8] sm:$0xff]
  %v77 = vld [vmem:[%s0 + $0x1f0] sm:$0xff]
  %v78 = vld [vmem:[%s0 + $0x1f8] sm:$0xff]
  %v79 = vld [vmem:[%s1] sm:$0xf]
  %v80 = vld [vmem:[%s1 + $0x4] sm:$0xf]
  %v81 = vld [vmem:[%s1 + $0x8] sm:$0xf]
  %v82 = vld [vmem:[%s1 + $0xc] sm:$0xf]
  %v83 = vld [vmem:[%s1 + $0x10] sm:$0xf]
  %v84 = vld [vmem:[%s1 + $0x14] sm:$0xf]
  %v85 = vld [vmem:[%s1 + $0x18] sm:$0xf]
  %v86 = vld [vmem:[%s1 + $0x1c] sm:$0xf]
  %v87 = vld [vmem:[%s1 + $0x20] sm:$0xf]
  %v88 = vld [vmem:[%s1 + $0x24] sm:$0xf]
  %v89 = vld [vmem:[%s1 + $0x28] sm:$0xf]
  %v90 = vld [vmem:[%s1 + $0x2c] sm:$0xf]
  %v91 = vld [vmem:[%s1 + $0x30] sm:$0xf]
  %v92 = vld [vmem:[%s1 + $0x34] sm:$0xf]
  %v93 = vld [vmem:[%s1 + $0x38] sm:$0xf]
  %v94 = vld [vmem:[%s1 + $0x3c] sm:$0xf]
  %v95 = vld [vmem:[%s1 + $0x40] sm:$0xf]
  %v96 = vld [vmem:[%s1 + $0x44] sm:$0xf]
  %v97 = vld [vmem:[%s1 + $0x48] sm:$0xf]
  %v98 = vld [vmem:[%s1 + $0x4c] sm:$0xf]
  %v99 = vld [vmem:[%s1 + $0x50] sm:$0xf]
  %v100 = vld [vmem:[%s1 + $0x54] sm:$0xf]
  %v101 = vld [vmem:[%s1 + $0x58] sm:$0xf]
  %v102 = vld [vmem:[%s1 + $0x5c] sm:$0xf]
  %v103 = vld [vmem:[%s1 + $0x60] sm:$0xf]
  %v104 = vld [vmem:[%s1 + $0x64] sm:$0xf]
  %v105 = vld [vmem:[%s1 + $0x68] sm:$0xf]
  %v106 = vld [vmem:[%s1 + $0x6c] sm:$0xf]
  %v107 = vld [vmem:[%s1 + $0x70] sm:$0xf]
  %v108 = vld [vmem:[%s1 + $0x74] sm:$0xf]
  %v109 = vld [vmem:[%s1 + $0x78] sm:$0xf]
  %v110 = vld [vmem:[%s1 + $0x7c] sm:$0xf]
  %v111 = vld [vmem:[%s2] sm:$0x1]
  %v113 = vlaneseq
  %v114 = vshrl.u32 %v113, 7
  %v115 = vsub.s32 0, %v114
  %v116 = vrot.slane %v111, %v115
  %v182 = vunpack.c.l.b16 %v15
  %v183 = vunpack.c.h.b16 %v15
  %v184 = vunpack.c.l.b16 %v16
  %v185 = vunpack.c.h.b16 %v16
  %v186 = vunpack.c.l.b16 %v17
  %v187 = vunpack.c.h.b16 %v17
  %v188 = vunpack.c.l.b16 %v18
  %v189 = vunpack.c.h.b16 %v18
  %v190 = vunpack.c.l.b16 %v19
  %v191 = vunpack.c.h.b16 %v19
  %v192 = vunpack.c.l.b16 %v20
  %v193 = vunpack.c.h.b16 %v20
  %v194 = vunpack.c.l.b16 %v21
  %v195 = vunpack.c.h.b16 %v21
  %v196 = vunpack.c.l.b16 %v22
  %v197 = vunpack.c.h.b16 %v22
  %v198 = vunpack.c.l.b16 %v23
  %v199 = vunpack.c.h.b16 %v23
  %v200 = vunpack.c.l.b16 %v24
  %v201 = vunpack.c.h.b16 %v24
  %v202 = vunpack.c.l.b16 %v25
  %v203 = vunpack.c.h.b16 %v25
  %v204 = vunpack.c.l.b16 %v26
  %v205 = vunpack.c.h.b16 %v26
  %v206 = vunpack.c.l.b16 %v27
  %v207 = vunpack.c.h.b16 %v27
  %v208 = vunpack.c.l.b16 %v28
  %v209 = vunpack.c.h.b16 %v28
  %v210 = vunpack.c.l.b16 %v29
  %v211 = vunpack.c.h.b16 %v29
  %v212 = vunpack.c.l.b16 %v30
  %v213 = vunpack.c.h.b16 %v30
  %v214 = vunpack.c.l.b16 %v31
  %v215 = vunpack.c.h.b16 %v31
  %v216 = vunpack.c.l.b16 %v32
  %v217 = vunpack.c.h.b16 %v32
  %v218 = vunpack.c.l.b16 %v33
  %v219 = vunpack.c.h.b16 %v33
  %v220 = vunpack.c.l.b16 %v34
  %v221 = vunpack.c.h.b16 %v34
  %v222 = vunpack.c.l.b16 %v35
  %v223 = vunpack.c.h.b16 %v35
  %v224 = vunpack.c.l.b16 %v36
  %v225 = vunpack.c.h.b16 %v36
  %v226 = vunpack.c.l.b16 %v37
  %v227 = vunpack.c.h.b16 %v37
  %v228 = vunpack.c.l.b16 %v38
  %v229 = vunpack.c.h.b16 %v38
  %v230 = vunpack.c.l.b16 %v39
  %v231 = vunpack.c.h.b16 %v39
  %v232 = vunpack.c.l.b16 %v40
  %v233 = vunpack.c.h.b16 %v40
  %v234 = vunpack.c.l.b16 %v41
  %v235 = vunpack.c.h.b16 %v41
  %v236 = vunpack.c.l.b16 %v42
  %v237 = vunpack.c.h.b16 %v42
  %v238 = vunpack.c.l.b16 %v43
  %v239 = vunpack.c.h.b16 %v43
  %v240 = vunpack.c.l.b16 %v44
  %v241 = vunpack.c.h.b16 %v44
  %v242 = vunpack.c.l.b16 %v45
  %v243 = vunpack.c.h.b16 %v45
  %v244 = vunpack.c.l.b16 %v46
  %v245 = vunpack.c.h.b16 %v46
  %v246 = vunpack.c.l.b16 %v47
  %v247 = vunpack.c.h.b16 %v47
  %v248 = vunpack.c.l.b16 %v48
  %v249 = vunpack.c.h.b16 %v48
  %v250 = vunpack.c.l.b16 %v49
  %v251 = vunpack.c.h.b16 %v49
  %v252 = vunpack.c.l.b16 %v50
  %v253 = vunpack.c.h.b16 %v50
  %v254 = vunpack.c.l.b16 %v51
  %v255 = vunpack.c.h.b16 %v51
  %v256 = vunpack.c.l.b16 %v52
  %v257 = vunpack.c.h.b16 %v52
  %v258 = vunpack.c.l.b16 %v53
  %v259 = vunpack.c.h.b16 %v53
  %v260 = vunpack.c.l.b16 %v54
  %v261 = vunpack.c.h.b16 %v54
  %v262 = vunpack.c.l.b16 %v55
  %v263 = vunpack.c.h.b16 %v55
  %v264 = vunpack.c.l.b16 %v56
  %v265 = vunpack.c.h.b16 %v56
  %v266 = vunpack.c.l.b16 %v57
  %v267 = vunpack.c.h.b16 %v57
  %v268 = vunpack.c.l.b16 %v58
  %v269 = vunpack.c.h.b16 %v58
  %v270 = vunpack.c.l.b16 %v59
  %v271 = vunpack.c.h.b16 %v59
  %v272 = vunpack.c.l.b16 %v60
  %v273 = vunpack.c.h.b16 %v60
  %v274 = vunpack.c.l.b16 %v61
  %v275 = vunpack.c.h.b16 %v61
  %v276 = vunpack.c.l.b16 %v62
  %v277 = vunpack.c.h.b16 %v62
  %v278 = vunpack.c.l.b16 %v63
  %v279 = vunpack.c.h.b16 %v63
  %v280 = vunpack.c.l.b16 %v64
  %v281 = vunpack.c.h.b16 %v64
  %v282 = vunpack.c.l.b16 %v65
  %v283 = vunpack.c.h.b16 %v65
  %v284 = vunpack.c.l.b16 %v66
  %v285 = vunpack.c.h.b16 %v66
  %v286 = vunpack.c.l.b16 %v67
  %v287 = vunpack.c.h.b16 %v67
  %v288 = vunpack.c.l.b16 %v68
  %v289 = vunpack.c.h.b16 %v68
  %v290 = vunpack.c.l.b16 %v69
  %v291 = vunpack.c.h.b16 %v69
  %v292 = vunpack.c.l.b16 %v70
  %v293 = vunpack.c.h.b16 %v70
  %v294 = vunpack.c.l.b16 %v71
  %v295 = vunpack.c.h.b16 %v71
  %v296 = vunpack.c.l.b16 %v72
  %v297 = vunpack.c.h.b16 %v72
  %v298 = vunpack.c.l.b16 %v73
  %v299 = vunpack.c.h.b16 %v73
  %v300 = vunpack.c.l.b16 %v74
  %v301 = vunpack.c.h.b16 %v74
  %v302 = vunpack.c.l.b16 %v75
  %v303 = vunpack.c.h.b16 %v75
  %v304 = vunpack.c.l.b16 %v76
  %v305 = vunpack.c.h.b16 %v76
  %v306 = vunpack.c.l.b16 %v77
  %v307 = vunpack.c.h.b16 %v77
  %v308 = vunpack.c.l.b16 %v78
  %v309 = vunpack.c.h.b16 %v78
  %v310 = vpack.c.b16 %v184, %v182
  %v311 = vpack.c.b16 %v185, %v183
  %v312 = vpack.c.b16 %v188, %v186
  %v313 = vpack.c.b16 %v189, %v187
  %v314 = vpack.c.b16 %v192, %v190
  %v315 = vpack.c.b16 %v193, %v191
  %v316 = vpack.c.b16 %v196, %v194
  %v317 = vpack.c.b16 %v197, %v195
  %v318 = vpack.c.b16 %v200, %v198
  %v319 = vpack.c.b16 %v201, %v199
  %v320 = vpack.c.b16 %v204, %v202
  %v321 = vpack.c.b16 %v205, %v203
  %v322 = vpack.c.b16 %v208, %v206
  %v323 = vpack.c.b16 %v209, %v207
  %v324 = vpack.c.b16 %v212, %v210
  %v325 = vpack.c.b16 %v213, %v211
  %v326 = vpack.c.b16 %v216, %v214
  %v327 = vpack.c.b16 %v217, %v215
  %v328 = vpack.c.b16 %v220, %v218
  %v329 = vpack.c.b16 %v221, %v219
  %v330 = vpack.c.b16 %v224, %v222
  %v331 = vpack.c.b16 %v225, %v223
  %v332 = vpack.c.b16 %v228, %v226
  %v333 = vpack.c.b16 %v229, %v227
  %v334 = vpack.c.b16 %v232, %v230
  %v335 = vpack.c.b16 %v233, %v231
  %v336 = vpack.c.b16 %v236, %v234
  %v337 = vpack.c.b16 %v237, %v235
  %v338 = vpack.c.b16 %v240, %v238
  %v339 = vpack.c.b16 %v241, %v239
  %v340 = vpack.c.b16 %v244, %v242
  %v341 = vpack.c.b16 %v245, %v243
  %v342 = vpack.c.b16 %v248, %v246
  %v343 = vpack.c.b16 %v249, %v247
  %v344 = vpack.c.b16 %v252, %v250
  %v345 = vpack.c.b16 %v253, %v251
  %v346 = vpack.c.b16 %v256, %v254
  %v347 = vpack.c.b16 %v257, %v255
  %v348 = vpack.c.b16 %v260, %v258
  %v349 = vpack.c.b16 %v261, %v259
  %v350 = vpack.c.b16 %v264, %v262
  %v351 = vpack.c.b16 %v265, %v263
  %v352 = vpack.c.b16 %v268, %v266
  %v353 = vpack.c.b16 %v269, %v267
  %v354 = vpack.c.b16 %v272, %v270
  %v355 = vpack.c.b16 %v273, %v271
  %v356 = vpack.c.b16 %v276, %v274
  %v357 = vpack.c.b16 %v277, %v275
  %v358 = vpack.c.b16 %v280, %v278
  %v359 = vpack.c.b16 %v281, %v279
  %v360 = vpack.c.b16 %v284, %v282
  %v361 = vpack.c.b16 %v285, %v283
  %v362 = vpack.c.b16 %v288, %v286
  %v363 = vpack.c.b16 %v289, %v287
  %v364 = vpack.c.b16 %v292, %v290
  %v365 = vpack.c.b16 %v293, %v291
  %v366 = vpack.c.b16 %v296, %v294
  %v367 = vpack.c.b16 %v297, %v295
  %v368 = vpack.c.b16 %v300, %v298
  %v369 = vpack.c.b16 %v301, %v299
  %v370 = vpack.c.b16 %v304, %v302
  %v371 = vpack.c.b16 %v305, %v303
  %v372 = vpack.c.b16 %v308, %v306
  %v373 = vpack.c.b16 %v309, %v307
  %v470 = vunpack.c.l.b16 %v79
  %v471 = vunpack.c.l.b16 %v80
  %v472 = vunpack.c.l.b16 %v81
  %v473 = vunpack.c.l.b16 %v82
  %v474 = vunpack.c.l.b16 %v83
  %v475 = vunpack.c.l.b16 %v84
  %v476 = vunpack.c.l.b16 %v85
  %v477 = vunpack.c.l.b16 %v86
  %v478 = vunpack.c.l.b16 %v87
  %v479 = vunpack.c.l.b16 %v88
  %v480 = vunpack.c.l.b16 %v89
  %v481 = vunpack.c.l.b16 %v90
  %v482 = vunpack.c.l.b16 %v91
  %v483 = vunpack.c.l.b16 %v92
  %v484 = vunpack.c.l.b16 %v93
  %v485 = vunpack.c.l.b16 %v94
  %v486 = vunpack.c.l.b16 %v95
  %v487 = vunpack.c.l.b16 %v96
  %v488 = vunpack.c.l.b16 %v97
  %v489 = vunpack.c.l.b16 %v98
  %v490 = vunpack.c.l.b16 %v99
  %v491 = vunpack.c.l.b16 %v100
  %v492 = vunpack.c.l.b16 %v101
  %v493 = vunpack.c.l.b16 %v102
  %v494 = vunpack.c.l.b16 %v103
  %v495 = vunpack.c.l.b16 %v104
  %v496 = vunpack.c.l.b16 %v105
  %v497 = vunpack.c.l.b16 %v106
  %v498 = vunpack.c.l.b16 %v107
  %v499 = vunpack.c.l.b16 %v108
  %v500 = vunpack.c.l.b16 %v109
  %v501 = vunpack.c.l.b16 %v110
  %v502 = vpack.c.b16 %v471, %v470
  %v503 = vpack.c.b16 %v473, %v472
  %v504 = vpack.c.b16 %v475, %v474
  %v505 = vpack.c.b16 %v477, %v476
  %v506 = vpack.c.b16 %v479, %v478
  %v507 = vpack.c.b16 %v481, %v480
  %v508 = vpack.c.b16 %v483, %v482
  %v509 = vpack.c.b16 %v485, %v484
  %v510 = vpack.c.b16 %v487, %v486
  %v511 = vpack.c.b16 %v489, %v488
  %v512 = vpack.c.b16 %v491, %v490
  %v513 = vpack.c.b16 %v493, %v492
  %v514 = vpack.c.b16 %v495, %v494
  %v515 = vpack.c.b16 %v497, %v496
  %v516 = vpack.c.b16 %v499, %v498
  %v517 = vpack.c.b16 %v501, %v500
  %534 = vmatprep.subr.bf16.mxu0 0
  %535 = vmatpush1.bf16.msra.mxu0 %v509
  %536 = vmatprep.subr.bf16.mxu0 0
  %537 = vmatpush1.bf16.msra.mxu0 %v508
  %538 = vmatprep.subr.bf16.mxu0 0
  %539 = vmatpush1.bf16.msra.mxu0 %v507
  %540 = vmatprep.subr.bf16.mxu0 0
  %541 = vmatpush1.bf16.msra.mxu0 %v506
  %542 = vmatprep.subr.bf16.mxu0 0
  %543 = vmatpush1.bf16.msra.mxu0 %v505
  %544 = vmatprep.subr.bf16.mxu0 0
  %545 = vmatpush1.bf16.msra.mxu0 %v504
  %546 = vmatprep.subr.bf16.mxu0 0
  %547 = vmatpush1.bf16.msra.mxu0 %v503
  %548 = vmatprep.subr.bf16.mxu0 0
  %549 = vmatpush1.bf16.msra.mxu0 %v502
  %550 = vmatprep.subr.bf16.mxu0 0
  %551 = vmatpush2.bf16.msra.mxu0 %v517
  %552 = vmatprep.subr.bf16.mxu0 0
  %553 = vmatpush2.bf16.msra.mxu0 %v516
  %554 = vmatprep.subr.bf16.mxu0 0
  %555 = vmatpush2.bf16.msra.mxu0 %v515
  %556 = vmatprep.subr.bf16.mxu0 0
  %557 = vmatpush2.bf16.msra.mxu0 %v514
  %558 = vmatprep.subr.bf16.mxu0 0
  %559 = vmatpush2.bf16.msra.mxu0 %v513
  %560 = vmatprep.subr.bf16.mxu0 0
  %561 = vmatpush2.bf16.msra.mxu0 %v512
  %562 = vmatprep.subr.bf16.mxu0 0
  %563 = vmatpush2.bf16.msra.mxu0 %v511
  %564 = vmatprep.subr.bf16.mxu0 0
  %565 = vmatpush2.bf16.msra.mxu0 %v510
  %566 = vmatprep.mubr.bf16.mxu0 %v311
  %567 = vmatmul.mubr.bf16.gmra.mxu0 %v310
  %v568 = vpop.f32.mrf.mxu0
  %v569 = vadd.f32 %v116, %v568
  %v570 = vpop.f32.mrf.mxu0
  %v571 = vpop.f32.mrf.mxu0
  %v572 = vadd.f32 %v116, %v571
  %v573 = vpop.f32.mrf.mxu0
  %574 = vmatprep.mubr.bf16.mxu0 %v313
  %575 = vmatmul.mubr.bf16.gmra.mxu0 %v312
  %v576 = vpop.f32.mrf.mxu0
  %v577 = vadd.f32 %v116, %v576
  %v578 = vpop.f32.mrf.mxu0
  %v579 = vpop.f32.mrf.mxu0
  %v580 = vadd.f32 %v116, %v579
  %v581 = vpop.f32.mrf.mxu0
  %582 = vmatprep.mubr.bf16.mxu0 %v315
  %583 = vmatmul.mubr.bf16.gmra.mxu0 %v314
  %v584 = vpop.f32.mrf.mxu0
  %v585 = vadd.f32 %v116, %v584
  %v586 = vpop.f32.mrf.mxu0
  %v587 = vpop.f32.mrf.mxu0
  %v588 = vadd.f32 %v116, %v587
  %v589 = vpop.f32.mrf.mxu0
  %590 = vmatprep.mubr.bf16.mxu0 %v317
  %591 = vmatmul.mubr.bf16.gmra.mxu0 %v316
  %v592 = vpop.f32.mrf.mxu0
  %v593 = vadd.f32 %v116, %v592
  %v594 = vpop.f32.mrf.mxu0
  %v595 = vpop.f32.mrf.mxu0
  %v596 = vadd.f32 %v116, %v595
  %v597 = vpop.f32.mrf.mxu0
  %598 = vmatprep.mubr.bf16.mxu0 %v319
  %599 = vmatmul.mubr.bf16.gmra.mxu0 %v318
  %v600 = vpop.f32.mrf.mxu0
  %v601 = vadd.f32 %v116, %v600
  %v602 = vpop.f32.mrf.mxu0
  %v603 = vpop.f32.mrf.mxu0
  %v604 = vadd.f32 %v116, %v603
  %v605 = vpop.f32.mrf.mxu0
  %606 = vmatprep.mubr.bf16.mxu0 %v321
  %607 = vmatmul.mubr.bf16.gmra.mxu0 %v320
  %v608 = vpop.f32.mrf.mxu0
  %v609 = vadd.f32 %v116, %v608
  %v610 = vpop.f32.mrf.mxu0
  %v611 = vpop.f32.mrf.mxu0
  %v612 = vadd.f32 %v116, %v611
  %v613 = vpop.f32.mrf.mxu0
  %614 = vmatprep.mubr.bf16.mxu0 %v323
  %615 = vmatmul.mubr.bf16.gmra.mxu0 %v322
  %v616 = vpop.f32.mrf.mxu0
  %v617 = vadd.f32 %v116, %v616
  %v618 = vpop.f32.mrf.mxu0
  %v619 = vpop.f32.mrf.mxu0
  %v620 = vadd.f32 %v116, %v619
  %v621 = vpop.f32.mrf.mxu0
  %622 = vmatprep.mubr.bf16.mxu0 %v325
  %623 = vmatmul.mubr.bf16.gmra.mxu0 %v324
  %v624 = vpop.f32.mrf.mxu0
  %v625 = vadd.f32 %v116, %v624
  %v626 = vpop.f32.mrf.mxu0
  %v627 = vpop.f32.mrf.mxu0
  %v628 = vadd.f32 %v116, %v627
  %v629 = vpop.f32.mrf.mxu0
  %630 = vmatprep.mubr.bf16.mxu0 %v327
  %631 = vmatmul.mubr.bf16.gmra.mxu0 %v326
  %v632 = vpop.f32.mrf.mxu0
  %v633 = vadd.f32 %v116, %v632
  %v634 = vpop.f32.mrf.mxu0
  %v635 = vpop.f32.mrf.mxu0
  %v636 = vadd.f32 %v116, %v635
  %v637 = vpop.f32.mrf.mxu0
  %638 = vmatprep.mubr.bf16.mxu0 %v329
  %639 = vmatmul.mubr.bf16.gmra.mxu0 %v328
  %v640 = vpop.f32.mrf.mxu0
  %v641 = vadd.f32 %v116, %v640
  %v642 = vpop.f32.mrf.mxu0
  %v643 = vpop.f32.mrf.mxu0
  %v644 = vadd.f32 %v116, %v643
  %v645 = vpop.f32.mrf.mxu0
  %646 = vmatprep.mubr.bf16.mxu0 %v331
  %647 = vmatmul.mubr.bf16.gmra.mxu0 %v330
  %v648 = vpop.f32.mrf.mxu0
  %v649 = vadd.f32 %v116, %v648
  %v650 = vpop.f32.mrf.mxu0
  %v651 = vpop.f32.mrf.mxu0
  %v652 = vadd.f32 %v116, %v651
  %v653 = vpop.f32.mrf.mxu0
  %654 = vmatprep.mubr.bf16.mxu0 %v333
  %655 = vmatmul.mubr.bf16.gmra.mxu0 %v332
  %v656 = vpop.f32.mrf.mxu0
  %v657 = vadd.f32 %v116, %v656
  %v658 = vpop.f32.mrf.mxu0
  %v659 = vpop.f32.mrf.mxu0
  %v660 = vadd.f32 %v116, %v659
  %v661 = vpop.f32.mrf.mxu0
  %662 = vmatprep.mubr.bf16.mxu0 %v335
  %663 = vmatmul.mubr.bf16.gmra.mxu0 %v334
  %v664 = vpop.f32.mrf.mxu0
  %v665 = vadd.f32 %v116, %v664
  %v666 = vpop.f32.mrf.mxu0
  %v667 = vpop.f32.mrf.mxu0
  %v668 = vadd.f32 %v116, %v667
  %v669 = vpop.f32.mrf.mxu0
  %670 = vmatprep.mubr.bf16.mxu0 %v337
  %671 = vmatmul.mubr.bf16.gmra.mxu0 %v336
  %v672 = vpop.f32.mrf.mxu0
  %v673 = vadd.f32 %v116, %v672
  %v674 = vpop.f32.mrf.mxu0
  %v675 = vpop.f32.mrf.mxu0
  %v676 = vadd.f32 %v116, %v675
  %v677 = vpop.f32.mrf.mxu0
  %678 = vmatprep.mubr.bf16.mxu0 %v339
  %679 = vmatmul.mubr.bf16.gmra.mxu0 %v338
  %v680 = vpop.f32.mrf.mxu0
  %v681 = vadd.f32 %v116, %v680
  %v682 = vpop.f32.mrf.mxu0
  %v683 = vpop.f32.mrf.mxu0
  %v684 = vadd.f32 %v116, %v683
  %v685 = vpop.f32.mrf.mxu0
  %686 = vmatprep.mubr.bf16.mxu0 %v341
  %687 = vmatmul.mubr.bf16.gmra.mxu0 %v340
  %v688 = vpop.f32.mrf.mxu0
  %v689 = vadd.f32 %v116, %v688
  %v690 = vpop.f32.mrf.mxu0
  %v691 = vpop.f32.mrf.mxu0
  %v692 = vadd.f32 %v116, %v691
  %v693 = vpop.f32.mrf.mxu0
  %694 = vmatprep.mubr.bf16.mxu0 %v343
  %695 = vmatmul.mubr.bf16.gmra.mxu0 %v342
  %v696 = vpop.f32.mrf.mxu0
  %v697 = vadd.f32 %v116, %v696
  %v698 = vpop.f32.mrf.mxu0
  %v699 = vpop.f32.mrf.mxu0
  %v700 = vadd.f32 %v116, %v699
  %v701 = vpop.f32.mrf.mxu0
  %702 = vmatprep.mubr.bf16.mxu0 %v345
  %703 = vmatmul.mubr.bf16.gmra.mxu0 %v344
  %v704 = vpop.f32.mrf.mxu0
  %v705 = vadd.f32 %v116, %v704
  %v706 = vpop.f32.mrf.mxu0
  %v707 = vpop.f32.mrf.mxu0
  %v708 = vadd.f32 %v116, %v707
  %v709 = vpop.f32.mrf.mxu0
  %710 = vmatprep.mubr.bf16.mxu0 %v347
  %711 = vmatmul.mubr.bf16.gmra.mxu0 %v346
  %v712 = vpop.f32.mrf.mxu0
  %v713 = vadd.f32 %v116, %v712
  %v714 = vpop.f32.mrf.mxu0
  %v715 = vpop.f32.mrf.mxu0
  %v716 = vadd.f32 %v116, %v715
  %v717 = vpop.f32.mrf.mxu0
  %718 = vmatprep.mubr.bf16.mxu0 %v349
  %719 = vmatmul.mubr.bf16.gmra.mxu0 %v348
  %v720 = vpop.f32.mrf.mxu0
  %v721 = vadd.f32 %v116, %v720
  %v722 = vpop.f32.mrf.mxu0
  %v723 = vpop.f32.mrf.mxu0
  %v724 = vadd.f32 %v116, %v723
  %v725 = vpop.f32.mrf.mxu0
  %726 = vmatprep.mubr.bf16.mxu0 %v351
  %727 = vmatmul.mubr.bf16.gmra.mxu0 %v350
  %v728 = vpop.f32.mrf.mxu0
  %v729 = vadd.f32 %v116, %v728
  %v730 = vpop.f32.mrf.mxu0
  %v731 = vpop.f32.mrf.mxu0
  %v732 = vadd.f32 %v116, %v731
  %v733 = vpop.f32.mrf.mxu0
  %734 = vmatprep.mubr.bf16.mxu0 %v353
  %735 = vmatmul.mubr.bf16.gmra.mxu0 %v352
  %v736 = vpop.f32.mrf.mxu0
  %v737 = vadd.f32 %v116, %v736
  %v738 = vpop.f32.mrf.mxu0
  %v739 = vpop.f32.mrf.mxu0
  %v740 = vadd.f32 %v116, %v739
  %v741 = vpop.f32.mrf.mxu0
  %742 = vmatprep.mubr.bf16.mxu0 %v355
  %743 = vmatmul.mubr.bf16.gmra.mxu0 %v354
  %v744 = vpop.f32.mrf.mxu0
  %v745 = vadd.f32 %v116, %v744
  %v746 = vpop.f32.mrf.mxu0
  %v747 = vpop.f32.mrf.mxu0
  %v748 = vadd.f32 %v116, %v747
  %v749 = vpop.f32.mrf.mxu0
  %750 = vmatprep.mubr.bf16.mxu0 %v357
  %751 = vmatmul.mubr.bf16.gmra.mxu0 %v356
  %v752 = vpop.f32.mrf.mxu0
  %v753 = vadd.f32 %v116, %v752
  %v754 = vpop.f32.mrf.mxu0
  %v755 = vpop.f32.mrf.mxu0
  %v756 = vadd.f32 %v116, %v755
  %v757 = vpop.f32.mrf.mxu0
  %758 = vmatprep.mubr.bf16.mxu0 %v359
  %759 = vmatmul.mubr.bf16.gmra.mxu0 %v358
  %v760 = vpop.f32.mrf.mxu0
  %v761 = vadd.f32 %v116, %v760
  %v762 = vpop.f32.mrf.mxu0
  %v763 = vpop.f32.mrf.mxu0
  %v764 = vadd.f32 %v116, %v763
  %v765 = vpop.f32.mrf.mxu0
  %766 = vmatprep.mubr.bf16.mxu0 %v361
  %767 = vmatmul.mubr.bf16.gmra.mxu0 %v360
  %v768 = vpop.f32.mrf.mxu0
  %v769 = vadd.f32 %v116, %v768
  %v770 = vpop.f32.mrf.mxu0
  %v771 = vpop.f32.mrf.mxu0
  %v772 = vadd.f32 %v116, %v771
  %v773 = vpop.f32.mrf.mxu0
  %774 = vmatprep.mubr.bf16.mxu0 %v363
  %775 = vmatmul.mubr.bf16.gmra.mxu0 %v362
  %v776 = vpop.f32.mrf.mxu0
  %v777 = vadd.f32 %v116, %v776
  %v778 = vpop.f32.mrf.mxu0
  %v779 = vpop.f32.mrf.mxu0
  %v780 = vadd.f32 %v116, %v779
  %v781 = vpop.f32.mrf.mxu0
  %782 = vmatprep.mubr.bf16.mxu0 %v365
  %783 = vmatmul.mubr.bf16.gmra.mxu0 %v364
  %v784 = vpop.f32.mrf.mxu0
  %v785 = vadd.f32 %v116, %v784
  %v786 = vpop.f32.mrf.mxu0
  %v787 = vpop.f32.mrf.mxu0
  %v788 = vadd.f32 %v116, %v787
  %v789 = vpop.f32.mrf.mxu0
  %790 = vmatprep.mubr.bf16.mxu0 %v367
  %791 = vmatmul.mubr.bf16.gmra.mxu0 %v366
  %v792 = vpop.f32.mrf.mxu0
  %v793 = vadd.f32 %v116, %v792
  %v794 = vpop.f32.mrf.mxu0
  %v795 = vpop.f32.mrf.mxu0
  %v796 = vadd.f32 %v116, %v795
  %v797 = vpop.f32.mrf.mxu0
  %798 = vmatprep.mubr.bf16.mxu0 %v369
  %799 = vmatmul.mubr.bf16.gmra.mxu0 %v368
  %v800 = vpop.f32.mrf.mxu0
  %v801 = vadd.f32 %v116, %v800
  %v802 = vpop.f32.mrf.mxu0
  %v803 = vpop.f32.mrf.mxu0
  %v804 = vadd.f32 %v116, %v803
  %v805 = vpop.f32.mrf.mxu0
  %806 = vmatprep.mubr.bf16.mxu0 %v371
  %807 = vmatmul.mubr.bf16.gmra.mxu0 %v370
  %v808 = vpop.f32.mrf.mxu0
  %v809 = vadd.f32 %v116, %v808
  %v810 = vpop.f32.mrf.mxu0
  %v811 = vpop.f32.mrf.mxu0
  %v812 = vadd.f32 %v116, %v811
  %v813 = vpop.f32.mrf.mxu0
  %814 = vmatprep.mubr.bf16.mxu0 %v373
  %815 = vmatmul.mubr.bf16.gmra.mxu0 %v372
  %v816 = vpop.f32.mrf.mxu0
  %v817 = vadd.f32 %v116, %v816
  %v818 = vpop.f32.mrf.mxu0
  %v819 = vpop.f32.mrf.mxu0
  %v820 = vadd.f32 %v116, %v819
  %v821 = vpop.f32.mrf.mxu0
  %822 = vdwg.mxu0
  %v823 = vmax.f32 %v569, 0.0
  %v824 = vmax.f32 %v572, 0.0
  %v825 = vmax.f32 %v577, 0.0
  %v826 = vmax.f32 %v580, 0.0
  %v827 = vmax.f32 %v585, 0.0
  %v828 = vmax.f32 %v588, 0.0
  %v829 = vmax.f32 %v593, 0.0
  %v830 = vmax.f32 %v596, 0.0
  %v831 = vmax.f32 %v601, 0.0
  %v832 = vmax.f32 %v604, 0.0
  %v833 = vmax.f32 %v609, 0.0
  %v834 = vmax.f32 %v612, 0.0
  %v835 = vmax.f32 %v617, 0.0
  %v836 = vmax.f32 %v620, 0.0
  %v837 = vmax.f32 %v625, 0.0
  %v838 = vmax.f32 %v628, 0.0
  %v839 = vmax.f32 %v633, 0.0
  %v840 = vmax.f32 %v636, 0.0
  %v841 = vmax.f32 %v641, 0.0
  %v842 = vmax.f32 %v644, 0.0
  %v843 = vmax.f32 %v649, 0.0
  %v844 = vmax.f32 %v652, 0.0
  %v845 = vmax.f32 %v657, 0.0
  %v846 = vmax.f32 %v660, 0.0
  %v847 = vmax.f32 %v665, 0.0
  %v848 = vmax.f32 %v668, 0.0
  %v849 = vmax.f32 %v673, 0.0
  %v850 = vmax.f32 %v676, 0.0
  %v851 = vmax.f32 %v681, 0.0
  %v852 = vmax.f32 %v684, 0.0
  %v853 = vmax.f32 %v689, 0.0
  %v854 = vmax.f32 %v692, 0.0
  %v855 = vmax.f32 %v697, 0.0
  %v856 = vmax.f32 %v700, 0.0
  %v857 = vmax.f32 %v705, 0.0
  %v858 = vmax.f32 %v708, 0.0
  %v859 = vmax.f32 %v713, 0.0
  %v860 = vmax.f32 %v716, 0.0
  %v861 = vmax.f32 %v721, 0.0
  %v862 = vmax.f32 %v724, 0.0
  %v863 = vmax.f32 %v729, 0.0
  %v864 = vmax.f32 %v732, 0.0
  %v865 = vmax.f32 %v737, 0.0
  %v866 = vmax.f32 %v740, 0.0
  %v867 = vmax.f32 %v745, 0.0
  %v868 = vmax.f32 %v748, 0.0
  %v869 = vmax.f32 %v753, 0.0
  %v870 = vmax.f32 %v756, 0.0
  %v871 = vmax.f32 %v761, 0.0
  %v872 = vmax.f32 %v764, 0.0
  %v873 = vmax.f32 %v769, 0.0
  %v874 = vmax.f32 %v772, 0.0
  %v875 = vmax.f32 %v777, 0.0
  %v876 = vmax.f32 %v780, 0.0
  %v877 = vmax.f32 %v785, 0.0
  %v878 = vmax.f32 %v788, 0.0
  %v879 = vmax.f32 %v793, 0.0
  %v880 = vmax.f32 %v796, 0.0
  %v881 = vmax.f32 %v801, 0.0
  %v882 = vmax.f32 %v804, 0.0
  %v883 = vmax.f32 %v809, 0.0
  %v884 = vmax.f32 %v812, 0.0
  %v885 = vmax.f32 %v817, 0.0
  %v886 = vmax.f32 %v820, 0.0
  %887 = vst [vmem:[%s3] sm:$0xff] %v823
  %888 = vst [vmem:[%s3 + $0x8] sm:$0xff] %v824
  %889 = vst [vmem:[%s3 + $0x10] sm:$0xff] %v825
  %890 = vst [vmem:[%s3 + $0x18] sm:$0xff] %v826
  %891 = vst [vmem:[%s3 + $0x20] sm:$0xff] %v827
  %892 = vst [vmem:[%s3 + $0x28] sm:$0xff] %v828
  %893 = vst [vmem:[%s3 + $0x30] sm:$0xff] %v829
  %894 = vst [vmem:[%s3 + $0x38] sm:$0xff] %v830
  %895 = vst [vmem:[%s3 + $0x40] sm:$0xff] %v831
  %896 = vst [vmem:[%s3 + $0x48] sm:$0xff] %v832
  %897 = vst [vmem:[%s3 + $0x50] sm:$0xff] %v833
  %898 = vst [vmem:[%s3 + $0x58] sm:$0xff] %v834
  %899 = vst [vmem:[%s3 + $0x60] sm:$0xff] %v835
  %900 = vst [vmem:[%s3 + $0x68] sm:$0xff] %v836
  %901 = vst [vmem:[%s3 + $0x70] sm:$0xff] %v837
  %902 = vst [vmem:[%s3 + $0x78] sm:$0xff] %v838
  %903 = vst [vmem:[%s3 + $0x80] sm:$0xff] %v839
  %904 = vst [vmem:[%s3 + $0x88] sm:$0xff] %v840
  %905 = vst [vmem:[%s3 + $0x90] sm:$0xff] %v841
  %906 = vst [vmem:[%s3 + $0x98] sm:$0xff] %v842
  %907 = vst [vmem:[%s3 + $0xa0] sm:$0xff] %v843
  %908 = vst [vmem:[%s3 + $0xa8] sm:$0xff] %v844
  %909 = vst [vmem:[%s3 + $0xb0] sm:$0xff] %v845
  %910 = vst [vmem:[%s3 + $0xb8] sm:$0xff] %v846
  %911 = vst [vmem:[%s3 + $0xc0] sm:$0xff] %v847
  %912 = vst [vmem:[%s3 + $0xc8] sm:$0xff] %v848
  %913 = vst [vmem:[%s3 + $0xd0] sm:$0xff] %v849
  %914 = vst [vmem:[%s3 + $0xd8] sm:$0xff] %v850
  %915 = vst [vmem:[%s3 + $0xe0] sm:$0xff] %v851
  %916 = vst [vmem:[%s3 + $0xe8] sm:$0xff] %v852
  %917 = vst [vmem:[%s3 + $0xf0] sm:$0xff] %v853
  %918 = vst [vmem:[%s3 + $0xf8] sm:$0xff] %v854
  %919 = vst [vmem:[%s3 + $0x100] sm:$0xff] %v855
  %920 = vst [vmem:[%s3 + $0x108] sm:$0xff] %v856
  %921 = vst [vmem:[%s3 + $0x110] sm:$0xff] %v857
  %922 = vst [vmem:[%s3 + $0x118] sm:$0xff] %v858
  %923 = vst [vmem:[%s3 + $0x120] sm:$0xff] %v859
  %924 = vst [vmem:[%s3 + $0x128] sm:$0xff] %v860
  %925 = vst [vmem:[%s3 + $0x130] sm:$0xff] %v861
  %926 = vst [vmem:[%s3 + $0x138] sm:$0xff] %v862
  %927 = vst [vmem:[%s3 + $0x140] sm:$0xff] %v863
  %928 = vst [vmem:[%s3 + $0x148] sm:$0xff] %v864
  %929 = vst [vmem:[%s3 + $0x150] sm:$0xff] %v865
  %930 = vst [vmem:[%s3 + $0x158] sm:$0xff] %v866
  %931 = vst [vmem:[%s3 + $0x160] sm:$0xff] %v867
  %932 = vst [vmem:[%s3 + $0x168] sm:$0xff] %v868
  %933 = vst [vmem:[%s3 + $0x170] sm:$0xff] %v869
  %934 = vst [vmem:[%s3 + $0x178] sm:$0xff] %v870
  %935 = vst [vmem:[%s3 + $0x180] sm:$0xff] %v871
  %936 = vst [vmem:[%s3 + $0x188] sm:$0xff] %v872
  %937 = vst [vmem:[%s3 + $0x190] sm:$0xff] %v873
  %938 = vst [vmem:[%s3 + $0x198] sm:$0xff] %v874
  %939 = vst [vmem:[%s3 + $0x1a0] sm:$0xff] %v875
  %940 = vst [vmem:[%s3 + $0x1a8] sm:$0xff] %v876
  %941 = vst [vmem:[%s3 + $0x1b0] sm:$0xff] %v877
  %942 = vst [vmem:[%s3 + $0x1b8] sm:$0xff] %v878
  %943 = vst [vmem:[%s3 + $0x1c0] sm:$0xff] %v879
  %944 = vst [vmem:[%s3 + $0x1c8] sm:$0xff] %v880
  %945 = vst [vmem:[%s3 + $0x1d0] sm:$0xff] %v881
  %946 = vst [vmem:[%s3 + $0x1d8] sm:$0xff] %v882
  %947 = vst [vmem:[%s3 + $0x1e0] sm:$0xff] %v883
  %948 = vst [vmem:[%s3 + $0x1e8] sm:$0xff] %v884
  %949 = vst [vmem:[%s3 + $0x1f0] sm:$0xff] %v885
  %950 = vst [vmem:[%s3 + $0x1f8] sm:$0xff] %v886
  // Predicated region
  $region14: #{_lambda_.12} parent=0 // pred_check
    _
  $region15: #{_lambda_.12} parent=0 // pred_check_branch
    %952 = sbr.rel (0) target = $region17
  $region16: #{_lambda_.12} parent=0 // pred_region
    _
  $region17: #{_lambda_.12} parent=0 // pred_fallthru
    _
  // Predicated region
  $region18: #{_lambda_.12} parent=0 // pred_check
    _
  $region19: #{_lambda_.12} parent=0 // pred_check_branch
    %954 = sbr.rel (0) target = $region21
  $region20: #{_lambda_.12} parent=0 // pred_region
    _
  $region21: #{_lambda_.12} parent=0 // pred_fallthru
    _

// kernel: _lambda_.13
$region0: #{_lambda_.13}
  #allocation0 [shape = 'u32[]', space=smem, size = 0x4, offset = 0x4, fixed_abs, tag = 'smem constant byte address 0x4 - core index']
  #allocation1 [shape = 'u32[144,128]{1,0:T(1,128)}', space=vmem, size = 0x12000, scoped, tag = 'internal scratch']
  %s0 = inlined_call_operand.vmem [shape: bf16[2048,128], index: 0, kind: input, shape index: {}]
  %s1 = inlined_call_operand.vmem [shape: bf16[128,128], index: 1, kind: input, shape index: {}]
  %s2 = inlined_call_operand.vmem [shape: f32[1,128], index: 2, kind: input, shape index: {}]
  %s3 = inlined_call_operand.vmem [shape: f32[2048,128], index: 3, kind: output, shape index: {}]
  %s4 = sld [smem:[#allocation0]]
  $region45: #{_lambda_.13} parent=0
    _
  %s6 = ssub.s32 1, %s4
  %s7 = scalar_select 0, %s6, %s4
  loop: start=0, step=1, limit=6
  $region2: #{_lambda_.13} parent=0 // loop_pre_header
    _
  $region3: #{_lambda_.13} parent=0 // loop_header
    %s9 = sphi 0, %s13
    %p10 = scmp.ge.s32.totalorder %s9, 6
    %s16 = sphi 0, %s28
    %s17 = sphi 0, %s24
    %s18 = sphi 0, %s16
    %s19 = sphi 0, %s17
    %s20 = sphi 0, %s18
    %s21 = sphi 0, %s19
    %s31 = sphi 0, %s33
    %s34 = sphi 0, %s31
    %s35 = sphi 0, %s34
    %s51 = sphi 0, %s35
    %s57 = sphi 0, %s59
    %s60 = sphi 0, %s57
    %s61 = sphi 0, %s60
    %s77 = sphi 0, %s61
    %s83 = sphi 0, %s85
    %s86 = sphi 0, %s83
    %s87 = sphi 0, %s86
    %s103 = sphi 0, %s87
    %s111 = sphi 0, %s113
    %s114 = sphi 0, %s111
    %s115 = sphi 0, %s114
    %s131 = sphi 0, %s115
  $region4: #{_lambda_.13} parent=0 // loop_header_branch
    %12 = sbr.rel (%p10) target = $region8
  $region5: #{_lambda_.13} parent=0 // loop_body
    %s14 = ssub.s32 %s9, 1
    %s15 = ssub.s32 %s9, 2
    %s22 = sadd.s32 1, %s17
    %p23 = scmp.ge.s32.totalorder %s22, 1
    %s24 = scalar_select %p23, 0, %s22
    %s25 = sadd.s32 1, %s16
    %s26 = scalar_select %p23, %s25, %s16
    %p27 = scmp.ge.s32.totalorder %s26, 4
    %s28 = scalar_select %p27, 0, %s26
    %s29 = ssub.s32 %s16, %s28
    %p30 = scmp.eq.s32.totalorder %s29, 0
    %s32 = sadd.s32 %s31, 1
    %s33 = scalar_select %p30, %s31, %s32
    %p36 = pneg %p30
    %p37 = scmp.eq.s32.totalorder %s9, 3
    %p38 = por %p36, %p37
    %p39 = scmp.ne.s32.totalorder %s31, %s34
    %p40 = scmp.eq.s32.totalorder %s9, 0
    %p41 = por %p39, %p40
    %p42 = scmp.ne.s32.totalorder %s31, %s34
    %p43 = scmp.eq.s32.totalorder %s14, 3
    %p44 = por %p42, %p43
    %p45 = scmp.ne.s32.totalorder %s34, %s35
    %p46 = scmp.eq.s32.totalorder %s14, 0
    %p47 = por %p45, %p46
    %p48 = scmp.ne.s32.totalorder %s34, %s35
    %p49 = scmp.eq.s32.totalorder %s15, 3
    %p50 = por %p48, %p49
    %p52 = scmp.ne.s32.totalorder %s35, %s51
    %p53 = scmp.eq.s32.totalorder %s15, 0
    %p54 = por %p52, %p53
    %s55 = ssub.s32 %s17, %s24
    %p56 = scmp.eq.s32.totalorder %s55, 0
    %s58 = sadd.s32 %s57, 1
    %s59 = scalar_select %p56, %s57, %s58
    %p62 = pneg %p56
    %p63 = scmp.eq.s32.totalorder %s9, 3
    %p64 = por %p62, %p63
    %p65 = scmp.ne.s32.totalorder %s57, %s60
    %p66 = scmp.eq.s32.totalorder %s9, 0
    %p67 = por %p65, %p66
    %p68 = scmp.ne.s32.totalorder %s57, %s60
    %p69 = scmp.eq.s32.totalorder %s14, 3
    %p70 = por %p68, %p69
    %p71 = scmp.ne.s32.totalorder %s60, %s61
    %p72 = scmp.eq.s32.totalorder %s14, 0
    %p73 = por %p71, %p72
    %p74 = scmp.ne.s32.totalorder %s60, %s61
    %p75 = scmp.eq.s32.totalorder %s15, 3
    %p76 = por %p74, %p75
    %p78 = scmp.ne.s32.totalorder %s61, %s77
    %p79 = scmp.eq.s32.totalorder %s15, 0
    %p80 = por %p78, %p79
    %s81 = ssub.s32 %s17, %s24
    %p82 = scmp.eq.s32.totalorder %s81, 0
    %s84 = sadd.s32 %s83, 1
    %s85 = scalar_select %p82, %s83, %s84
    %p88 = pneg %p82
    %p89 = scmp.eq.s32.totalorder %s9, 3
    %p90 = por %p88, %p89
    %p91 = scmp.ne.s32.totalorder %s83, %s86
    %p92 = scmp.eq.s32.totalorder %s9, 0
    %p93 = por %p91, %p92
    %p94 = scmp.ne.s32.totalorder %s83, %s86
    %p95 = scmp.eq.s32.totalorder %s14, 3
    %p96 = por %p94, %p95
    %p97 = scmp.ne.s32.totalorder %s86, %s87
    %p98 = scmp.eq.s32.totalorder %s14, 0
    %p99 = por %p97, %p98
    %p100 = scmp.ne.s32.totalorder %s86, %s87
    %p101 = scmp.eq.s32.totalorder %s15, 3
    %p102 = por %p100, %p101
    %p104 = scmp.ne.s32.totalorder %s87, %s103
    %p105 = scmp.eq.s32.totalorder %s15, 0
    %p106 = por %p104, %p105
    %s107 = ssub.s32 %s16, %s28
    %s108 = ssub.s32 %s17, %s24
    %s109 = sor.u32 %s107, %s108
    %p110 = scmp.eq.s32.totalorder %s109, 0
    %s112 = sadd.s32 %s111, 1
    %s113 = scalar_select %p110, %s111, %s112
    %p116 = pneg %p110
    %p117 = scmp.eq.s32.totalorder %s9, 3
    %p118 = por %p116, %p117
    %p119 = scmp.ne.s32.totalorder %s111, %s114
    %p120 = scmp.eq.s32.totalorder %s9, 0
    %p121 = por %p119, %p120
    %p122 = scmp.ne.s32.totalorder %s111, %s114
    %p123 = scmp.eq.s32.totalorder %s14, 3
    %p124 = por %p122, %p123
    %p125 = scmp.ne.s32.totalorder %s114, %s115
    %p126 = scmp.eq.s32.totalorder %s14, 0
    %p127 = por %p125, %p126
    %p128 = scmp.ne.s32.totalorder %s114, %s115
    %p129 = scmp.eq.s32.totalorder %s15, 3
    %p130 = por %p128, %p129
    %p132 = scmp.ne.s32.totalorder %s115, %s131
    %p133 = scmp.eq.s32.totalorder %s15, 0
    %p134 = por %p132, %p133
    %p135 = scmp.le.s32.totalorder 1, %s9
    %p136 = scmp.lt.s32.totalorder %s9, 5
    %p137 = pnand %p135, %p136
    %p138 = pneg %p137
    // Predicated region
    $region9: #{_lambda_.13} parent=5 // pred_check
      _
    $region10: #{_lambda_.13} parent=5 // pred_check_branch
      %140 = sbr.rel (%p137) target = $region12
    $region11: #{_lambda_.13} parent=5 // pred_region
      %s141 = ssub.s32 %s9, 1
      // Predicated region
      $region13: #{_lambda_.13} parent=11 // pred_check
        %p142 = pneg %p73
      $region14: #{_lambda_.13} parent=11 // pred_check_branch
        %144 = sbr.rel (%p142) target = $region16
      $region15: #{_lambda_.13} parent=11 // pred_region
        %p145 = scmp.lt.s32.totalorder %s19, 0
        %s146 = scalar_select %p145, %s19, 0
        %s147 = smul.addr %s146, 4
        %s148 = scalar_lea.vmem %s1, %s147
      $region16: #{_lambda_.13} parent=11 // pred_fallthru
        _
      // Predicated region
      $region17: #{_lambda_.13} parent=11 // pred_check
        %p149 = pneg %p99
      $region18: #{_lambda_.13} parent=11 // pred_check_branch
        %151 = sbr.rel (%p149) target = $region20
      $region19: #{_lambda_.13} parent=11 // pred_region
        %p152 = scmp.lt.s32.totalorder %s19, 0
        %s153 = scalar_select %p152, %s19, 0
        %s154 = scalar_lea.vmem %s2, %s153
      $region20: #{_lambda_.13} parent=11 // pred_fallthru
        _
    $region12: #{_lambda_.13} parent=5 // pred_fallthru
      _
    %p155 = scmp.lt.s32.totalorder %s9, 4
    // Predicated region
    $region21: #{_lambda_.13} parent=5 // pred_check
      %p156 = pneg %p155
    $region22: #{_lambda_.13} parent=5 // pred_check_branch
      %158 = sbr.rel (%p156) target = $region24
    $region23: #{_lambda_.13} parent=5 // pred_region
      // Predicated region
      $region25: #{_lambda_.13} parent=23 // pred_check
        %p159 = pneg %p41
      $region26: #{_lambda_.13} parent=23 // pred_check_branch
        %161 = sbr.rel (%p159) target = $region28
      $region27: #{_lambda_.13} parent=23 // pred_region
        %s162 = smul.u32 64, %s16
        %p163 = scmp.lt.s32.totalorder %s162, 255
        %s164 = scalar_select %p163, %s162, 255
        %s165 = smul.addr %s164, 4
        %s166 = scalar_lea.vmem %s0, %s165
        %s167 = smul.u32 64, %s16
      $region28: #{_lambda_.13} parent=23 // pred_fallthru
        _
    $region24: #{_lambda_.13} parent=5 // pred_fallthru
      _
    %p168 = scmp.le.s32.totalorder 1, %s9
    %p169 = scmp.lt.s32.totalorder %s9, 5
    %p170 = pnand %p168, %p169
    %p171 = pneg %p170
    // Predicated region
    $region29: #{_lambda_.13} parent=5 // pred_check
      _
    $region30: #{_lambda_.13} parent=5 // pred_check_branch
      %173 = sbr.rel (%p170) target = $region32
    $region31: #{_lambda_.13} parent=5 // pred_region
      %s174 = ssub.s32 %s9, 1
      %s175 = smul.u32 64, %s18
      %p176 = scmp.lt.s32.totalorder %s175, 255
      %s177 = scalar_select %p176, %s175, 255
      %s178 = smul.addr %s177, 4
      %s179 = scalar_lea.vmem %s0, %s178
      %p180 = pneg %p47
      %p181 = pneg %p44
      %p182 = scmp.lt.s32.totalorder %s19, 0
      %s183 = scalar_select %p182, %s19, 0
      %s184 = smul.addr %s183, 4
      %s185 = scalar_lea.vmem %s1, %s184
      %p186 = pneg %p73
      %p187 = pneg %p70
      %p188 = scmp.lt.s32.totalorder %s19, 0
      %s189 = scalar_select %p188, %s19, 0
      %s190 = scalar_lea.vmem %s2, %s189
      %p191 = pneg %p99
      %p192 = pneg %p96
      %p193 = pneg %p127
      %p194 = pneg %p124
      %s195 = smul.u32 64, %s18
      %p196 = scmp.lt.s32.totalorder %s195, 255
      %s197 = scalar_select %p196, %s195, 255
      %p198 = scmp.lt.s32.totalorder %s19, 0
      %s199 = scalar_select %p198, %s19, 0
      %s200 = sadd.s32 %s199, %s197
      %s201 = smul.addr %s200, 8
      %s202 = scalar_lea.vmem %s3, %s201
      %s203 = smul.u32 64, %s18
      %p204 = scmp.lt.s32.totalorder %s203, 255
      %s205 = scalar_select %p204, %s203, 255
      %s206 = smul.addr %s205, 4
      %s207 = scalar_lea.vmem %s0, %s206
      %s208 = smul.u32 64, %s18
      %p209 = scmp.lt.s32.totalorder %s19, 0
      %s210 = scalar_select %p209, %s19, 0
      %s211 = smul.addr %s210, 4
      %s212 = scalar_lea.vmem %s1, %s211
      %p213 = scmp.lt.s32.totalorder %s19, 0
      %s214 = scalar_select %p213, %s19, 0
      %s215 = scalar_lea.vmem %s2, %s214
      %s216 = smul.u32 64, %s18
      %p217 = scmp.lt.s32.totalorder %s216, 255
      %s218 = scalar_select %p217, %s216, 255
      %p219 = scmp.lt.s32.totalorder %s19, 0
      %s220 = scalar_select %p219, %s19, 0
      %s221 = sadd.s32 %s220, %s218
      %s222 = smul.addr %s221, 8
      %s223 = scalar_lea.vmem %s3, %s222
      %s224 = smul.u32 64, %s18
      %v226 = vld [vmem:[%s207] sm:$0xf]
      %v227 = vld [vmem:[%s207 + $0x4] sm:$0xf]
      %v228 = vld [vmem:[%s207 + $0x8] sm:$0xf]
      %v229 = vld [vmem:[%s207 + $0xc] sm:$0xf]
      %v230 = vld [vmem:[%s207 + $0x10] sm:$0xf]
      %v231 = vld [vmem:[%s207 + $0x14] sm:$0xf]
      %v232 = vld [vmem:[%s207 + $0x18] sm:$0xf]
      %v233 = vld [vmem:[%s207 + $0x1c] sm:$0xf]
      %v234 = vld [vmem:[%s207 + $0x20] sm:$0xf]
      %v235 = vld [vmem:[%s207 + $0x24] sm:$0xf]
      %v236 = vld [vmem:[%s207 + $0x28] sm:$0xf]
      %v237 = vld [vmem:[%s207 + $0x2c] sm:$0xf]
      %v238 = vld [vmem:[%s207 + $0x30] sm:$0xf]
      %v239 = vld [vmem:[%s207 + $0x34] sm:$0xf]
      %v240 = vld [vmem:[%s207 + $0x38] sm:$0xf]
      %v241 = vld [vmem:[%s207 + $0x3c] sm:$0xf]
      %v242 = vld [vmem:[%s207 + $0x40] sm:$0xf]
      %v243 = vld [vmem:[%s207 + $0x44] sm:$0xf]
      %v244 = vld [vmem:[%s207 + $0x48] sm:$0xf]
      %v245 = vld [vmem:[%s207 + $0x4c] sm:$0xf]
      %v246 = vld [vmem:[%s207 + $0x50] sm:$0xf]
      %v247 = vld [vmem:[%s207 + $0x54] sm:$0xf]
      %v248 = vld [vmem:[%s207 + $0x58] sm:$0xf]
      %v249 = vld [vmem:[%s207 + $0x5c] sm:$0xf]
      %v250 = vld [vmem:[%s207 + $0x60] sm:$0xf]
      %v251 = vld [vmem:[%s207 + $0x64] sm:$0xf]
      %v252 = vld [vmem:[%s207 + $0x68] sm:$0xf]
      %v253 = vld [vmem:[%s207 + $0x6c] sm:$0xf]
      %v254 = vld [vmem:[%s207 + $0x70] sm:$0xf]
      %v255 = vld [vmem:[%s207 + $0x74] sm:$0xf]
      %v256 = vld [vmem:[%s207 + $0x78] sm:$0xf]
      %v257 = vld [vmem:[%s207 + $0x7c] sm:$0xf]
      %v258 = vld [vmem:[%s207 + $0x80] sm:$0xf]
      %v259 = vld [vmem:[%s207 + $0x84] sm:$0xf]
      %v260 = vld [vmem:[%s207 + $0x88] sm:$0xf]
      %v261 = vld [vmem:[%s207 + $0x8c] sm:$0xf]
      %v262 = vld [vmem:[%s207 + $0x90] sm:$0xf]
      %v263 = vld [vmem:[%s207 + $0x94] sm:$0xf]
      %v264 = vld [vmem:[%s207 + $0x98] sm:$0xf]
      %v265 = vld [vmem:[%s207 + $0x9c] sm:$0xf]
      %v266 = vld [vmem:[%s207 + $0xa0] sm:$0xf]
      %v267 = vld [vmem:[%s207 + $0xa4] sm:$0xf]
      %v268 = vld [vmem:[%s207 + $0xa8] sm:$0xf]
      %v269 = vld [vmem:[%s207 + $0xac] sm:$0xf]
      %v270 = vld [vmem:[%s207 + $0xb0] sm:$0xf]
      %v271 = vld [vmem:[%s207 + $0xb4] sm:$0xf]
      %v272 = vld [vmem:[%s207 + $0xb8] sm:$0xf]
      %v273 = vld [vmem:[%s207 + $0xbc] sm:$0xf]
      %v274 = vld [vmem:[%s207 + $0xc0] sm:$0xf]
      %v275 = vld [vmem:[%s207 + $0xc4] sm:$0xf]
      %v276 = vld [vmem:[%s207 + $0xc8] sm:$0xf]
      %v277 = vld [vmem:[%s207 + $0xcc] sm:$0xf]
      %v278 = vld [vmem:[%s207 + $0xd0] sm:$0xf]
      %v279 = vld [vmem:[%s207 + $0xd4] sm:$0xf]
      %v280 = vld [vmem:[%s207 + $0xd8] sm:$0xf]
      %v281 = vld [vmem:[%s207 + $0xdc] sm:$0xf]
      %v282 = vld [vmem:[%s207 + $0xe0] sm:$0xf]
      %v283 = vld [vmem:[%s207 + $0xe4] sm:$0xf]
      %v284 = vld [vmem:[%s207 + $0xe8] sm:$0xf]
      %v285 = vld [vmem:[%s207 + $0xec] sm:$0xf]
      %v286 = vld [vmem:[%s207 + $0xf0] sm:$0xf]
      %v287 = vld [vmem:[%s207 + $0xf4] sm:$0xf]
      %v288 = vld [vmem:[%s207 + $0xf8] sm:$0xf]
      %v289 = vld [vmem:[%s207 + $0xfc] sm:$0xf]
      %v290 = vld [vmem:[%s212] sm:$0xf]
      %v291 = vld [vmem:[%s212 + $0x4] sm:$0xf]
      %v292 = vld [vmem:[%s212 + $0x8] sm:$0xf]
      %v293 = vld [vmem:[%s212 + $0xc] sm:$0xf]
      %v294 = vld [vmem:[%s212 + $0x10] sm:$0xf]
      %v295 = vld [vmem:[%s212 + $0x14] sm:$0xf]
      %v296 = vld [vmem:[%s212 + $0x18] sm:$0xf]
      %v297 = vld [vmem:[%s212 + $0x1c] sm:$0xf]
      %v298 = vld [vmem:[%s212 + $0x20] sm:$0xf]
      %v299 = vld [vmem:[%s212 + $0x24] sm:$0xf]
      %v300 = vld [vmem:[%s212 + $0x28] sm:$0xf]
      %v301 = vld [vmem:[%s212 + $0x2c] sm:$0xf]
      %v302 = vld [vmem:[%s212 + $0x30] sm:$0xf]
      %v303 = vld [vmem:[%s212 + $0x34] sm:$0xf]
      %v304 = vld [vmem:[%s212 + $0x38] sm:$0xf]
      %v305 = vld [vmem:[%s212 + $0x3c] sm:$0xf]
      %v306 = vld [vmem:[%s215] sm:$0x1]
      %v308 = vlaneseq
      %v309 = vshrl.u32 %v308, 7
      %v310 = vsub.s32 0, %v309
      %v311 = vrot.slane %v306, %v310
      %v377 = vunpack.c.l.b16 %v226
      %v378 = vunpack.c.l.b16 %v227
      %v379 = vunpack.c.l.b16 %v228
      %v380 = vunpack.c.l.b16 %v229
      %v381 = vunpack.c.l.b16 %v230
      %v382 = vunpack.c.l.b16 %v231
      %v383 = vunpack.c.l.b16 %v232
      %v384 = vunpack.c.l.b16 %v233
      %v385 = vunpack.c.l.b16 %v234
      %v386 = vunpack.c.l.b16 %v235
      %v387 = vunpack.c.l.b16 %v236
      %v388 = vunpack.c.l.b16 %v237
      %v389 = vunpack.c.l.b16 %v238
      %v390 = vunpack.c.l.b16 %v239
      %v391 = vunpack.c.l.b16 %v240
      %v392 = vunpack.c.l.b16 %v241
      %v393 = vunpack.c.l.b16 %v242
      %v394 = vunpack.c.l.b16 %v243
      %v395 = vunpack.c.l.b16 %v244
      %v396 = vunpack.c.l.b16 %v245
      %v397 = vunpack.c.l.b16 %v246
      %v398 = vunpack.c.l.b16 %v247
      %v399 = vunpack.c.l.b16 %v248
      %v400 = vunpack.c.l.b16 %v249
      %v401 = vunpack.c.l.b16 %v250
      %v402 = vunpack.c.l.b16 %v251
      %v403 = vunpack.c.l.b16 %v252
      %v404 = vunpack.c.l.b16 %v253
      %v405 = vunpack.c.l.b16 %v254
      %v406 = vunpack.c.l.b16 %v255
      %v407 = vunpack.c.l.b16 %v256
      %v408 = vunpack.c.l.b16 %v257
      %v409 = vunpack.c.l.b16 %v258
      %v410 = vunpack.c.l.b16 %v259
      %v411 = vunpack.c.l.b16 %v260
      %v412 = vunpack.c.l.b16 %v261
      %v413 = vunpack.c.l.b16 %v262
      %v414 = vunpack.c.l.b16 %v263
      %v415 = vunpack.c.l.b16 %v264
      %v416 = vunpack.c.l.b16 %v265
      %v417 = vunpack.c.l.b16 %v266
      %v418 = vunpack.c.l.b16 %v267
      %v419 = vunpack.c.l.b16 %v268
      %v420 = vunpack.c.l.b16 %v269
      %v421 = vunpack.c.l.b16 %v270
      %v422 = vunpack.c.l.b16 %v271
      %v423 = vunpack.c.l.b16 %v272
      %v424 = vunpack.c.l.b16 %v273
      %v425 = vunpack.c.l.b16 %v274
      %v426 = vunpack.c.l.b16 %v275
      %v427 = vunpack.c.l.b16 %v276
      %v428 = vunpack.c.l.b16 %v277
      %v429 = vunpack.c.l.b16 %v278
      %v430 = vunpack.c.l.b16 %v279
      %v431 = vunpack.c.l.b16 %v280
      %v432 = vunpack.c.l.b16 %v281
      %v433 = vunpack.c.l.b16 %v282
      %v434 = vunpack.c.l.b16 %v283
      %v435 = vunpack.c.l.b16 %v284
      %v436 = vunpack.c.l.b16 %v285
      %v437 = vunpack.c.l.b16 %v286
      %v438 = vunpack.c.l.b16 %v287
      %v439 = vunpack.c.l.b16 %v288
      %v440 = vunpack.c.l.b16 %v289
      %v441 = vpack.c.b16 %v378, %v377
      %v442 = vpack.c.b16 %v380, %v379
      %v443 = vpack.c.b16 %v382, %v381
      %v444 = vpack.c.b16 %v384, %v383
      %v445 = vpack.c.b16 %v386, %v385
      %v446 = vpack.c.b16 %v388, %v387
      %v447 = vpack.c.b16 %v390, %v389
      %v448 = vpack.c.b16 %v392, %v391
      %v449 = vpack.c.b16 %v394, %v393
      %v450 = vpack.c.b16 %v396, %v395
      %v451 = vpack.c.b16 %v398, %v397
      %v452 = vpack.c.b16 %v400, %v399
      %v453 = vpack.c.b16 %v402, %v401
      %v454 = vpack.c.b16 %v404, %v403
      %v455 = vpack.c.b16 %v406, %v405
      %v456 = vpack.c.b16 %v408, %v407
      %v457 = vpack.c.b16 %v410, %v409
      %v458 = vpack.c.b16 %v412, %v411
      %v459 = vpack.c.b16 %v414, %v413
      %v460 = vpack.c.b16 %v416, %v415
      %v461 = vpack.c.b16 %v418, %v417
      %v462 = vpack.c.b16 %v420, %v419
      %v463 = vpack.c.b16 %v422, %v421
      %v464 = vpack.c.b16 %v424, %v423
      %v465 = vpack.c.b16 %v426, %v425
      %v466 = vpack.c.b16 %v428, %v427
      %v467 = vpack.c.b16 %v430, %v429
      %v468 = vpack.c.b16 %v432, %v431
      %v469 = vpack.c.b16 %v434, %v433
      %v470 = vpack.c.b16 %v436, %v435
      %v471 = vpack.c.b16 %v438, %v437
      %v472 = vpack.c.b16 %v440, %v439
      %v521 = vunpack.c.l.b16 %v290
      %v522 = vunpack.c.l.b16 %v291
      %v523 = vunpack.c.l.b16 %v292
      %v524 = vunpack.c.l.b16 %v293
      %v525 = vunpack.c.l.b16 %v294
      %v526 = vunpack.c.l.b16 %v295
      %v527 = vunpack.c.l.b16 %v296
      %v528 = vunpack.c.l.b16 %v297
      %v529 = vunpack.c.l.b16 %v298
      %v530 = vunpack.c.l.b16 %v299
      %v531 = vunpack.c.l.b16 %v300
      %v532 = vunpack.c.l.b16 %v301
      %v533 = vunpack.c.l.b16 %v302
      %v534 = vunpack.c.l.b16 %v303
      %v535 = vunpack.c.l.b16 %v304
      %v536 = vunpack.c.l.b16 %v305
      %v537 = vpack.c.b16 %v522, %v521
      %v538 = vpack.c.b16 %v524, %v523
      %v539 = vpack.c.b16 %v526, %v525
      %v540 = vpack.c.b16 %v528, %v527
      %v541 = vpack.c.b16 %v530, %v529
      %v542 = vpack.c.b16 %v532, %v531
      %v543 = vpack.c.b16 %v534, %v533
      %v544 = vpack.c.b16 %v536, %v535
      %553 = vmatprep.subr.bf16.mxu0 0
      %554 = vmatpush1.bf16.msra.mxu0 %v544
      %555 = vmatprep.subr.bf16.mxu0 0
      %556 = vmatpush1.bf16.msra.mxu0 %v543
      %557 = vmatprep.subr.bf16.mxu0 0
      %558 = vmatpush1.bf16.msra.mxu0 %v542
      %559 = vmatprep.subr.bf16.mxu0 0
      %560 = vmatpush1.bf16.msra.mxu0 %v541
      %561 = vmatprep.subr.bf16.mxu0 0
      %562 = vmatpush1.bf16.msra.mxu0 %v540
      %563 = vmatprep.subr.bf16.mxu0 0
      %564 = vmatpush1.bf16.msra.mxu0 %v539
      %565 = vmatprep.subr.bf16.mxu0 0
      %566 = vmatpush1.bf16.msra.mxu0 %v538
      %567 = vmatprep.subr.bf16.mxu0 0
      %568 = vmatpush1.bf16.msra.mxu0 %v537
      %569 = vmatprep.subr.bf16.mxu0 0
      %570 = vmatpush2.bf16.msra.mxu0 0
      %571 = vmatprep.subr.bf16.mxu0 0
      %572 = vmatpush2.bf16.msra.mxu0 0
      %573 = vmatprep.subr.bf16.mxu0 0
      %574 = vmatpush2.bf16.msra.mxu0 0
      %575 = vmatprep.subr.bf16.mxu0 0
      %576 = vmatpush2.bf16.msra.mxu0 0
      %577 = vmatprep.subr.bf16.mxu0 0
      %578 = vmatpush2.bf16.msra.mxu0 0
      %579 = vmatprep.subr.bf16.mxu0 0
      %580 = vmatpush2.bf16.msra.mxu0 0
      %581 = vmatprep.subr.bf16.mxu0 0
      %582 = vmatpush2.bf16.msra.mxu0 0
      %583 = vmatprep.subr.bf16.mxu0 0
      %584 = vmatpush2.bf16.msra.mxu0 0
      %585 = vmatprep.mubr.bf16.mxu0 0
      %586 = vmatmul.mubr.bf16.gmra.mxu0 %v441
      %v587 = vpop.f32.mrf.mxu0
      %v588 = vadd.f32 %v311, %v587
      %v589 = vpop.f32.mrf.mxu0
      %v590 = vpop.f32.mrf.mxu0
      %v591 = vadd.f32 %v311, %v590
      %v592 = vpop.f32.mrf.mxu0
      %593 = vmatprep.mubr.bf16.mxu0 0
      %594 = vmatmul.mubr.bf16.gmra.mxu0 %v442
      %v595 = vpop.f32.mrf.mxu0
      %v596 = vadd.f32 %v311, %v595
      %v597 = vpop.f32.mrf.mxu0
      %v598 = vpop.f32.mrf.mxu0
      %v599 = vadd.f32 %v311, %v598
      %v600 = vpop.f32.mrf.mxu0
      %601 = vmatprep.mubr.bf16.mxu0 0
      %602 = vmatmul.mubr.bf16.gmra.mxu0 %v443
      %v603 = vpop.f32.mrf.mxu0
      %v604 = vadd.f32 %v311, %v603
      %v605 = vpop.f32.mrf.mxu0
      %v606 = vpop.f32.mrf.mxu0
      %v607 = vadd.f32 %v311, %v606
      %v608 = vpop.f32.mrf.mxu0
      %609 = vmatprep.mubr.bf16.mxu0 0
      %610 = vmatmul.mubr.bf16.gmra.mxu0 %v444
      %v611 = vpop.f32.mrf.mxu0
      %v612 = vadd.f32 %v311, %v611
      %v613 = vpop.f32.mrf.mxu0
      %v614 = vpop.f32.mrf.mxu0
      %v615 = vadd.f32 %v311, %v614
      %v616 = vpop.f32.mrf.mxu0
      %617 = vmatprep.mubr.bf16.mxu0 0
      %618 = vmatmul.mubr.bf16.gmra.mxu0 %v445
      %v619 = vpop.f32.mrf.mxu0
      %v620 = vadd.f32 %v311, %v619
      %v621 = vpop.f32.mrf.mxu0
      %v622 = vpop.f32.mrf.mxu0
      %v623 = vadd.f32 %v311, %v622
      %v624 = vpop.f32.mrf.mxu0
      %625 = vmatprep.mubr.bf16.mxu0 0
      %626 = vmatmul.mubr.bf16.gmra.mxu0 %v446
      %v627 = vpop.f32.mrf.mxu0
      %v628 = vadd.f32 %v311, %v627
      %v629 = vpop.f32.mrf.mxu0
      %v630 = vpop.f32.mrf.mxu0
      %v631 = vadd.f32 %v311, %v630
      %v632 = vpop.f32.mrf.mxu0
      %633 = vmatprep.mubr.bf16.mxu0 0
      %634 = vmatmul.mubr.bf16.gmra.mxu0 %v447
      %v635 = vpop.f32.mrf.mxu0
      %v636 = vadd.f32 %v311, %v635
      %v637 = vpop.f32.mrf.mxu0
      %v638 = vpop.f32.mrf.mxu0
      %v639 = vadd.f32 %v311, %v638
      %v640 = vpop.f32.mrf.mxu0
      %641 = vmatprep.mubr.bf16.mxu0 0
      %642 = vmatmul.mubr.bf16.gmra.mxu0 %v448
      %v643 = vpop.f32.mrf.mxu0
      %v644 = vadd.f32 %v311, %v643
      %v645 = vpop.f32.mrf.mxu0
      %v646 = vpop.f32.mrf.mxu0
      %v647 = vadd.f32 %v311, %v646
      %v648 = vpop.f32.mrf.mxu0
      %649 = vmatprep.mubr.bf16.mxu0 0
      %650 = vmatmul.mubr.bf16.gmra.mxu0 %v449
      %v651 = vpop.f32.mrf.mxu0
      %v652 = vadd.f32 %v311, %v651
      %v653 = vpop.f32.mrf.mxu0
      %v654 = vpop.f32.mrf.mxu0
      %v655 = vadd.f32 %v311, %v654
      %v656 = vpop.f32.mrf.mxu0
      %657 = vmatprep.mubr.bf16.mxu0 0
      %658 = vmatmul.mubr.bf16.gmra.mxu0 %v450
      %v659 = vpop.f32.mrf.mxu0
      %v660 = vadd.f32 %v311, %v659
      %v661 = vpop.f32.mrf.mxu0
      %v662 = vpop.f32.mrf.mxu0
      %v663 = vadd.f32 %v311, %v662
      %v664 = vpop.f32.mrf.mxu0
      %665 = vmatprep.mubr.bf16.mxu0 0
      %666 = vmatmul.mubr.bf16.gmra.mxu0 %v451
      %v667 = vpop.f32.mrf.mxu0
      %v668 = vadd.f32 %v311, %v667
      %v669 = vpop.f32.mrf.mxu0
      %v670 = vpop.f32.mrf.mxu0
      %v671 = vadd.f32 %v311, %v670
      %v672 = vpop.f32.mrf.mxu0
      %673 = vmatprep.mubr.bf16.mxu0 0
      %674 = vmatmul.mubr.bf16.gmra.mxu0 %v452
      %v675 = vpop.f32.mrf.mxu0
      %v676 = vadd.f32 %v311, %v675
      %v677 = vpop.f32.mrf.mxu0
      %v678 = vpop.f32.mrf.mxu0
      %v679 = vadd.f32 %v311, %v678
      %v680 = vpop.f32.mrf.mxu0
      %681 = vmatprep.mubr.bf16.mxu0 0
      %682 = vmatmul.mubr.bf16.gmra.mxu0 %v453
      %v683 = vpop.f32.mrf.mxu0
      %v684 = vadd.f32 %v311, %v683
      %v685 = vpop.f32.mrf.mxu0
      %v686 = vpop.f32.mrf.mxu0
      %v687 = vadd.f32 %v311, %v686
      %v688 = vpop.f32.mrf.mxu0
      %689 = vmatprep.mubr.bf16.mxu0 0
      %690 = vmatmul.mubr.bf16.gmra.mxu0 %v454
      %v691 = vpop.f32.mrf.mxu0
      %v692 = vadd.f32 %v311, %v691
      %v693 = vpop.f32.mrf.mxu0
      %v694 = vpop.f32.mrf.mxu0
      %v695 = vadd.f32 %v311, %v694
      %v696 = vpop.f32.mrf.mxu0
      %697 = vmatprep.mubr.bf16.mxu0 0
      %698 = vmatmul.mubr.bf16.gmra.mxu0 %v455
      %v699 = vpop.f32.mrf.mxu0
      %v700 = vadd.f32 %v311, %v699
      %v701 = vpop.f32.mrf.mxu0
      %v702 = vpop.f32.mrf.mxu0
      %v703 = vadd.f32 %v311, %v702
      %v704 = vpop.f32.mrf.mxu0
      %705 = vmatprep.mubr.bf16.mxu0 0
      %706 = vmatmul.mubr.bf16.gmra.mxu0 %v456
      %v707 = vpop.f32.mrf.mxu0
      %v708 = vadd.f32 %v311, %v707
      %v709 = vpop.f32.mrf.mxu0
      %v710 = vpop.f32.mrf.mxu0
      %v711 = vadd.f32 %v311, %v710
      %v712 = vpop.f32.mrf.mxu0
      %713 = vmatprep.mubr.bf16.mxu0 0
      %714 = vmatmul.mubr.bf16.gmra.mxu0 %v457
      %v715 = vpop.f32.mrf.mxu0
      %v716 = vadd.f32 %v311, %v715
      %v717 = vpop.f32.mrf.mxu0
      %v718 = vpop.f32.mrf.mxu0
      %v719 = vadd.f32 %v311, %v718
      %v720 = vpop.f32.mrf.mxu0
      %721 = vmatprep.mubr.bf16.mxu0 0
      %722 = vmatmul.mubr.bf16.gmra.mxu0 %v458
      %v723 = vpop.f32.mrf.mxu0
      %v724 = vadd.f32 %v311, %v723
      %v725 = vpop.f32.mrf.mxu0
      %v726 = vpop.f32.mrf.mxu0
      %v727 = vadd.f32 %v311, %v726
      %v728 = vpop.f32.mrf.mxu0
      %729 = vmatprep.mubr.bf16.mxu0 0
      %730 = vmatmul.mubr.bf16.gmra.mxu0 %v459
      %v731 = vpop.f32.mrf.mxu0
      %v732 = vadd.f32 %v311, %v731
      %v733 = vpop.f32.mrf.mxu0
      %v734 = vpop.f32.mrf.mxu0
      %v735 = vadd.f32 %v311, %v734
      %v736 = vpop.f32.mrf.mxu0
      %737 = vmatprep.mubr.bf16.mxu0 0
      %738 = vmatmul.mubr.bf16.gmra.mxu0 %v460
      %v739 = vpop.f32.mrf.mxu0
      %v740 = vadd.f32 %v311, %v739
      %v741 = vpop.f32.mrf.mxu0
      %v742 = vpop.f32.mrf.mxu0
      %v743 = vadd.f32 %v311, %v742
      %v744 = vpop.f32.mrf.mxu0
      %745 = vmatprep.mubr.bf16.mxu0 0
      %746 = vmatmul.mubr.bf16.gmra.mxu0 %v461
      %v747 = vpop.f32.mrf.mxu0
      %v748 = vadd.f32 %v311, %v747
      %v749 = vpop.f32.mrf.mxu0
      %v750 = vpop.f32.mrf.mxu0
      %v751 = vadd.f32 %v311, %v750
      %v752 = vpop.f32.mrf.mxu0
      %753 = vmatprep.mubr.bf16.mxu0 0
      %754 = vmatmul.mubr.bf16.gmra.mxu0 %v462
      %v755 = vpop.f32.mrf.mxu0
      %v756 = vadd.f32 %v311, %v755
      %v757 = vpop.f32.mrf.mxu0
      %v758 = vpop.f32.mrf.mxu0
      %v759 = vadd.f32 %v311, %v758
      %v760 = vpop.f32.mrf.mxu0
      %761 = vmatprep.mubr.bf16.mxu0 0
      %762 = vmatmul.mubr.bf16.gmra.mxu0 %v463
      %v763 = vpop.f32.mrf.mxu0
      %v764 = vadd.f32 %v311, %v763
      %v765 = vpop.f32.mrf.mxu0
      %v766 = vpop.f32.mrf.mxu0
      %v767 = vadd.f32 %v311, %v766
      %v768 = vpop.f32.mrf.mxu0
      %769 = vmatprep.mubr.bf16.mxu0 0
      %770 = vmatmul.mubr.bf16.gmra.mxu0 %v464
      %v771 = vpop.f32.mrf.mxu0
      %v772 = vadd.f32 %v311, %v771
      %v773 = vpop.f32.mrf.mxu0
      %v774 = vpop.f32.mrf.mxu0
      %v775 = vadd.f32 %v311, %v774
      %v776 = vpop.f32.mrf.mxu0
      %777 = vmatprep.mubr.bf16.mxu0 0
      %778 = vmatmul.mubr.bf16.gmra.mxu0 %v465
      %v779 = vpop.f32.mrf.mxu0
      %v780 = vadd.f32 %v311, %v779
      %v781 = vpop.f32.mrf.mxu0
      %v782 = vpop.f32.mrf.mxu0
      %v783 = vadd.f32 %v311, %v782
      %v784 = vpop.f32.mrf.mxu0
      %785 = vmatprep.mubr.bf16.mxu0 0
      %786 = vmatmul.mubr.bf16.gmra.mxu0 %v466
      %v787 = vpop.f32.mrf.mxu0
      %v788 = vadd.f32 %v311, %v787
      %v789 = vpop.f32.mrf.mxu0
      %v790 = vpop.f32.mrf.mxu0
      %v791 = vadd.f32 %v311, %v790
      %v792 = vpop.f32.mrf.mxu0
      %793 = vmatprep.mubr.bf16.mxu0 0
      %794 = vmatmul.mubr.bf16.gmra.mxu0 %v467
      %v795 = vpop.f32.mrf.mxu0
      %v796 = vadd.f32 %v311, %v795
      %v797 = vpop.f32.mrf.mxu0
      %v798 = vpop.f32.mrf.mxu0
      %v799 = vadd.f32 %v311, %v798
      %v800 = vpop.f32.mrf.mxu0
      %801 = vmatprep.mubr.bf16.mxu0 0
      %802 = vmatmul.mubr.bf16.gmra.mxu0 %v468
      %v803 = vpop.f32.mrf.mxu0
      %v804 = vadd.f32 %v311, %v803
      %v805 = vpop.f32.mrf.mxu0
      %v806 = vpop.f32.mrf.mxu0
      %v807 = vadd.f32 %v311, %v806
      %v808 = vpop.f32.mrf.mxu0
      %809 = vmatprep.mubr.bf16.mxu0 0
      %810 = vmatmul.mubr.bf16.gmra.mxu0 %v469
      %v811 = vpop.f32.mrf.mxu0
      %v812 = vadd.f32 %v311, %v811
      %v813 = vpop.f32.mrf.mxu0
      %v814 = vpop.f32.mrf.mxu0
      %v815 = vadd.f32 %v311, %v814
      %v816 = vpop.f32.mrf.mxu0
      %817 = vmatprep.mubr.bf16.mxu0 0
      %818 = vmatmul.mubr.bf16.gmra.mxu0 %v470
      %v819 = vpop.f32.mrf.mxu0
      %v820 = vadd.f32 %v311, %v819
      %v821 = vpop.f32.mrf.mxu0
      %v822 = vpop.f32.mrf.mxu0
      %v823 = vadd.f32 %v311, %v822
      %v824 = vpop.f32.mrf.mxu0
      %825 = vmatprep.mubr.bf16.mxu0 0
      %826 = vmatmul.mubr.bf16.gmra.mxu0 %v471
      %v827 = vpop.f32.mrf.mxu0
      %v828 = vadd.f32 %v311, %v827
      %v829 = vpop.f32.mrf.mxu0
      %v830 = vpop.f32.mrf.mxu0
      %v831 = vadd.f32 %v311, %v830
      %v832 = vpop.f32.mrf.mxu0
      %833 = vmatprep.mubr.bf16.mxu0 0
      %834 = vmatmul.mubr.bf16.gmra.mxu0 %v472
      %v835 = vpop.f32.mrf.mxu0
      %v836 = vadd.f32 %v311, %v835
      %v837 = vpop.f32.mrf.mxu0
      %v838 = vpop.f32.mrf.mxu0
      %v839 = vadd.f32 %v311, %v838
      %v840 = vpop.f32.mrf.mxu0
      %841 = vdwg.mxu0
      %v842 = vsub.f32 0.0, %v588
      %v843 = vsub.f32 0.0, %v591
      %v844 = vsub.f32 0.0, %v596
      %v845 = vsub.f32 0.0, %v599
      %v846 = vsub.f32 0.0, %v604
      %v847 = vsub.f32 0.0, %v607
      %v848 = vsub.f32 0.0, %v612
      %v849 = vsub.f32 0.0, %v615
      %v850 = vsub.f32 0.0, %v620
      %v851 = vsub.f32 0.0, %v623
      %v852 = vsub.f32 0.0, %v628
      %v853 = vsub.f32 0.0, %v631
      %v854 = vsub.f32 0.0, %v636
      %v855 = vsub.f32 0.0, %v639
      %v856 = vsub.f32 0.0, %v644
      %v857 = vsub.f32 0.0, %v647
      %v858 = vsub.f32 0.0, %v652
      %v859 = vsub.f32 0.0, %v655
      %v860 = vsub.f32 0.0, %v660
      %v861 = vsub.f32 0.0, %v663
      %v862 = vsub.f32 0.0, %v668
      %v863 = vsub.f32 0.0, %v671
      %v864 = vsub.f32 0.0, %v676
      %v865 = vsub.f32 0.0, %v679
      %v866 = vsub.f32 0.0, %v684
      %v867 = vsub.f32 0.0, %v687
      %v868 = vsub.f32 0.0, %v692
      %v869 = vsub.f32 0.0, %v695
      %v870 = vsub.f32 0.0, %v700
      %v871 = vsub.f32 0.0, %v703
      %v872 = vsub.f32 0.0, %v708
      %v873 = vsub.f32 0.0, %v711
      %v874 = vsub.f32 0.0, %v716
      %v875 = vsub.f32 0.0, %v719
      %v876 = vsub.f32 0.0, %v724
      %v877 = vsub.f32 0.0, %v727
      %v878 = vsub.f32 0.0, %v732
      %v879 = vsub.f32 0.0, %v735
      %v880 = vsub.f32 0.0, %v740
      %v881 = vsub.f32 0.0, %v743
      %v882 = vsub.f32 0.0, %v748
      %v883 = vsub.f32 0.0, %v751
      %v884 = vsub.f32 0.0, %v756
      %v885 = vsub.f32 0.0, %v759
      %v886 = vsub.f32 0.0, %v764
      %v887 = vsub.f32 0.0, %v767
      %v888 = vsub.f32 0.0, %v772
      %v889 = vsub.f32 0.0, %v775
      %v890 = vsub.f32 0.0, %v780
      %v891 = vsub.f32 0.0, %v783
      %v892 = vsub.f32 0.0, %v788
      %v893 = vsub.f32 0.0, %v791
      %v894 = vsub.f32 0.0, %v796
      %v895 = vsub.f32 0.0, %v799
      %v896 = vsub.f32 0.0, %v804
      %v897 = vsub.f32 0.0, %v807
      %v898 = vsub.f32 0.0, %v812
      %v899 = vsub.f32 0.0, %v815
      %v900 = vsub.f32 0.0, %v820
      %v901 = vsub.f32 0.0, %v823
      %v902 = vsub.f32 0.0, %v828
      %v903 = vsub.f32 0.0, %v831
      %v904 = vsub.f32 0.0, %v836
      %v905 = vsub.f32 0.0, %v839
      %v906 = vmul.f32 %v842, 1.442695
      %v907 = vpow.pop %v906
      %v908 = vmul.f32 %v843, 1.442695
      %v909 = vpow.pop %v908
      %v910 = vmul.f32 %v844, 1.442695
      %v911 = vpow.pop %v910
      %v912 = vmul.f32 %v845, 1.442695
      %v913 = vpow.pop %v912
      %v914 = vmul.f32 %v846, 1.442695
      %v915 = vpow.pop %v914
      %v916 = vmul.f32 %v847, 1.442695
      %v917 = vpow.pop %v916
      %v918 = vmul.f32 %v848, 1.442695
      %v919 = vpow.pop %v918
      %v920 = vmul.f32 %v849, 1.442695
      %v921 = vpow.pop %v920
      %v922 = vmul.f32 %v850, 1.442695
      %v923 = vpow.pop %v922
      %v924 = vmul.f32 %v851, 1.442695
      %v925 = vpow.pop %v924
      %v926 = vmul.f32 %v852, 1.442695
      %v927 = vpow.pop %v926
      %v928 = vmul.f32 %v853, 1.442695
      %v929 = vpow.pop %v928
      %v930 = vmul.f32 %v854, 1.442695
      %v931 = vpow.pop %v930
      %v932 = vmul.f32 %v855, 1.442695
      %v933 = vpow.pop %v932
      %v934 = vmul.f32 %v856, 1.442695
      %v935 = vpow.pop %v934
      %v936 = vmul.f32 %v857, 1.442695
      %v937 = vpow.pop %v936
      %v938 = vmul.f32 %v858, 1.442695
      %v939 = vpow.pop %v938
      %v940 = vmul.f32 %v859, 1.442695
      %v941 = vpow.pop %v940
      %v942 = vmul.f32 %v860, 1.442695
      %v943 = vpow.pop %v942
      %v944 = vmul.f32 %v861, 1.442695
      %v945 = vpow.pop %v944
      %v946 = vmul.f32 %v862, 1.442695
      %v947 = vpow.pop %v946
      %v948 = vmul.f32 %v863, 1.442695
      %v949 = vpow.pop %v948
      %v950 = vmul.f32 %v864, 1.442695
      %v951 = vpow.pop %v950
      %v952 = vmul.f32 %v865, 1.442695
      %v953 = vpow.pop %v952
      %v954 = vmul.f32 %v866, 1.442695
      %v955 = vpow.pop %v954
      %v956 = vmul.f32 %v867, 1.442695
      %v957 = vpow.pop %v956
      %v958 = vmul.f32 %v868, 1.442695
      %v959 = vpow.pop %v958
      %v960 = vmul.f32 %v869, 1.442695
      %v961 = vpow.pop %v960
      %v962 = vmul.f32 %v870, 1.442695
      %v963 = vpow.pop %v962
      %v964 = vmul.f32 %v871, 1.442695
      %v965 = vpow.pop %v964
      %v966 = vmul.f32 %v872, 1.442695
      %v967 = vpow.pop %v966
      %v968 = vmul.f32 %v873, 1.442695
      %v969 = vpow.pop %v968
      %v970 = vmul.f32 %v874, 1.442695
      %v971 = vpow.pop %v970
      %v972 = vmul.f32 %v875, 1.442695
      %v973 = vpow.pop %v972
      %v974 = vmul.f32 %v876, 1.442695
      %v975 = vpow.pop %v974
      %v976 = vmul.f32 %v877, 1.442695
      %v977 = vpow.pop %v976
      %v978 = vmul.f32 %v878, 1.442695
      %v979 = vpow.pop %v978
      %v980 = vmul.f32 %v879, 1.442695
      %v981 = vpow.pop %v980
      %v982 = vmul.f32 %v880, 1.442695
      %v983 = vpow.pop %v982
      %v984 = vmul.f32 %v881, 1.442695
      %v985 = vpow.pop %v984
      %v986 = vmul.f32 %v882, 1.442695
      %v987 = vpow.pop %v986
      %v988 = vmul.f32 %v883, 1.442695
      %v989 = vpow.pop %v988
      %v990 = vmul.f32 %v884, 1.442695
      %v991 = vpow.pop %v990
      %v992 = vmul.f32 %v885, 1.442695
      %v993 = vpow.pop %v992
      %v994 = vmul.f32 %v886, 1.442695
      %v995 = vpow.pop %v994
      %v996 = vmul.f32 %v887, 1.442695
      %v997 = vpow.pop %v996
      %v998 = vmul.f32 %v888, 1.442695
      %v999 = vpow.pop %v998
      %v1000 = vmul.f32 %v889, 1.442695
      %v1001 = vpow.pop %v1000
      %v1002 = vmul.f32 %v890, 1.442695
      %v1003 = vpow.pop %v1002
      %v1004 = vmul.f32 %v891, 1.442695
      %v1005 = vpow.pop %v1004
      %v1006 = vmul.f32 %v892, 1.442695
      %v1007 = vpow.pop %v1006
      %v1008 = vmul.f32 %v893, 1.442695
      %v1009 = vpow.pop %v1008
      %v1010 = vmul.f32 %v894, 1.442695
      %v1011 = vpow.pop %v1010
      %v1012 = vmul.f32 %v895, 1.442695
      %v1013 = vpow.pop %v1012
      %v1014 = vmul.f32 %v896, 1.442695
      %v1015 = vpow.pop %v1014
      %v1016 = vmul.f32 %v897, 1.442695
      %v1017 = vpow.pop %v1016
      %v1018 = vmul.f32 %v898, 1.442695
      %v1019 = vpow.pop %v1018
      %v1020 = vmul.f32 %v899, 1.442695
      %v1021 = vpow.pop %v1020
      %v1022 = vmul.f32 %v900, 1.442695
      %v1023 = vpow.pop %v1022
      %v1024 = vmul.f32 %v901, 1.442695
      %v1025 = vpow.pop %v1024
      %v1026 = vmul.f32 %v902, 1.442695
      %v1027 = vpow.pop %v1026
      %v1028 = vmul.f32 %v903, 1.442695
      %v1029 = vpow.pop %v1028
      %v1030 = vmul.f32 %v904, 1.442695
      %v1031 = vpow.pop %v1030
      %v1032 = vmul.f32 %v905, 1.442695
      %v1033 = vpow.pop %v1032
      %v1034 = vadd.f32 %v907, 1.0
      %v1035 = vadd.f32 %v909, 1.0
      %v1036 = vadd.f32 %v911, 1.0
      %v1037 = vadd.f32 %v913, 1.0
      %v1038 = vadd.f32 %v915, 1.0
      %v1039 = vadd.f32 %v917, 1.0
      %v1040 = vadd.f32 %v919, 1.0
      %v1041 = vadd.f32 %v921, 1.0
      %v1042 = vadd.f32 %v923, 1.0
      %v1043 = vadd.f32 %v925, 1.0
      %v1044 = vadd.f32 %v927, 1.0
      %v1045 = vadd.f32 %v929, 1.0
      %v1046 = vadd.f32 %v931, 1.0
      %v1047 = vadd.f32 %v933, 1.0
      %v1048 = vadd.f32 %v935, 1.0
      %v1049 = vadd.f32 %v937, 1.0
      %v1050 = vadd.f32 %v939, 1.0
      %v1051 = vadd.f32 %v941, 1.0
      %v1052 = vadd.f32 %v943, 1.0
      %v1053 = vadd.f32 %v945, 1.0
      %v1054 = vadd.f32 %v947, 1.0
      %v1055 = vadd.f32 %v949, 1.0
      %v1056 = vadd.f32 %v951, 1.0
      %v1057 = vadd.f32 %v953, 1.0
      %v1058 = vadd.f32 %v955, 1.0
      %v1059 = vadd.f32 %v957, 1.0
      %v1060 = vadd.f32 %v959, 1.0
      %v1061 = vadd.f32 %v961, 1.0
      %v1062 = vadd.f32 %v963, 1.0
      %v1063 = vadd.f32 %v965, 1.0
      %v1064 = vadd.f32 %v967, 1.0
      %v1065 = vadd.f32 %v969, 1.0
      %v1066 = vadd.f32 %v971, 1.0
      %v1067 = vadd.f32 %v973, 1.0
      %v1068 = vadd.f32 %v975, 1.0
      %v1069 = vadd.f32 %v977, 1.0
      %v1070 = vadd.f32 %v979, 1.0
      %v1071 = vadd.f32 %v981, 1.0
      %v1072 = vadd.f32 %v983, 1.0
      %v1073 = vadd.f32 %v985, 1.0
      %v1074 = vadd.f32 %v987, 1.0
      %v1075 = vadd.f32 %v989, 1.0
      %v1076 = vadd.f32 %v991, 1.0
      %v1077 = vadd.f32 %v993, 1.0
      %v1078 = vadd.f32 %v995, 1.0
      %v1079 = vadd.f32 %v997, 1.0
      %v1080 = vadd.f32 %v999, 1.0
      %v1081 = vadd.f32 %v1001, 1.0
      %v1082 = vadd.f32 %v1003, 1.0
      %v1083 = vadd.f32 %v1005, 1.0
      %v1084 = vadd.f32 %v1007, 1.0
      %v1085 = vadd.f32 %v1009, 1.0
      %v1086 = vadd.f32 %v1011, 1.0
      %v1087 = vadd.f32 %v1013, 1.0
      %v1088 = vadd.f32 %v1015, 1.0
      %v1089 = vadd.f32 %v1017, 1.0
      %v1090 = vadd.f32 %v1019, 1.0
      %v1091 = vadd.f32 %v1021, 1.0
      %v1092 = vadd.f32 %v1023, 1.0
      %v1093 = vadd.f32 %v1025, 1.0
      %v1094 = vadd.f32 %v1027, 1.0
      %v1095 = vadd.f32 %v1029, 1.0
      %v1096 = vadd.f32 %v1031, 1.0
      %v1097 = vadd.f32 %v1033, 1.0
      %v1098 = vrcp.pop %v1034
      %v1099 = vmul.f32 1.0, %v1098
      %v1100 = vrcp.pop %v1035
      %v1101 = vmul.f32 1.0, %v1100
      %v1102 = vrcp.pop %v1036
      %v1103 = vmul.f32 1.0, %v1102
      %v1104 = vrcp.pop %v1037
      %v1105 = vmul.f32 1.0, %v1104
      %v1106 = vrcp.pop %v1038
      %v1107 = vmul.f32 1.0, %v1106
      %v1108 = vrcp.pop %v1039
      %v1109 = vmul.f32 1.0, %v1108
      %v1110 = vrcp.pop %v1040
      %v1111 = vmul.f32 1.0, %v1110
      %v1112 = vrcp.pop %v1041
      %v1113 = vmul.f32 1.0, %v1112
      %v1114 = vrcp.pop %v1042
      %v1115 = vmul.f32 1.0, %v1114
      %v1116 = vrcp.pop %v1043
      %v1117 = vmul.f32 1.0, %v1116
      %v1118 = vrcp.pop %v1044
      %v1119 = vmul.f32 1.0, %v1118
      %v1120 = vrcp.pop %v1045
      %v1121 = vmul.f32 1.0, %v1120
      %v1122 = vrcp.pop %v1046
      %v1123 = vmul.f32 1.0, %v1122
      %v1124 = vrcp.pop %v1047
      %v1125 = vmul.f32 1.0, %v1124
      %v1126 = vrcp.pop %v1048
      %v1127 = vmul.f32 1.0, %v1126
      %v1128 = vrcp.pop %v1049
      %v1129 = vmul.f32 1.0, %v1128
      %v1130 = vrcp.pop %v1050
      %v1131 = vmul.f32 1.0, %v1130
      %v1132 = vrcp.pop %v1051
      %v1133 = vmul.f32 1.0, %v1132
      %v1134 = vrcp.pop %v1052
      %v1135 = vmul.f32 1.0, %v1134
      %v1136 = vrcp.pop %v1053
      %v1137 = vmul.f32 1.0, %v1136
      %v1138 = vrcp.pop %v1054
      %v1139 = vmul.f32 1.0, %v1138
      %v1140 = vrcp.pop %v1055
      %v1141 = vmul.f32 1.0, %v1140
      %v1142 = vrcp.pop %v1056
      %v1143 = vmul.f32 1.0, %v1142
      %v1144 = vrcp.pop %v1057
      %v1145 = vmul.f32 1.0, %v1144
      %v1146 = vrcp.pop %v1058
      %v1147 = vmul.f32 1.0, %v1146
      %v1148 = vrcp.pop %v1059
      %v1149 = vmul.f32 1.0, %v1148
      %v1150 = vrcp.pop %v1060
      %v1151 = vmul.f32 1.0, %v1150
      %v1152 = vrcp.pop %v1061
      %v1153 = vmul.f32 1.0, %v1152
      %v1154 = vrcp.pop %v1062
      %v1155 = vmul.f32 1.0, %v1154
      %v1156 = vrcp.pop %v1063
      %v1157 = vmul.f32 1.0, %v1156
      %v1158 = vrcp.pop %v1064
      %v1159 = vmul.f32 1.0, %v1158
      %v1160 = vrcp.pop %v1065
      %v1161 = vmul.f32 1.0, %v1160
      %v1162 = vrcp.pop %v1066
      %v1163 = vmul.f32 1.0, %v1162
      %v1164 = vrcp.pop %v1067
      %v1165 = vmul.f32 1.0, %v1164
      %v1166 = vrcp.pop %v1068
      %v1167 = vmul.f32 1.0, %v1166
      %v1168 = vrcp.pop %v1069
      %v1169 = vmul.f32 1.0, %v1168
      %v1170 = vrcp.pop %v1070
      %v1171 = vmul.f32 1.0, %v1170
      %v1172 = vrcp.pop %v1071
      %v1173 = vmul.f32 1.0, %v1172
      %v1174 = vrcp.pop %v1072
      %v1175 = vmul.f32 1.0, %v1174
      %v1176 = vrcp.pop %v1073
      %v1177 = vmul.f32 1.0, %v1176
      %v1178 = vrcp.pop %v1074
      %v1179 = vmul.f32 1.0, %v1178
      %v1180 = vrcp.pop %v1075
      %v1181 = vmul.f32 1.0, %v1180
      %v1182 = vrcp.pop %v1076
      %v1183 = vmul.f32 1.0, %v1182
      %v1184 = vrcp.pop %v1077
      %v1185 = vmul.f32 1.0, %v1184
      %v1186 = vrcp.pop %v1078
      %v1187 = vmul.f32 1.0, %v1186
      %v1188 = vrcp.pop %v1079
      %v1189 = vmul.f32 1.0, %v1188
      %v1190 = vrcp.pop %v1080
      %v1191 = vmul.f32 1.0, %v1190
      %v1192 = vrcp.pop %v1081
      %v1193 = vmul.f32 1.0, %v1192
      %v1194 = vrcp.pop %v1082
      %v1195 = vmul.f32 1.0, %v1194
      %v1196 = vrcp.pop %v1083
      %v1197 = vmul.f32 1.0, %v1196
      %v1198 = vrcp.pop %v1084
      %v1199 = vmul.f32 1.0, %v1198
      %v1200 = vrcp.pop %v1085
      %v1201 = vmul.f32 1.0, %v1200
      %v1202 = vrcp.pop %v1086
      %v1203 = vmul.f32 1.0, %v1202
      %v1204 = vrcp.pop %v1087
      %v1205 = vmul.f32 1.0, %v1204
      %v1206 = vrcp.pop %v1088
      %v1207 = vmul.f32 1.0, %v1206
      %v1208 = vrcp.pop %v1089
      %v1209 = vmul.f32 1.0, %v1208
      %v1210 = vrcp.pop %v1090
      %v1211 = vmul.f32 1.0, %v1210
      %v1212 = vrcp.pop %v1091
      %v1213 = vmul.f32 1.0, %v1212
      %v1214 = vrcp.pop %v1092
      %v1215 = vmul.f32 1.0, %v1214
      %v1216 = vrcp.pop %v1093
      %v1217 = vmul.f32 1.0, %v1216
      %v1218 = vrcp.pop %v1094
      %v1219 = vmul.f32 1.0, %v1218
      %v1220 = vrcp.pop %v1095
      %v1221 = vmul.f32 1.0, %v1220
      %v1222 = vrcp.pop %v1096
      %v1223 = vmul.f32 1.0, %v1222
      %v1224 = vrcp.pop %v1097
      %v1225 = vmul.f32 1.0, %v1224
      %1226 = vst [vmem:[%s223] sm:$0xff] %v1099
      %1227 = vst [vmem:[%s223 + $0x8] sm:$0xff] %v1101
      %1228 = vst [vmem:[%s223 + $0x10] sm:$0xff] %v1103
      %1229 = vst [vmem:[%s223 + $0x18] sm:$0xff] %v1105
      %1230 = vst [vmem:[%s223 + $0x20] sm:$0xff] %v1107
      %1231 = vst [vmem:[%s223 + $0x28] sm:$0xff] %v1109
      %1232 = vst [vmem:[%s223 + $0x30] sm:$0xff] %v1111
      %1233 = vst [vmem:[%s223 + $0x38] sm:$0xff] %v1113
      %1234 = vst [vmem:[%s223 + $0x40] sm:$0xff] %v1115
      %1235 = vst [vmem:[%s223 + $0x48] sm:$0xff] %v1117
      %1236 = vst [vmem:[%s223 + $0x50] sm:$0xff] %v1119
      %1237 = vst [vmem:[%s223 + $0x58] sm:$0xff] %v1121
      %1238 = vst [vmem:[%s223 + $0x60] sm:$0xff] %v1123
      %1239 = vst [vmem:[%s223 + $0x68] sm:$0xff] %v1125
      %1240 = vst [vmem:[%s223 + $0x70] sm:$0xff] %v1127
      %1241 = vst [vmem:[%s223 + $0x78] sm:$0xff] %v1129
      %1242 = vst [vmem:[%s223 + $0x80] sm:$0xff] %v1131
      %1243 = vst [vmem:[%s223 + $0x88] sm:$0xff] %v1133
      %1244 = vst [vmem:[%s223 + $0x90] sm:$0xff] %v1135
      %1245 = vst [vmem:[%s223 + $0x98] sm:$0xff] %v1137
      %1246 = vst [vmem:[%s223 + $0xa0] sm:$0xff] %v1139
      %1247 = vst [vmem:[%s223 + $0xa8] sm:$0xff] %v1141
      %1248 = vst [vmem:[%s223 + $0xb0] sm:$0xff] %v1143
      %1249 = vst [vmem:[%s223 + $0xb8] sm:$0xff] %v1145
      %1250 = vst [vmem:[%s223 + $0xc0] sm:$0xff] %v1147
      %1251 = vst [vmem:[%s223 + $0xc8] sm:$0xff] %v1149
      %1252 = vst [vmem:[%s223 + $0xd0] sm:$0xff] %v1151
      %1253 = vst [vmem:[%s223 + $0xd8] sm:$0xff] %v1153
      %1254 = vst [vmem:[%s223 + $0xe0] sm:$0xff] %v1155
      %1255 = vst [vmem:[%s223 + $0xe8] sm:$0xff] %v1157
      %1256 = vst [vmem:[%s223 + $0xf0] sm:$0xff] %v1159
      %1257 = vst [vmem:[%s223 + $0xf8] sm:$0xff] %v1161
      %1258 = vst [vmem:[%s223 + $0x100] sm:$0xff] %v1163
      %1259 = vst [vmem:[%s223 + $0x108] sm:$0xff] %v1165
      %1260 = vst [vmem:[%s223 + $0x110] sm:$0xff] %v1167
      %1261 = vst [vmem:[%s223 + $0x118] sm:$0xff] %v1169
      %1262 = vst [vmem:[%s223 + $0x120] sm:$0xff] %v1171
      %1263 = vst [vmem:[%s223 + $0x128] sm:$0xff] %v1173
      %1264 = vst [vmem:[%s223 + $0x130] sm:$0xff] %v1175
      %1265 = vst [vmem:[%s223 + $0x138] sm:$0xff] %v1177
      %1266 = vst [vmem:[%s223 + $0x140] sm:$0xff] %v1179
      %1267 = vst [vmem:[%s223 + $0x148] sm:$0xff] %v1181
      %1268 = vst [vmem:[%s223 + $0x150] sm:$0xff] %v1183
      %1269 = vst [vmem:[%s223 + $0x158] sm:$0xff] %v1185
      %1270 = vst [vmem:[%s223 + $0x160] sm:$0xff] %v1187
      %1271 = vst [vmem:[%s223 + $0x168] sm:$0xff] %v1189
      %1272 = vst [vmem:[%s223 + $0x170] sm:$0xff] %v1191
      %1273 = vst [vmem:[%s223 + $0x178] sm:$0xff] %v1193
      %1274 = vst [vmem:[%s223 + $0x180] sm:$0xff] %v1195
      %1275 = vst [vmem:[%s223 + $0x188] sm:$0xff] %v1197
      %1276 = vst [vmem:[%s223 + $0x190] sm:$0xff] %v1199
      %1277 = vst [vmem:[%s223 + $0x198] sm:$0xff] %v1201
      %1278 = vst [vmem:[%s223 + $0x1a0] sm:$0xff] %v1203
      %1279 = vst [vmem:[%s223 + $0x1a8] sm:$0xff] %v1205
      %1280 = vst [vmem:[%s223 + $0x1b0] sm:$0xff] %v1207
      %1281 = vst [vmem:[%s223 + $0x1b8] sm:$0xff] %v1209
      %1282 = vst [vmem:[%s223 + $0x1c0] sm:$0xff] %v1211
      %1283 = vst [vmem:[%s223 + $0x1c8] sm:$0xff] %v1213
      %1284 = vst [vmem:[%s223 + $0x1d0] sm:$0xff] %v1215
      %1285 = vst [vmem:[%s223 + $0x1d8] sm:$0xff] %v1217
      %1286 = vst [vmem:[%s223 + $0x1e0] sm:$0xff] %v1219
      %1287 = vst [vmem:[%s223 + $0x1e8] sm:$0xff] %v1221
      %1288 = vst [vmem:[%s223 + $0x1f0] sm:$0xff] %v1223
      %1289 = vst [vmem:[%s223 + $0x1f8] sm:$0xff] %v1225
      %s1290 = smul.u32 64, %s18
      %p1291 = scmp.lt.s32.totalorder %s1290, 255
      %s1292 = scalar_select %p1291, %s1290, 255
      %p1293 = scmp.lt.s32.totalorder %s19, 0
      %s1294 = scalar_select %p1293, %s19, 0
      %s1295 = sadd.s32 %s1294, %s1292
      %s1296 = smul.addr %s1295, 8
      %s1297 = scalar_lea.vmem %s3, %s1296
      // Predicated region
      $region33: #{_lambda_.13} parent=31 // pred_check
        %p1298 = pneg %p124
      $region34: #{_lambda_.13} parent=31 // pred_check_branch
        %1300 = sbr.rel (%p1298) target = $region36
      $region35: #{_lambda_.13} parent=31 // pred_region
        %s1301 = smul.u32 64, %s18
      $region36: #{_lambda_.13} parent=31 // pred_fallthru
        _
    $region32: #{_lambda_.13} parent=5 // pred_fallthru
      _
    %p1302 = scmp.le.s32.totalorder 2, %s9
    // Predicated region
    $region37: #{_lambda_.13} parent=5 // pred_check
      %p1303 = pneg %p1302
    $region38: #{_lambda_.13} parent=5 // pred_check_branch
      %1305 = sbr.rel (%p1303) target = $region40
    $region39: #{_lambda_.13} parent=5 // pred_region
      %s1306 = ssub.s32 %s9, 2
      // Predicated region
      $region41: #{_lambda_.13} parent=39 // pred_check
        %p1307 = pneg %p130
      $region42: #{_lambda_.13} parent=39 // pred_check_branch
        %1309 = sbr.rel (%p1307) target = $region44
      $region43: #{_lambda_.13} parent=39 // pred_region
        %s1310 = smul.u32 64, %s20
        %p1311 = scmp.lt.s32.totalorder %s1310, 255
        %s1312 = scalar_select %p1311, %s1310, 255
        %p1313 = scmp.lt.s32.totalorder %s21, 0
        %s1314 = scalar_select %p1313, %s21, 0
        %s1315 = sadd.s32 %s1314, %s1312
        %s1316 = smul.addr %s1315, 8
        %s1317 = scalar_lea.vmem %s3, %s1316
      $region44: #{_lambda_.13} parent=39 // pred_fallthru
        _
    $region40: #{_lambda_.13} parent=5 // pred_fallthru
      _
  $region6: #{_lambda_.13} parent=0 // loop_footer
    %s13 = sadd.s32 1, %s9
  $region7: #{_lambda_.13} parent=0 // loop_footer_branch
    %8 = sbr.rel target = $region3
  $region8: #{_lambda_.13} parent=0 // loop_exit
    _

</llo_original>
